<compile_context>
chip_gen: v6e
topology: v6e:2x2x1
jax: 0.10.0
libtpu: 0.0.40
codegen_flags: <defaults>
</compile_context>

<pallas_src>
import jax
import jax.numpy as jnp
from jax.experimental import pallas as pl
from jax.experimental.pallas import tpu as pltpu

D = 256          # attention embedding dim (hard-coded in the PyTorch module)
BN_EPS = 1e-5
LN_EPS = 1e-5

# slot order inside the stacked attention parameter arrays
DC_CELL, DC_DRUG, CELL_SELF, DRUG_SELF, DD_A, DD_B, CC_A, CC_B = range(8)


def _layernorm(h, g, b):
    mu = jnp.mean(h, axis=-1, keepdims=True)
    var = jnp.mean((h - mu) ** 2, axis=-1, keepdims=True)
    return (h - mu) * jax.lax.rsqrt(var + LN_EPS) * g + b


def _batchnorm(h, g, b):
    mu = jnp.mean(h, axis=0, keepdims=True)
    var = jnp.mean((h - mu) ** 2, axis=0, keepdims=True)
    return (h - mu) * jax.lax.rsqrt(var + BN_EPS) * g + b


# --------------------------------------------------------------------------
# Single fused decoder kernel.
#   aw : [8, 256, 256]  fused attention weights (Wv @ Wo, + I for self slots)
#   ab : [8, 1, 256]    fused attention biases  (bv @ Wo + bo)
#   ag / abeta : [8, 1, 256]  LayerNorm gamma / beta per block
# --------------------------------------------------------------------------
def decoder_kernel(cell_ref, drugA_ref, drugB_ref,
                   aw_ref, ab_ref, ag_ref, abeta_ref,
                   w1_ref, b1_ref, g1_ref, be1_ref,
                   w2_ref, b2_ref, g2_ref, be2_ref,
                   w3_ref, b3_ref, out_ref):
    cell = cell_ref[...]                     # [B, 256]
    drugA = drugA_ref[...]                   # [B, 256]
    drugB = drugB_ref[...]                   # [B, 256]
    B = cell.shape[0]

    # ---- stage 1: Drug_cell_mutual (shared weights for drug A / drug B) ----
    drugs = jnp.concatenate([drugA, drugB], axis=0)            # [2B, 256]
    # cell queries attend to drugs: one stacked matmul for A and B
    y_cell = jnp.dot(drugs, aw_ref[DC_CELL],
                     preferred_element_type=jnp.float32) + ab_ref[DC_CELL]
    cell_slab = _layernorm(jnp.concatenate([cell, cell], axis=0) + y_cell,
                           ag_ref[DC_CELL], abeta_ref[DC_CELL])  # [2B, 256]
    # drug queries attend to cell: KV (= cell) is identical for A and B,
    # so the projection is computed once and reused.
    y_drug = jnp.dot(cell, aw_ref[DC_DRUG],
                     preferred_element_type=jnp.float32) + ab_ref[DC_DRUG]
    drug_slab = _layernorm(drugs + jnp.concatenate([y_drug, y_drug], axis=0),
                           ag_ref[DC_DRUG], abeta_ref[DC_DRUG])  # [2B, 256]

    # ---- stage 2: self attention (residual folded into I + Wv@Wo) ----------
    cell_slab = _layernorm(
        jnp.dot(cell_slab, aw_ref[CELL_SELF],
                preferred_element_type=jnp.float32) + ab_ref[CELL_SELF],
        ag_ref[CELL_SELF], abeta_ref[CELL_SELF])
    drug_slab = _layernorm(
        jnp.dot(drug_slab, aw_ref[DRUG_SELF],
                preferred_element_type=jnp.float32) + ab_ref[DRUG_SELF],
        ag_ref[DRUG_SELF], abeta_ref[DRUG_SELF])

    # ---- stage 3: drug-drug and cell-cell mutual attention -----------------
    dA, dB = drug_slab[:B], drug_slab[B:]
    cA, cB = cell_slab[:B], cell_slab[B:]
    drug1 = _layernorm(dA + jnp.dot(dB, aw_ref[DD_A],
                                    preferred_element_type=jnp.float32)
                       + ab_ref[DD_A], ag_ref[DD_A], abeta_ref[DD_A])
    drug2 = _layernorm(dB + jnp.dot(dA, aw_ref[DD_B],
                                    preferred_element_type=jnp.float32)
                       + ab_ref[DD_B], ag_ref[DD_B], abeta_ref[DD_B])
    cell1 = _layernorm(cA + jnp.dot(cB, aw_ref[CC_A],
                                    preferred_element_type=jnp.float32)
                       + ab_ref[CC_A], ag_ref[CC_A], abeta_ref[CC_A])
    cell2 = _layernorm(cB + jnp.dot(cA, aw_ref[CC_B],
                                    preferred_element_type=jnp.float32)
                       + ab_ref[CC_B], ag_ref[CC_B], abeta_ref[CC_B])

    h1 = jnp.concatenate([drug1, drug2, cell1, cell2], axis=1)  # [B, 1024]

    # ---- MLP head: fc1 -> tanh -> BN -> fc2 -> tanh -> BN -> fc3 -> sigmoid -
    h = jnp.tanh(jnp.dot(h1, w1_ref[...],
                         preferred_element_type=jnp.float32) + b1_ref[...])
    h = _batchnorm(h, g1_ref[...], be1_ref[...])
    h = jnp.tanh(jnp.dot(h, w2_ref[...],
                         preferred_element_type=jnp.float32) + b2_ref[...])
    h = _batchnorm(h, g2_ref[...], be2_ref[...])
    logits = jnp.dot(h, w3_ref[...],
                     preferred_element_type=jnp.float32) + b3_ref[...]
    out_ref[...] = jax.nn.sigmoid(logits)     # [B, 1] (lane width 1 is fine at B=8)


# --------------------------------------------------------------------------
# Parameter construction (deterministic, xavier_uniform like reset_parameters)
# --------------------------------------------------------------------------
def xavier(key, fan_in, fan_out):
    bound = (6.0 / (fan_in + fan_out)) ** 0.5
    return jax.random.uniform(key, (fan_in, fan_out), jnp.float32, -bound, bound)


def make_attn_params(key):
    k1, k2 = jax.random.split(key)
    return dict(
        wv=xavier(k1, D, D), bv=jnp.zeros((D,), jnp.float32),
        wo=xavier(k2, D, D), bo=jnp.zeros((D,), jnp.float32),
        ln_g=jnp.ones((D,), jnp.float32), ln_b=jnp.zeros((D,), jnp.float32),
    )


def make_params(key, in_channels):
    keys = jax.random.split(key, 16)
    h1, h2 = in_channels // 2, in_channels // 4
    return dict(
        dc_cell=make_attn_params(keys[0]),     # Drug_cell_mutual: cell<-drug dir
        dc_drug=make_attn_params(keys[1]),     # Drug_cell_mutual: drug<-cell dir
        cell_self=make_attn_params(keys[2]),   # Cell_self_attention (shared A/B)
        drug_self=make_attn_params(keys[3]),   # Drug_self_attention (shared A/B)
        dd_a=make_attn_params(keys[4]),        # drug-drug cross attn, dir 1
        dd_b=make_attn_params(keys[5]),        # drug-drug cross attn, dir 2
        cc_a=make_attn_params(keys[6]),        # cell-cell mutual attn, dir 1
        cc_b=make_attn_params(keys[7]),        # cell-cell mutual attn, dir 2
        mlp=dict(
            w1=xavier(keys[8], in_channels, h1), b1=jnp.zeros((h1,), jnp.float32),
            g1=jnp.ones((h1,), jnp.float32), be1=jnp.zeros((h1,), jnp.float32),
            w2=xavier(keys[9], h1, h2), b2=jnp.zeros((h2,), jnp.float32),
            g2=jnp.ones((h2,), jnp.float32), be2=jnp.zeros((h2,), jnp.float32),
            w3=xavier(keys[10], h2, 1), b3=jnp.zeros((1,), jnp.float32),
        ),
    )


def prepare_params(params):
    """Fold Wv@Wo (+ residual identity for self-attn) and stack the 8 blocks.

    Done once, outside the kernel, since the weights are static.
    """
    order = ["dc_cell", "dc_drug", "cell_self", "drug_self",
             "dd_a", "dd_b", "cc_a", "cc_b"]
    self_slots = {"cell_self", "drug_self"}
    eye = jnp.eye(D, dtype=jnp.float32)
    hp = jax.lax.Precision.HIGHEST
    ws, bs, gs, betas = [], [], [], []
    for name in order:
        p = params[name]
        wf = jnp.dot(p["wv"], p["wo"], precision=hp)
        bf = jnp.dot(p["bv"], p["wo"], precision=hp) + p["bo"]
        if name in self_slots:                    # fold residual: x@(I+Wf)+bf
            wf = wf + eye
        ws.append(wf)
        bs.append(bf.reshape(1, D))
        gs.append(p["ln_g"].reshape(1, D))
        betas.append(p["ln_b"].reshape(1, D))
    m = params["mlp"]
    h1 = m["w1"].shape[1]
    h2 = m["w2"].shape[1]
    return dict(
        aw=jnp.stack(ws),                          # [8, 256, 256]
        ab=jnp.stack(bs),                          # [8, 1, 256]
        ag=jnp.stack(gs),                          # [8, 1, 256]
        abeta=jnp.stack(betas),                    # [8, 1, 256]
        w1=m["w1"], b1=m["b1"].reshape(1, h1),
        g1=m["g1"].reshape(1, h1), be1=m["be1"].reshape(1, h1),
        w2=m["w2"], b2=m["b2"].reshape(1, h2),
        g2=m["g2"].reshape(1, h2), be2=m["be2"].reshape(1, h2),
        w3=m["w3"], b3=m["b3"].reshape(1, 1),
    )


# --------------------------------------------------------------------------
# Decoder forward: gathers in plain JAX, everything else in ONE Pallas kernel
# --------------------------------------------------------------------------
def decoder_forward(fp, graph_embed, druga_id, drugb_id, cellline_id):
    cell = jnp.take(graph_embed, cellline_id, axis=0)     # [B, 256]
    drugA = jnp.take(graph_embed, druga_id, axis=0)       # [B, 256]
    drugB = jnp.take(graph_embed, drugb_id, axis=0)       # [B, 256]
    B = cell.shape[0]

    vmem = pl.BlockSpec(memory_space=pltpu.MemorySpace.VMEM)
    out = pl.pallas_call(
        decoder_kernel,
        out_shape=jax.ShapeDtypeStruct((B, 1), jnp.float32),
        in_specs=[vmem] * 17,
        out_specs=vmem,
        compiler_params=pltpu.CompilerParams(
            vmem_limit_bytes=32 * 1024 * 1024),   # ~5 MiB weights + scratch; explicit for v7x
    )(cell, drugA, drugB,
      fp["aw"], fp["ab"], fp["ag"], fp["abeta"],
      fp["w1"], fp["b1"], fp["g1"], fp["be1"],
      fp["w2"], fp["b2"], fp["g2"], fp["be2"],
      fp["w3"], fp["b3"])
    return out[:, 0]                                      # squeeze(dim=1)


if __name__ == "__main__":
    key = jax.random.PRNGKey(0)
    k_embed, k_a, k_b, k_c, k_params = jax.random.split(key, 5)

    N_NODES = 16          # rows in graph_embed
    B = 8                 # batch of (drugA, drugB, cell) triples
    IN_CHANNELS = 4 * D   # 1024, matches cat of four 256-d vectors

    graph_embed = jax.random.normal(k_embed, (N_NODES, D), jnp.float32)
    druga_id = jax.random.randint(k_a, (B,), 0, N_NODES)
    drugb_id = jax.random.randint(k_b, (B,), 0, N_NODES)
    cellline_id = jax.random.randint(k_c, (B,), 0, N_NODES)

    params = make_params(k_params, IN_CHANNELS)
    fused = prepare_params(params)          # fold Wv@Wo once, stack weights

    out = jax.jit(decoder_forward)(fused, graph_embed, druga_id, drugb_id,
                                   cellline_id)
    out = jax.block_until_ready(out)
    assert out.shape == (B,)
    assert bool(jnp.all(jnp.isfinite(out)))
    print("KERNEL_OK")
</pallas_src>

<mosaic_0001>
module attributes {stable_mosaic.version = 11 : i64} {
  func.func @decoder_kernel(%arg0: memref<8x256xf32, #tpu.memory_space<vmem>>, %arg1: memref<8x256xf32, #tpu.memory_space<vmem>>, %arg2: memref<8x256xf32, #tpu.memory_space<vmem>>, %arg3: memref<8x256x256xf32, #tpu.memory_space<vmem>>, %arg4: memref<8x1x256xf32, #tpu.memory_space<vmem>>, %arg5: memref<8x1x256xf32, #tpu.memory_space<vmem>>, %arg6: memref<8x1x256xf32, #tpu.memory_space<vmem>>, %arg7: memref<1024x512xf32, #tpu.memory_space<vmem>>, %arg8: memref<1x512xf32, #tpu.memory_space<vmem>>, %arg9: memref<1x512xf32, #tpu.memory_space<vmem>>, %arg10: memref<1x512xf32, #tpu.memory_space<vmem>>, %arg11: memref<512x256xf32, #tpu.memory_space<vmem>>, %arg12: memref<1x256xf32, #tpu.memory_space<vmem>>, %arg13: memref<1x256xf32, #tpu.memory_space<vmem>>, %arg14: memref<1x256xf32, #tpu.memory_space<vmem>>, %arg15: memref<256x1xf32, #tpu.memory_space<vmem>>, %arg16: memref<1x1xf32, #tpu.memory_space<vmem>>, %arg17: memref<8x1xf32, #tpu.memory_space<vmem>>) attributes {dimension_semantics = [], scalar_prefetch = 0 : i64, scratch_operands = 0 : i64, tpu.core_type = #tpu.core_type<tc>} {
    %c0 = arith.constant 0 : index
    %c0_0 = arith.constant 0 : index
    %0 = vector.load %arg0[%c0, %c0_0] : memref<8x256xf32, #tpu.memory_space<vmem>>, vector<8x256xf32>
    %c0_1 = arith.constant 0 : index
    %c0_2 = arith.constant 0 : index
    %1 = vector.load %arg1[%c0_1, %c0_2] : memref<8x256xf32, #tpu.memory_space<vmem>>, vector<8x256xf32>
    %c0_3 = arith.constant 0 : index
    %c0_4 = arith.constant 0 : index
    %2 = vector.load %arg2[%c0_3, %c0_4] : memref<8x256xf32, #tpu.memory_space<vmem>>, vector<8x256xf32>
    %3 = tpu.concatenate %1, %2 in 0 : vector<8x256xf32>, vector<8x256xf32> -> vector<16x256xf32>
    %c0_5 = arith.constant 0 : index
    %c0_6 = arith.constant 0 : index
    %c0_7 = arith.constant 0 : index
    %4 = vector.load %arg3[%c0_5, %c0_6, %c0_7] : memref<8x256x256xf32, #tpu.memory_space<vmem>>, vector<1x256x256xf32>
    %5 = vector.shape_cast %4 : vector<1x256x256xf32> to vector<256x256xf32>
    %cst = arith.constant dense<0.000000e+00> : vector<16x256xf32>
    %6 = tpu.matmul %3, %5, %cst {dimension_numbers = #tpu.dot_dimension_numbers<[1], [0], [0], [1], [0, 0, 1, 1], [], []>} : vector<16x256xf32>, vector<256x256xf32>, vector<16x256xf32> -> vector<16x256xf32>
    %c0_8 = arith.constant 0 : index
    %c0_9 = arith.constant 0 : index
    %c0_10 = arith.constant 0 : index
    %7 = vector.load %arg4[%c0_8, %c0_9, %c0_10] : memref<8x1x256xf32, #tpu.memory_space<vmem>>, vector<1x1x256xf32>
    %8 = vector.shape_cast %7 : vector<1x1x256xf32> to vector<1x256xf32>
    %9 = vector.broadcast %8 : vector<1x256xf32> to vector<16x256xf32>
    %10 = arith.addf %6, %9 : vector<16x256xf32>
    %11 = tpu.concatenate %0, %0 in 0 : vector<8x256xf32>, vector<8x256xf32> -> vector<16x256xf32>
    %12 = arith.addf %11, %10 : vector<16x256xf32>
    %c0_11 = arith.constant 0 : index
    %c0_12 = arith.constant 0 : index
    %c0_13 = arith.constant 0 : index
    %13 = vector.load %arg5[%c0_11, %c0_12, %c0_13] : memref<8x1x256xf32, #tpu.memory_space<vmem>>, vector<1x1x256xf32>
    %14 = vector.shape_cast %13 : vector<1x1x256xf32> to vector<1x256xf32>
    %c0_14 = arith.constant 0 : index
    %c0_15 = arith.constant 0 : index
    %c0_16 = arith.constant 0 : index
    %15 = vector.load %arg6[%c0_14, %c0_15, %c0_16] : memref<8x1x256xf32, #tpu.memory_space<vmem>>, vector<1x1x256xf32>
    %16 = vector.shape_cast %15 : vector<1x1x256xf32> to vector<1x256xf32>
    %cst_17 = arith.constant dense<0.000000e+00> : vector<16xf32>
    %17 = vector.multi_reduction <add>, %12, %cst_17 [1] : vector<16x256xf32> to vector<16xf32>
    %18 = vector.shape_cast %17 : vector<16xf32> to vector<16x1xf32>
    %cst_18 = arith.constant 2.560000e+02 : f32
    %19 = vector.broadcast %cst_18 : f32 to vector<16x1xf32>
    %20 = arith.divf %18, %19 : vector<16x1xf32>
    %21 = vector.broadcast %20 : vector<16x1xf32> to vector<16x256xf32>
    %22 = arith.subf %12, %21 : vector<16x256xf32>
    %23 = arith.mulf %22, %22 : vector<16x256xf32>
    %cst_19 = arith.constant dense<0.000000e+00> : vector<16xf32>
    %24 = vector.multi_reduction <add>, %23, %cst_19 [1] : vector<16x256xf32> to vector<16xf32>
    %25 = vector.shape_cast %24 : vector<16xf32> to vector<16x1xf32>
    %cst_20 = arith.constant 2.560000e+02 : f32
    %26 = vector.broadcast %cst_20 : f32 to vector<16x1xf32>
    %27 = arith.divf %25, %26 : vector<16x1xf32>
    %28 = vector.broadcast %20 : vector<16x1xf32> to vector<16x256xf32>
    %29 = arith.subf %12, %28 : vector<16x256xf32>
    %cst_21 = arith.constant 9.99999974E-6 : f32
    %30 = vector.broadcast %cst_21 : f32 to vector<16x1xf32>
    %31 = arith.addf %27, %30 : vector<16x1xf32>
    %32 = math.rsqrt %31 : vector<16x1xf32>
    %33 = vector.broadcast %32 : vector<16x1xf32> to vector<16x256xf32>
    %34 = arith.mulf %29, %33 : vector<16x256xf32>
    %35 = vector.broadcast %14 : vector<1x256xf32> to vector<16x256xf32>
    %36 = arith.mulf %34, %35 : vector<16x256xf32>
    %37 = vector.broadcast %16 : vector<1x256xf32> to vector<16x256xf32>
    %38 = arith.addf %36, %37 : vector<16x256xf32>
    %c1 = arith.constant 1 : index
    %c0_22 = arith.constant 0 : index
    %c0_23 = arith.constant 0 : index
    %39 = vector.load %arg3[%c1, %c0_22, %c0_23] : memref<8x256x256xf32, #tpu.memory_space<vmem>>, vector<1x256x256xf32>
    %40 = vector.shape_cast %39 : vector<1x256x256xf32> to vector<256x256xf32>
    %cst_24 = arith.constant dense<0.000000e+00> : vector<8x256xf32>
    %41 = tpu.matmul %0, %40, %cst_24 {dimension_numbers = #tpu.dot_dimension_numbers<[1], [0], [0], [1], [0, 0, 1, 1], [], []>} : vector<8x256xf32>, vector<256x256xf32>, vector<8x256xf32> -> vector<8x256xf32>
    %c1_25 = arith.constant 1 : index
    %c0_26 = arith.constant 0 : index
    %c0_27 = arith.constant 0 : index
    %42 = vector.load %arg4[%c1_25, %c0_26, %c0_27] : memref<8x1x256xf32, #tpu.memory_space<vmem>>, vector<1x1x256xf32>
    %43 = vector.shape_cast %42 : vector<1x1x256xf32> to vector<1x256xf32>
    %44 = vector.broadcast %43 : vector<1x256xf32> to vector<8x256xf32>
    %45 = arith.addf %41, %44 : vector<8x256xf32>
    %46 = tpu.concatenate %45, %45 in 0 : vector<8x256xf32>, vector<8x256xf32> -> vector<16x256xf32>
    %47 = arith.addf %3, %46 : vector<16x256xf32>
    %c1_28 = arith.constant 1 : index
    %c0_29 = arith.constant 0 : index
    %c0_30 = arith.constant 0 : index
    %48 = vector.load %arg5[%c1_28, %c0_29, %c0_30] : memref<8x1x256xf32, #tpu.memory_space<vmem>>, vector<1x1x256xf32>
    %49 = vector.shape_cast %48 : vector<1x1x256xf32> to vector<1x256xf32>
    %c1_31 = arith.constant 1 : index
    %c0_32 = arith.constant 0 : index
    %c0_33 = arith.constant 0 : index
    %50 = vector.load %arg6[%c1_31, %c0_32, %c0_33] : memref<8x1x256xf32, #tpu.memory_space<vmem>>, vector<1x1x256xf32>
    %51 = vector.shape_cast %50 : vector<1x1x256xf32> to vector<1x256xf32>
    %cst_34 = arith.constant dense<0.000000e+00> : vector<16xf32>
    %52 = vector.multi_reduction <add>, %47, %cst_34 [1] : vector<16x256xf32> to vector<16xf32>
    %53 = vector.shape_cast %52 : vector<16xf32> to vector<16x1xf32>
    %cst_35 = arith.constant 2.560000e+02 : f32
    %54 = vector.broadcast %cst_35 : f32 to vector<16x1xf32>
    %55 = arith.divf %53, %54 : vector<16x1xf32>
    %56 = vector.broadcast %55 : vector<16x1xf32> to vector<16x256xf32>
    %57 = arith.subf %47, %56 : vector<16x256xf32>
    %58 = arith.mulf %57, %57 : vector<16x256xf32>
    %cst_36 = arith.constant dense<0.000000e+00> : vector<16xf32>
    %59 = vector.multi_reduction <add>, %58, %cst_36 [1] : vector<16x256xf32> to vector<16xf32>
    %60 = vector.shape_cast %59 : vector<16xf32> to vector<16x1xf32>
    %cst_37 = arith.constant 2.560000e+02 : f32
    %61 = vector.broadcast %cst_37 : f32 to vector<16x1xf32>
    %62 = arith.divf %60, %61 : vector<16x1xf32>
    %63 = vector.broadcast %55 : vector<16x1xf32> to vector<16x256xf32>
    %64 = arith.subf %47, %63 : vector<16x256xf32>
    %cst_38 = arith.constant 9.99999974E-6 : f32
    %65 = vector.broadcast %cst_38 : f32 to vector<16x1xf32>
    %66 = arith.addf %62, %65 : vector<16x1xf32>
    %67 = math.rsqrt %66 : vector<16x1xf32>
    %68 = vector.broadcast %67 : vector<16x1xf32> to vector<16x256xf32>
    %69 = arith.mulf %64, %68 : vector<16x256xf32>
    %70 = vector.broadcast %49 : vector<1x256xf32> to vector<16x256xf32>
    %71 = arith.mulf %69, %70 : vector<16x256xf32>
    %72 = vector.broadcast %51 : vector<1x256xf32> to vector<16x256xf32>
    %73 = arith.addf %71, %72 : vector<16x256xf32>
    %c2 = arith.constant 2 : index
    %c0_39 = arith.constant 0 : index
    %c0_40 = arith.constant 0 : index
    %74 = vector.load %arg3[%c2, %c0_39, %c0_40] : memref<8x256x256xf32, #tpu.memory_space<vmem>>, vector<1x256x256xf32>
    %75 = vector.shape_cast %74 : vector<1x256x256xf32> to vector<256x256xf32>
    %cst_41 = arith.constant dense<0.000000e+00> : vector<16x256xf32>
    %76 = tpu.matmul %38, %75, %cst_41 {dimension_numbers = #tpu.dot_dimension_numbers<[1], [0], [0], [1], [0, 0, 1, 1], [], []>} : vector<16x256xf32>, vector<256x256xf32>, vector<16x256xf32> -> vector<16x256xf32>
    %c2_42 = arith.constant 2 : index
    %c0_43 = arith.constant 0 : index
    %c0_44 = arith.constant 0 : index
    %77 = vector.load %arg4[%c2_42, %c0_43, %c0_44] : memref<8x1x256xf32, #tpu.memory_space<vmem>>, vector<1x1x256xf32>
    %78 = vector.shape_cast %77 : vector<1x1x256xf32> to vector<1x256xf32>
    %79 = vector.broadcast %78 : vector<1x256xf32> to vector<16x256xf32>
    %80 = arith.addf %76, %79 : vector<16x256xf32>
    %c2_45 = arith.constant 2 : index
    %c0_46 = arith.constant 0 : index
    %c0_47 = arith.constant 0 : index
    %81 = vector.load %arg5[%c2_45, %c0_46, %c0_47] : memref<8x1x256xf32, #tpu.memory_space<vmem>>, vector<1x1x256xf32>
    %82 = vector.shape_cast %81 : vector<1x1x256xf32> to vector<1x256xf32>
    %c2_48 = arith.constant 2 : index
    %c0_49 = arith.constant 0 : index
    %c0_50 = arith.constant 0 : index
    %83 = vector.load %arg6[%c2_48, %c0_49, %c0_50] : memref<8x1x256xf32, #tpu.memory_space<vmem>>, vector<1x1x256xf32>
    %84 = vector.shape_cast %83 : vector<1x1x256xf32> to vector<1x256xf32>
    %cst_51 = arith.constant dense<0.000000e+00> : vector<16xf32>
    %85 = vector.multi_reduction <add>, %80, %cst_51 [1] : vector<16x256xf32> to vector<16xf32>
    %86 = vector.shape_cast %85 : vector<16xf32> to vector<16x1xf32>
    %cst_52 = arith.constant 2.560000e+02 : f32
    %87 = vector.broadcast %cst_52 : f32 to vector<16x1xf32>
    %88 = arith.divf %86, %87 : vector<16x1xf32>
    %89 = vector.broadcast %88 : vector<16x1xf32> to vector<16x256xf32>
    %90 = arith.subf %80, %89 : vector<16x256xf32>
    %91 = arith.mulf %90, %90 : vector<16x256xf32>
    %cst_53 = arith.constant dense<0.000000e+00> : vector<16xf32>
    %92 = vector.multi_reduction <add>, %91, %cst_53 [1] : vector<16x256xf32> to vector<16xf32>
    %93 = vector.shape_cast %92 : vector<16xf32> to vector<16x1xf32>
    %cst_54 = arith.constant 2.560000e+02 : f32
    %94 = vector.broadcast %cst_54 : f32 to vector<16x1xf32>
    %95 = arith.divf %93, %94 : vector<16x1xf32>
    %96 = vector.broadcast %88 : vector<16x1xf32> to vector<16x256xf32>
    %97 = arith.subf %80, %96 : vector<16x256xf32>
    %cst_55 = arith.constant 9.99999974E-6 : f32
    %98 = vector.broadcast %cst_55 : f32 to vector<16x1xf32>
    %99 = arith.addf %95, %98 : vector<16x1xf32>
    %100 = math.rsqrt %99 : vector<16x1xf32>
    %101 = vector.broadcast %100 : vector<16x1xf32> to vector<16x256xf32>
    %102 = arith.mulf %97, %101 : vector<16x256xf32>
    %103 = vector.broadcast %82 : vector<1x256xf32> to vector<16x256xf32>
    %104 = arith.mulf %102, %103 : vector<16x256xf32>
    %105 = vector.broadcast %84 : vector<1x256xf32> to vector<16x256xf32>
    %106 = arith.addf %104, %105 : vector<16x256xf32>
    %c3 = arith.constant 3 : index
    %c0_56 = arith.constant 0 : index
    %c0_57 = arith.constant 0 : index
    %107 = vector.load %arg3[%c3, %c0_56, %c0_57] : memref<8x256x256xf32, #tpu.memory_space<vmem>>, vector<1x256x256xf32>
    %108 = vector.shape_cast %107 : vector<1x256x256xf32> to vector<256x256xf32>
    %cst_58 = arith.constant dense<0.000000e+00> : vector<16x256xf32>
    %109 = tpu.matmul %73, %108, %cst_58 {dimension_numbers = #tpu.dot_dimension_numbers<[1], [0], [0], [1], [0, 0, 1, 1], [], []>} : vector<16x256xf32>, vector<256x256xf32>, vector<16x256xf32> -> vector<16x256xf32>
    %c3_59 = arith.constant 3 : index
    %c0_60 = arith.constant 0 : index
    %c0_61 = arith.constant 0 : index
    %110 = vector.load %arg4[%c3_59, %c0_60, %c0_61] : memref<8x1x256xf32, #tpu.memory_space<vmem>>, vector<1x1x256xf32>
    %111 = vector.shape_cast %110 : vector<1x1x256xf32> to vector<1x256xf32>
    %112 = vector.broadcast %111 : vector<1x256xf32> to vector<16x256xf32>
    %113 = arith.addf %109, %112 : vector<16x256xf32>
    %c3_62 = arith.constant 3 : index
    %c0_63 = arith.constant 0 : index
    %c0_64 = arith.constant 0 : index
    %114 = vector.load %arg5[%c3_62, %c0_63, %c0_64] : memref<8x1x256xf32, #tpu.memory_space<vmem>>, vector<1x1x256xf32>
    %115 = vector.shape_cast %114 : vector<1x1x256xf32> to vector<1x256xf32>
    %c3_65 = arith.constant 3 : index
    %c0_66 = arith.constant 0 : index
    %c0_67 = arith.constant 0 : index
    %116 = vector.load %arg6[%c3_65, %c0_66, %c0_67] : memref<8x1x256xf32, #tpu.memory_space<vmem>>, vector<1x1x256xf32>
    %117 = vector.shape_cast %116 : vector<1x1x256xf32> to vector<1x256xf32>
    %cst_68 = arith.constant dense<0.000000e+00> : vector<16xf32>
    %118 = vector.multi_reduction <add>, %113, %cst_68 [1] : vector<16x256xf32> to vector<16xf32>
    %119 = vector.shape_cast %118 : vector<16xf32> to vector<16x1xf32>
    %cst_69 = arith.constant 2.560000e+02 : f32
    %120 = vector.broadcast %cst_69 : f32 to vector<16x1xf32>
    %121 = arith.divf %119, %120 : vector<16x1xf32>
    %122 = vector.broadcast %121 : vector<16x1xf32> to vector<16x256xf32>
    %123 = arith.subf %113, %122 : vector<16x256xf32>
    %124 = arith.mulf %123, %123 : vector<16x256xf32>
    %cst_70 = arith.constant dense<0.000000e+00> : vector<16xf32>
    %125 = vector.multi_reduction <add>, %124, %cst_70 [1] : vector<16x256xf32> to vector<16xf32>
    %126 = vector.shape_cast %125 : vector<16xf32> to vector<16x1xf32>
    %cst_71 = arith.constant 2.560000e+02 : f32
    %127 = vector.broadcast %cst_71 : f32 to vector<16x1xf32>
    %128 = arith.divf %126, %127 : vector<16x1xf32>
    %129 = vector.broadcast %121 : vector<16x1xf32> to vector<16x256xf32>
    %130 = arith.subf %113, %129 : vector<16x256xf32>
    %cst_72 = arith.constant 9.99999974E-6 : f32
    %131 = vector.broadcast %cst_72 : f32 to vector<16x1xf32>
    %132 = arith.addf %128, %131 : vector<16x1xf32>
    %133 = math.rsqrt %132 : vector<16x1xf32>
    %134 = vector.broadcast %133 : vector<16x1xf32> to vector<16x256xf32>
    %135 = arith.mulf %130, %134 : vector<16x256xf32>
    %136 = vector.broadcast %115 : vector<1x256xf32> to vector<16x256xf32>
    %137 = arith.mulf %135, %136 : vector<16x256xf32>
    %138 = vector.broadcast %117 : vector<1x256xf32> to vector<16x256xf32>
    %139 = arith.addf %137, %138 : vector<16x256xf32>
    %140 = vector.extract_strided_slice %139 {offsets = [0, 0], sizes = [8, 256], strides = [1, 1]} : vector<16x256xf32> to vector<8x256xf32>
    %141 = vector.extract_strided_slice %139 {offsets = [8, 0], sizes = [8, 256], strides = [1, 1]} : vector<16x256xf32> to vector<8x256xf32>
    %142 = vector.extract_strided_slice %106 {offsets = [0, 0], sizes = [8, 256], strides = [1, 1]} : vector<16x256xf32> to vector<8x256xf32>
    %143 = vector.extract_strided_slice %106 {offsets = [8, 0], sizes = [8, 256], strides = [1, 1]} : vector<16x256xf32> to vector<8x256xf32>
    %c4 = arith.constant 4 : index
    %c0_73 = arith.constant 0 : index
    %c0_74 = arith.constant 0 : index
    %144 = vector.load %arg3[%c4, %c0_73, %c0_74] : memref<8x256x256xf32, #tpu.memory_space<vmem>>, vector<1x256x256xf32>
    %145 = vector.shape_cast %144 : vector<1x256x256xf32> to vector<256x256xf32>
    %cst_75 = arith.constant dense<0.000000e+00> : vector<8x256xf32>
    %146 = tpu.matmul %141, %145, %cst_75 {dimension_numbers = #tpu.dot_dimension_numbers<[1], [0], [0], [1], [0, 0, 1, 1], [], []>} : vector<8x256xf32>, vector<256x256xf32>, vector<8x256xf32> -> vector<8x256xf32>
    %147 = arith.addf %140, %146 : vector<8x256xf32>
    %c4_76 = arith.constant 4 : index
    %c0_77 = arith.constant 0 : index
    %c0_78 = arith.constant 0 : index
    %148 = vector.load %arg4[%c4_76, %c0_77, %c0_78] : memref<8x1x256xf32, #tpu.memory_space<vmem>>, vector<1x1x256xf32>
    %149 = vector.shape_cast %148 : vector<1x1x256xf32> to vector<1x256xf32>
    %150 = vector.broadcast %149 : vector<1x256xf32> to vector<8x256xf32>
    %151 = arith.addf %147, %150 : vector<8x256xf32>
    %c4_79 = arith.constant 4 : index
    %c0_80 = arith.constant 0 : index
    %c0_81 = arith.constant 0 : index
    %152 = vector.load %arg5[%c4_79, %c0_80, %c0_81] : memref<8x1x256xf32, #tpu.memory_space<vmem>>, vector<1x1x256xf32>
    %153 = vector.shape_cast %152 : vector<1x1x256xf32> to vector<1x256xf32>
    %c4_82 = arith.constant 4 : index
    %c0_83 = arith.constant 0 : index
    %c0_84 = arith.constant 0 : index
    %154 = vector.load %arg6[%c4_82, %c0_83, %c0_84] : memref<8x1x256xf32, #tpu.memory_space<vmem>>, vector<1x1x256xf32>
    %155 = vector.shape_cast %154 : vector<1x1x256xf32> to vector<1x256xf32>
    %cst_85 = arith.constant dense<0.000000e+00> : vector<8xf32>
    %156 = vector.multi_reduction <add>, %151, %cst_85 [1] : vector<8x256xf32> to vector<8xf32>
    %157 = vector.shape_cast %156 : vector<8xf32> to vector<8x1xf32>
    %cst_86 = arith.constant 2.560000e+02 : f32
    %158 = vector.broadcast %cst_86 : f32 to vector<8x1xf32>
    %159 = arith.divf %157, %158 : vector<8x1xf32>
    %160 = vector.broadcast %159 : vector<8x1xf32> to vector<8x256xf32>
    %161 = arith.subf %151, %160 : vector<8x256xf32>
    %162 = arith.mulf %161, %161 : vector<8x256xf32>
    %cst_87 = arith.constant dense<0.000000e+00> : vector<8xf32>
    %163 = vector.multi_reduction <add>, %162, %cst_87 [1] : vector<8x256xf32> to vector<8xf32>
    %164 = vector.shape_cast %163 : vector<8xf32> to vector<8x1xf32>
    %cst_88 = arith.constant 2.560000e+02 : f32
    %165 = vector.broadcast %cst_88 : f32 to vector<8x1xf32>
    %166 = arith.divf %164, %165 : vector<8x1xf32>
    %167 = vector.broadcast %159 : vector<8x1xf32> to vector<8x256xf32>
    %168 = arith.subf %151, %167 : vector<8x256xf32>
    %cst_89 = arith.constant 9.99999974E-6 : f32
    %169 = vector.broadcast %cst_89 : f32 to vector<8x1xf32>
    %170 = arith.addf %166, %169 : vector<8x1xf32>
    %171 = math.rsqrt %170 : vector<8x1xf32>
    %172 = vector.broadcast %171 : vector<8x1xf32> to vector<8x256xf32>
    %173 = arith.mulf %168, %172 : vector<8x256xf32>
    %174 = vector.broadcast %153 : vector<1x256xf32> to vector<8x256xf32>
    %175 = arith.mulf %173, %174 : vector<8x256xf32>
    %176 = vector.broadcast %155 : vector<1x256xf32> to vector<8x256xf32>
    %177 = arith.addf %175, %176 : vector<8x256xf32>
    %c5 = arith.constant 5 : index
    %c0_90 = arith.constant 0 : index
    %c0_91 = arith.constant 0 : index
    %178 = vector.load %arg3[%c5, %c0_90, %c0_91] : memref<8x256x256xf32, #tpu.memory_space<vmem>>, vector<1x256x256xf32>
    %179 = vector.shape_cast %178 : vector<1x256x256xf32> to vector<256x256xf32>
    %cst_92 = arith.constant dense<0.000000e+00> : vector<8x256xf32>
    %180 = tpu.matmul %140, %179, %cst_92 {dimension_numbers = #tpu.dot_dimension_numbers<[1], [0], [0], [1], [0, 0, 1, 1], [], []>} : vector<8x256xf32>, vector<256x256xf32>, vector<8x256xf32> -> vector<8x256xf32>
    %181 = arith.addf %141, %180 : vector<8x256xf32>
    %c5_93 = arith.constant 5 : index
    %c0_94 = arith.constant 0 : index
    %c0_95 = arith.constant 0 : index
    %182 = vector.load %arg4[%c5_93, %c0_94, %c0_95] : memref<8x1x256xf32, #tpu.memory_space<vmem>>, vector<1x1x256xf32>
    %183 = vector.shape_cast %182 : vector<1x1x256xf32> to vector<1x256xf32>
    %184 = vector.broadcast %183 : vector<1x256xf32> to vector<8x256xf32>
    %185 = arith.addf %181, %184 : vector<8x256xf32>
    %c5_96 = arith.constant 5 : index
    %c0_97 = arith.constant 0 : index
    %c0_98 = arith.constant 0 : index
    %186 = vector.load %arg5[%c5_96, %c0_97, %c0_98] : memref<8x1x256xf32, #tpu.memory_space<vmem>>, vector<1x1x256xf32>
    %187 = vector.shape_cast %186 : vector<1x1x256xf32> to vector<1x256xf32>
    %c5_99 = arith.constant 5 : index
    %c0_100 = arith.constant 0 : index
    %c0_101 = arith.constant 0 : index
    %188 = vector.load %arg6[%c5_99, %c0_100, %c0_101] : memref<8x1x256xf32, #tpu.memory_space<vmem>>, vector<1x1x256xf32>
    %189 = vector.shape_cast %188 : vector<1x1x256xf32> to vector<1x256xf32>
    %cst_102 = arith.constant dense<0.000000e+00> : vector<8xf32>
    %190 = vector.multi_reduction <add>, %185, %cst_102 [1] : vector<8x256xf32> to vector<8xf32>
    %191 = vector.shape_cast %190 : vector<8xf32> to vector<8x1xf32>
    %cst_103 = arith.constant 2.560000e+02 : f32
    %192 = vector.broadcast %cst_103 : f32 to vector<8x1xf32>
    %193 = arith.divf %191, %192 : vector<8x1xf32>
    %194 = vector.broadcast %193 : vector<8x1xf32> to vector<8x256xf32>
    %195 = arith.subf %185, %194 : vector<8x256xf32>
    %196 = arith.mulf %195, %195 : vector<8x256xf32>
    %cst_104 = arith.constant dense<0.000000e+00> : vector<8xf32>
    %197 = vector.multi_reduction <add>, %196, %cst_104 [1] : vector<8x256xf32> to vector<8xf32>
    %198 = vector.shape_cast %197 : vector<8xf32> to vector<8x1xf32>
    %cst_105 = arith.constant 2.560000e+02 : f32
    %199 = vector.broadcast %cst_105 : f32 to vector<8x1xf32>
    %200 = arith.divf %198, %199 : vector<8x1xf32>
    %201 = vector.broadcast %193 : vector<8x1xf32> to vector<8x256xf32>
    %202 = arith.subf %185, %201 : vector<8x256xf32>
    %cst_106 = arith.constant 9.99999974E-6 : f32
    %203 = vector.broadcast %cst_106 : f32 to vector<8x1xf32>
    %204 = arith.addf %200, %203 : vector<8x1xf32>
    %205 = math.rsqrt %204 : vector<8x1xf32>
    %206 = vector.broadcast %205 : vector<8x1xf32> to vector<8x256xf32>
    %207 = arith.mulf %202, %206 : vector<8x256xf32>
    %208 = vector.broadcast %187 : vector<1x256xf32> to vector<8x256xf32>
    %209 = arith.mulf %207, %208 : vector<8x256xf32>
    %210 = vector.broadcast %189 : vector<1x256xf32> to vector<8x256xf32>
    %211 = arith.addf %209, %210 : vector<8x256xf32>
    %c6 = arith.constant 6 : index
    %c0_107 = arith.constant 0 : index
    %c0_108 = arith.constant 0 : index
    %212 = vector.load %arg3[%c6, %c0_107, %c0_108] : memref<8x256x256xf32, #tpu.memory_space<vmem>>, vector<1x256x256xf32>
    %213 = vector.shape_cast %212 : vector<1x256x256xf32> to vector<256x256xf32>
    %cst_109 = arith.constant dense<0.000000e+00> : vector<8x256xf32>
    %214 = tpu.matmul %143, %213, %cst_109 {dimension_numbers = #tpu.dot_dimension_numbers<[1], [0], [0], [1], [0, 0, 1, 1], [], []>} : vector<8x256xf32>, vector<256x256xf32>, vector<8x256xf32> -> vector<8x256xf32>
    %215 = arith.addf %142, %214 : vector<8x256xf32>
    %c6_110 = arith.constant 6 : index
    %c0_111 = arith.constant 0 : index
    %c0_112 = arith.constant 0 : index
    %216 = vector.load %arg4[%c6_110, %c0_111, %c0_112] : memref<8x1x256xf32, #tpu.memory_space<vmem>>, vector<1x1x256xf32>
    %217 = vector.shape_cast %216 : vector<1x1x256xf32> to vector<1x256xf32>
    %218 = vector.broadcast %217 : vector<1x256xf32> to vector<8x256xf32>
    %219 = arith.addf %215, %218 : vector<8x256xf32>
    %c6_113 = arith.constant 6 : index
    %c0_114 = arith.constant 0 : index
    %c0_115 = arith.constant 0 : index
    %220 = vector.load %arg5[%c6_113, %c0_114, %c0_115] : memref<8x1x256xf32, #tpu.memory_space<vmem>>, vector<1x1x256xf32>
    %221 = vector.shape_cast %220 : vector<1x1x256xf32> to vector<1x256xf32>
    %c6_116 = arith.constant 6 : index
    %c0_117 = arith.constant 0 : index
    %c0_118 = arith.constant 0 : index
    %222 = vector.load %arg6[%c6_116, %c0_117, %c0_118] : memref<8x1x256xf32, #tpu.memory_space<vmem>>, vector<1x1x256xf32>
    %223 = vector.shape_cast %222 : vector<1x1x256xf32> to vector<1x256xf32>
    %cst_119 = arith.constant dense<0.000000e+00> : vector<8xf32>
    %224 = vector.multi_reduction <add>, %219, %cst_119 [1] : vector<8x256xf32> to vector<8xf32>
    %225 = vector.shape_cast %224 : vector<8xf32> to vector<8x1xf32>
    %cst_120 = arith.constant 2.560000e+02 : f32
    %226 = vector.broadcast %cst_120 : f32 to vector<8x1xf32>
    %227 = arith.divf %225, %226 : vector<8x1xf32>
    %228 = vector.broadcast %227 : vector<8x1xf32> to vector<8x256xf32>
    %229 = arith.subf %219, %228 : vector<8x256xf32>
    %230 = arith.mulf %229, %229 : vector<8x256xf32>
    %cst_121 = arith.constant dense<0.000000e+00> : vector<8xf32>
    %231 = vector.multi_reduction <add>, %230, %cst_121 [1] : vector<8x256xf32> to vector<8xf32>
    %232 = vector.shape_cast %231 : vector<8xf32> to vector<8x1xf32>
    %cst_122 = arith.constant 2.560000e+02 : f32
    %233 = vector.broadcast %cst_122 : f32 to vector<8x1xf32>
    %234 = arith.divf %232, %233 : vector<8x1xf32>
    %235 = vector.broadcast %227 : vector<8x1xf32> to vector<8x256xf32>
    %236 = arith.subf %219, %235 : vector<8x256xf32>
    %cst_123 = arith.constant 9.99999974E-6 : f32
    %237 = vector.broadcast %cst_123 : f32 to vector<8x1xf32>
    %238 = arith.addf %234, %237 : vector<8x1xf32>
    %239 = math.rsqrt %238 : vector<8x1xf32>
    %240 = vector.broadcast %239 : vector<8x1xf32> to vector<8x256xf32>
    %241 = arith.mulf %236, %240 : vector<8x256xf32>
    %242 = vector.broadcast %221 : vector<1x256xf32> to vector<8x256xf32>
    %243 = arith.mulf %241, %242 : vector<8x256xf32>
    %244 = vector.broadcast %223 : vector<1x256xf32> to vector<8x256xf32>
    %245 = arith.addf %243, %244 : vector<8x256xf32>
    %c7 = arith.constant 7 : index
    %c0_124 = arith.constant 0 : index
    %c0_125 = arith.constant 0 : index
    %246 = vector.load %arg3[%c7, %c0_124, %c0_125] : memref<8x256x256xf32, #tpu.memory_space<vmem>>, vector<1x256x256xf32>
    %247 = vector.shape_cast %246 : vector<1x256x256xf32> to vector<256x256xf32>
    %cst_126 = arith.constant dense<0.000000e+00> : vector<8x256xf32>
    %248 = tpu.matmul %142, %247, %cst_126 {dimension_numbers = #tpu.dot_dimension_numbers<[1], [0], [0], [1], [0, 0, 1, 1], [], []>} : vector<8x256xf32>, vector<256x256xf32>, vector<8x256xf32> -> vector<8x256xf32>
    %249 = arith.addf %143, %248 : vector<8x256xf32>
    %c7_127 = arith.constant 7 : index
    %c0_128 = arith.constant 0 : index
    %c0_129 = arith.constant 0 : index
    %250 = vector.load %arg4[%c7_127, %c0_128, %c0_129] : memref<8x1x256xf32, #tpu.memory_space<vmem>>, vector<1x1x256xf32>
    %251 = vector.shape_cast %250 : vector<1x1x256xf32> to vector<1x256xf32>
    %252 = vector.broadcast %251 : vector<1x256xf32> to vector<8x256xf32>
    %253 = arith.addf %249, %252 : vector<8x256xf32>
    %c7_130 = arith.constant 7 : index
    %c0_131 = arith.constant 0 : index
    %c0_132 = arith.constant 0 : index
    %254 = vector.load %arg5[%c7_130, %c0_131, %c0_132] : memref<8x1x256xf32, #tpu.memory_space<vmem>>, vector<1x1x256xf32>
    %255 = vector.shape_cast %254 : vector<1x1x256xf32> to vector<1x256xf32>
    %c7_133 = arith.constant 7 : index
    %c0_134 = arith.constant 0 : index
    %c0_135 = arith.constant 0 : index
    %256 = vector.load %arg6[%c7_133, %c0_134, %c0_135] : memref<8x1x256xf32, #tpu.memory_space<vmem>>, vector<1x1x256xf32>
    %257 = vector.shape_cast %256 : vector<1x1x256xf32> to vector<1x256xf32>
    %cst_136 = arith.constant dense<0.000000e+00> : vector<8xf32>
    %258 = vector.multi_reduction <add>, %253, %cst_136 [1] : vector<8x256xf32> to vector<8xf32>
    %259 = vector.shape_cast %258 : vector<8xf32> to vector<8x1xf32>
    %cst_137 = arith.constant 2.560000e+02 : f32
    %260 = vector.broadcast %cst_137 : f32 to vector<8x1xf32>
    %261 = arith.divf %259, %260 : vector<8x1xf32>
    %262 = vector.broadcast %261 : vector<8x1xf32> to vector<8x256xf32>
    %263 = arith.subf %253, %262 : vector<8x256xf32>
    %264 = arith.mulf %263, %263 : vector<8x256xf32>
    %cst_138 = arith.constant dense<0.000000e+00> : vector<8xf32>
    %265 = vector.multi_reduction <add>, %264, %cst_138 [1] : vector<8x256xf32> to vector<8xf32>
    %266 = vector.shape_cast %265 : vector<8xf32> to vector<8x1xf32>
    %cst_139 = arith.constant 2.560000e+02 : f32
    %267 = vector.broadcast %cst_139 : f32 to vector<8x1xf32>
    %268 = arith.divf %266, %267 : vector<8x1xf32>
    %269 = vector.broadcast %261 : vector<8x1xf32> to vector<8x256xf32>
    %270 = arith.subf %253, %269 : vector<8x256xf32>
    %cst_140 = arith.constant 9.99999974E-6 : f32
    %271 = vector.broadcast %cst_140 : f32 to vector<8x1xf32>
    %272 = arith.addf %268, %271 : vector<8x1xf32>
    %273 = math.rsqrt %272 : vector<8x1xf32>
    %274 = vector.broadcast %273 : vector<8x1xf32> to vector<8x256xf32>
    %275 = arith.mulf %270, %274 : vector<8x256xf32>
    %276 = vector.broadcast %255 : vector<1x256xf32> to vector<8x256xf32>
    %277 = arith.mulf %275, %276 : vector<8x256xf32>
    %278 = vector.broadcast %257 : vector<1x256xf32> to vector<8x256xf32>
    %279 = arith.addf %277, %278 : vector<8x256xf32>
    %280 = tpu.concatenate %177, %211, %245, %279 in 1 : vector<8x256xf32>, vector<8x256xf32>, vector<8x256xf32>, vector<8x256xf32> -> vector<8x1024xf32>
    %c0_141 = arith.constant 0 : index
    %c0_142 = arith.constant 0 : index
    %281 = vector.load %arg7[%c0_141, %c0_142] : memref<1024x512xf32, #tpu.memory_space<vmem>>, vector<1024x512xf32>
    %cst_143 = arith.constant dense<0.000000e+00> : vector<8x512xf32>
    %282 = tpu.matmul %280, %281, %cst_143 {dimension_numbers = #tpu.dot_dimension_numbers<[1], [0], [0], [1], [0, 0, 1, 1], [], []>} : vector<8x1024xf32>, vector<1024x512xf32>, vector<8x512xf32> -> vector<8x512xf32>
    %c0_144 = arith.constant 0 : index
    %c0_145 = arith.constant 0 : index
    %283 = vector.load %arg8[%c0_144, %c0_145] : memref<1x512xf32, #tpu.memory_space<vmem>>, vector<1x512xf32>
    %284 = vector.broadcast %283 : vector<1x512xf32> to vector<8x512xf32>
    %285 = arith.addf %282, %284 : vector<8x512xf32>
    %286 = math.tanh %285 : vector<8x512xf32>
    %c0_146 = arith.constant 0 : index
    %c0_147 = arith.constant 0 : index
    %287 = vector.load %arg9[%c0_146, %c0_147] : memref<1x512xf32, #tpu.memory_space<vmem>>, vector<1x512xf32>
    %c0_148 = arith.constant 0 : index
    %c0_149 = arith.constant 0 : index
    %288 = vector.load %arg10[%c0_148, %c0_149] : memref<1x512xf32, #tpu.memory_space<vmem>>, vector<1x512xf32>
    %cst_150 = arith.constant dense<0.000000e+00> : vector<512xf32>
    %289 = vector.multi_reduction <add>, %286, %cst_150 [0] : vector<8x512xf32> to vector<512xf32>
    %290 = vector.shape_cast %289 : vector<512xf32> to vector<1x512xf32>
    %cst_151 = arith.constant 8.000000e+00 : f32
    %291 = vector.broadcast %cst_151 : f32 to vector<1x512xf32>
    %292 = arith.divf %290, %291 : vector<1x512xf32>
    %293 = vector.broadcast %292 : vector<1x512xf32> to vector<8x512xf32>
    %294 = arith.subf %286, %293 : vector<8x512xf32>
    %295 = arith.mulf %294, %294 : vector<8x512xf32>
    %cst_152 = arith.constant dense<0.000000e+00> : vector<512xf32>
    %296 = vector.multi_reduction <add>, %295, %cst_152 [0] : vector<8x512xf32> to vector<512xf32>
    %297 = vector.shape_cast %296 : vector<512xf32> to vector<1x512xf32>
    %cst_153 = arith.constant 8.000000e+00 : f32
    %298 = vector.broadcast %cst_153 : f32 to vector<1x512xf32>
    %299 = arith.divf %297, %298 : vector<1x512xf32>
    %300 = vector.broadcast %292 : vector<1x512xf32> to vector<8x512xf32>
    %301 = arith.subf %286, %300 : vector<8x512xf32>
    %cst_154 = arith.constant 9.99999974E-6 : f32
    %302 = vector.broadcast %cst_154 : f32 to vector<1x512xf32>
    %303 = arith.addf %299, %302 : vector<1x512xf32>
    %304 = math.rsqrt %303 : vector<1x512xf32>
    %305 = vector.broadcast %304 : vector<1x512xf32> to vector<8x512xf32>
    %306 = arith.mulf %301, %305 : vector<8x512xf32>
    %307 = vector.broadcast %287 : vector<1x512xf32> to vector<8x512xf32>
    %308 = arith.mulf %306, %307 : vector<8x512xf32>
    %309 = vector.broadcast %288 : vector<1x512xf32> to vector<8x512xf32>
    %310 = arith.addf %308, %309 : vector<8x512xf32>
    %c0_155 = arith.constant 0 : index
    %c0_156 = arith.constant 0 : index
    %311 = vector.load %arg11[%c0_155, %c0_156] : memref<512x256xf32, #tpu.memory_space<vmem>>, vector<512x256xf32>
    %cst_157 = arith.constant dense<0.000000e+00> : vector<8x256xf32>
    %312 = tpu.matmul %310, %311, %cst_157 {dimension_numbers = #tpu.dot_dimension_numbers<[1], [0], [0], [1], [0, 0, 1, 1], [], []>} : vector<8x512xf32>, vector<512x256xf32>, vector<8x256xf32> -> vector<8x256xf32>
    %c0_158 = arith.constant 0 : index
    %c0_159 = arith.constant 0 : index
    %313 = vector.load %arg12[%c0_158, %c0_159] : memref<1x256xf32, #tpu.memory_space<vmem>>, vector<1x256xf32>
    %314 = vector.broadcast %313 : vector<1x256xf32> to vector<8x256xf32>
    %315 = arith.addf %312, %314 : vector<8x256xf32>
    %316 = math.tanh %315 : vector<8x256xf32>
    %c0_160 = arith.constant 0 : index
    %c0_161 = arith.constant 0 : index
    %317 = vector.load %arg13[%c0_160, %c0_161] : memref<1x256xf32, #tpu.memory_space<vmem>>, vector<1x256xf32>
    %c0_162 = arith.constant 0 : index
    %c0_163 = arith.constant 0 : index
    %318 = vector.load %arg14[%c0_162, %c0_163] : memref<1x256xf32, #tpu.memory_space<vmem>>, vector<1x256xf32>
    %cst_164 = arith.constant dense<0.000000e+00> : vector<256xf32>
    %319 = vector.multi_reduction <add>, %316, %cst_164 [0] : vector<8x256xf32> to vector<256xf32>
    %320 = vector.shape_cast %319 : vector<256xf32> to vector<1x256xf32>
    %cst_165 = arith.constant 8.000000e+00 : f32
    %321 = vector.broadcast %cst_165 : f32 to vector<1x256xf32>
    %322 = arith.divf %320, %321 : vector<1x256xf32>
    %323 = vector.broadcast %322 : vector<1x256xf32> to vector<8x256xf32>
    %324 = arith.subf %316, %323 : vector<8x256xf32>
    %325 = arith.mulf %324, %324 : vector<8x256xf32>
    %cst_166 = arith.constant dense<0.000000e+00> : vector<256xf32>
    %326 = vector.multi_reduction <add>, %325, %cst_166 [0] : vector<8x256xf32> to vector<256xf32>
    %327 = vector.shape_cast %326 : vector<256xf32> to vector<1x256xf32>
    %cst_167 = arith.constant 8.000000e+00 : f32
    %328 = vector.broadcast %cst_167 : f32 to vector<1x256xf32>
    %329 = arith.divf %327, %328 : vector<1x256xf32>
    %330 = vector.broadcast %322 : vector<1x256xf32> to vector<8x256xf32>
    %331 = arith.subf %316, %330 : vector<8x256xf32>
    %cst_168 = arith.constant 9.99999974E-6 : f32
    %332 = vector.broadcast %cst_168 : f32 to vector<1x256xf32>
    %333 = arith.addf %329, %332 : vector<1x256xf32>
    %334 = math.rsqrt %333 : vector<1x256xf32>
    %335 = vector.broadcast %334 : vector<1x256xf32> to vector<8x256xf32>
    %336 = arith.mulf %331, %335 : vector<8x256xf32>
    %337 = vector.broadcast %317 : vector<1x256xf32> to vector<8x256xf32>
    %338 = arith.mulf %336, %337 : vector<8x256xf32>
    %339 = vector.broadcast %318 : vector<1x256xf32> to vector<8x256xf32>
    %340 = arith.addf %338, %339 : vector<8x256xf32>
    %c0_169 = arith.constant 0 : index
    %c0_170 = arith.constant 0 : index
    %341 = vector.load %arg15[%c0_169, %c0_170] : memref<256x1xf32, #tpu.memory_space<vmem>>, vector<256x1xf32>
    %cst_171 = arith.constant dense<0.000000e+00> : vector<8x1xf32>
    %342 = tpu.matmul %340, %341, %cst_171 {dimension_numbers = #tpu.dot_dimension_numbers<[1], [0], [0], [1], [0, 0, 1, 1], [], []>} : vector<8x256xf32>, vector<256x1xf32>, vector<8x1xf32> -> vector<8x1xf32>
    %c0_172 = arith.constant 0 : index
    %c0_173 = arith.constant 0 : index
    %343 = vector.load %arg16[%c0_172, %c0_173] : memref<1x1xf32, #tpu.memory_space<vmem>>, vector<1x1xf32>
    %344 = vector.broadcast %343 : vector<1x1xf32> to vector<8x1xf32>
    %345 = arith.addf %342, %344 : vector<8x1xf32>
    %346 = arith.negf %345 : vector<8x1xf32>
    %347 = math.exp %346 : vector<8x1xf32>
    %cst_174 = arith.constant 1.000000e+00 : f32
    %348 = vector.broadcast %cst_174 : f32 to vector<8x1xf32>
    %349 = arith.addf %348, %347 : vector<8x1xf32>
    %350 = arith.divf %348, %349 : vector<8x1xf32>
    %c0_175 = arith.constant 0 : index
    %c0_176 = arith.constant 0 : index
    %351 = vector.load %arg17[%c0_175, %c0_176] : memref<8x1xf32, #tpu.memory_space<vmem>>, vector<8x1xf32>
    tpu.vector_store %arg17[%c0_175, %c0_176], %350 {strides = array<i32>} : memref<8x1xf32, #tpu.memory_space<vmem>>, vector<8x1xf32>,
    return
  }
}

</mosaic_0001>

<llo_original>
// kernel: decoder_forward.1
$region0: #{decoder_forward.1}
  #allocation0 [shape = 'u32[]', space=smem, size = 0x4, offset = 0x4, fixed_abs, tag = 'smem constant byte address 0x4 - core index']
  #allocation1 [shape = 'u32[144,128]{1,0:T(1,128)}', space=vmem, size = 0x12000, scoped, tag = 'internal scratch']
  #allocation2 [shape = 'f32[1,1]{1,0:T(1,128)S(1)}', space=vmem, size = 0x200, scoped, tag = 'scoped memory for decoder_forward.1']
  %s0 = inlined_call_operand.vmem [shape: f32[8,256], index: 0, kind: input, shape index: {}]
  %s1 = inlined_call_operand.vmem [shape: f32[8,256], index: 1, kind: input, shape index: {}]
  %s2 = inlined_call_operand.vmem [shape: f32[8,256], index: 2, kind: input, shape index: {}]
  %s3 = inlined_call_operand.hbm [shape: f32[8,256,256], index: 3, kind: input, shape index: {}]
  %s4 = inlined_call_operand.hbm [shape: f32[8,1,256], index: 4, kind: input, shape index: {}]
  %s5 = inlined_call_operand.hbm [shape: f32[8,1,256], index: 5, kind: input, shape index: {}]
  %s6 = inlined_call_operand.hbm [shape: f32[8,1,256], index: 6, kind: input, shape index: {}]
  %s7 = inlined_call_operand.hbm [shape: f32[1024,512], index: 7, kind: input, shape index: {}]
  %s8 = inlined_call_operand.hbm [shape: f32[1,512], index: 8, kind: input, shape index: {}]
  %s9 = inlined_call_operand.hbm [shape: f32[1,512], index: 9, kind: input, shape index: {}]
  %s10 = inlined_call_operand.hbm [shape: f32[1,512], index: 10, kind: input, shape index: {}]
  %s11 = inlined_call_operand.hbm [shape: f32[512,256], index: 11, kind: input, shape index: {}]
  %s12 = inlined_call_operand.hbm [shape: f32[1,256], index: 12, kind: input, shape index: {}]
  %s13 = inlined_call_operand.hbm [shape: f32[1,256], index: 13, kind: input, shape index: {}]
  %s14 = inlined_call_operand.hbm [shape: f32[1,256], index: 14, kind: input, shape index: {}]
  %s15 = inlined_call_operand.vmem [shape: f32[256,1], index: 15, kind: input, shape index: {}]
  %s16 = inlined_call_operand.<no memory space> [shape: f32[1,1], index: 16, kind: input, shape index: {}]
  %s17 = inlined_call_operand.vmem [shape: f32[8,1], index: 17, kind: output, shape index: {}]
  %s18 = sld [smem:[#allocation0]]
  $region126: #{decoder_forward.1} parent=0
    _
  %s20 = ssub.s32 1, %s18
  %s21 = scalar_select 0, %s20, %s18
  %v22 = vstv %s16
  %23 = vst [vmem:[#allocation2] sm:$0x1] %v22
  $region1: #{decoder_forward.1} parent=0
    #allocation3 [shape = 'u8[2097152]{0}', space=vmem, size = 0x200000, scoped, tag = 'input window, operand 3, single buffered']
    #allocation4 [shape = 's32[1]{0}', space=sflag, size = 0x4, scoped, tag = 'scoped memory for decoder_forward.1']
    #allocation5 [shape = 'u8[8192]{0}', space=vmem, size = 0x2000, scoped, tag = 'input window, operand 4, single buffered']
    #allocation6 [shape = 's32[1]{0}', space=sflag, size = 0x4, scoped, tag = 'scoped memory for decoder_forward.1']
    #allocation7 [shape = 'u8[8192]{0}', space=vmem, size = 0x2000, scoped, tag = 'input window, operand 5, single buffered']
    #allocation8 [shape = 'u8[8192]{0}', space=vmem, size = 0x2000, scoped, tag = 'input window, operand 6, single buffered']
    #allocation9 [shape = 's32[1]{0}', space=sflag, size = 0x4, scoped, tag = 'scoped memory for decoder_forward.1']
    #allocation10 [shape = 'u8[2097152]{0}', space=vmem, size = 0x200000, scoped, tag = 'input window, operand 7, single buffered']
    #allocation11 [shape = 'u8[2048]{0}', space=vmem, size = 0x800, scoped, tag = 'input window, operand 8, single buffered']
    #allocation12 [shape = 's32[1]{0}', space=sflag, size = 0x4, scoped, tag = 'scoped memory for decoder_forward.1']
    #allocation13 [shape = 'u8[2048]{0}', space=vmem, size = 0x800, scoped, tag = 'input window, operand 9, single buffered']
    #allocation14 [shape = 'u8[2048]{0}', space=vmem, size = 0x800, scoped, tag = 'input window, operand 10, single buffered']
    #allocation15 [shape = 's32[1]{0}', space=sflag, size = 0x4, scoped, tag = 'scoped memory for decoder_forward.1']
    #allocation16 [shape = 'u8[524288]{0}', space=vmem, size = 0x80000, scoped, tag = 'input window, operand 11, single buffered']
    #allocation17 [shape = 'u8[1024]{0}', space=vmem, size = 0x400, scoped, tag = 'input window, operand 12, single buffered']
    #allocation18 [shape = 's32[1]{0}', space=sflag, size = 0x4, scoped, tag = 'scoped memory for decoder_forward.1']
    #allocation19 [shape = 'u8[1024]{0}', space=vmem, size = 0x400, scoped, tag = 'input window, operand 13, single buffered']
    #allocation20 [shape = 'u8[1024]{0}', space=vmem, size = 0x400, scoped, tag = 'input window, operand 14, single buffered']
    #allocation21 [shape = 's32[1]{0}', space=sflag, size = 0x4, scoped, tag = 'scoped memory for decoder_forward.1']
    %24 = vsyncpa [#allocation4], 0
    %25 = vsyncpa [#allocation6], 0
    %26 = vsyncpa [#allocation9], 0
    %27 = vsyncpa [#allocation12], 0
    %28 = vsyncpa [#allocation15], 0
    %29 = vsyncpa [#allocation18], 0
    %30 = vsyncpa [#allocation21], 0
    // Predicated region
    $region2: #{decoder_forward.1} parent=1 // pred_check
      _
    $region3: #{decoder_forward.1} parent=1 // pred_check_branch
      %32 = sbr.rel (0) target = $region5
    $region4: #{decoder_forward.1} parent=1 // pred_region
      _
    $region5: #{decoder_forward.1} parent=1 // pred_fallthru
      _
    // Predicated region
    $region6: #{decoder_forward.1} parent=1 // pred_check
      _
    $region7: #{decoder_forward.1} parent=1 // pred_check_branch
      %34 = sbr.rel (0) target = $region9
    $region8: #{decoder_forward.1} parent=1 // pred_region
      _
    $region9: #{decoder_forward.1} parent=1 // pred_fallthru
      _
    // Predicated region
    $region10: #{decoder_forward.1} parent=1 // pred_check
      _
    $region11: #{decoder_forward.1} parent=1 // pred_check_branch
      %36 = sbr.rel (0) target = $region13
    $region12: #{decoder_forward.1} parent=1 // pred_region
      _
    $region13: #{decoder_forward.1} parent=1 // pred_fallthru
      _
    // Predicated region
    $region14: #{decoder_forward.1} parent=1 // pred_check
      _
    $region15: #{decoder_forward.1} parent=1 // pred_check_branch
      %38 = sbr.rel (0) target = $region17
    $region16: #{decoder_forward.1} parent=1 // pred_region
      %s40 = ssub.s32 65536, 65536
      %41 = vsyncadd [#allocation4], %s40
      %s42 = sshll.u32 [#allocation3], 4
      %s43 = int_to_ptr.vmem [resolvable:$true] %s42
      %48 = dma.hbm_to_vmem [thread:$0]  %s3, 65536, %s43, [#allocation4], 256, 256, 16
    $region17: #{decoder_forward.1} parent=1 // pred_fallthru
      _
    // Predicated region
    $region18: #{decoder_forward.1} parent=1 // pred_check
      _
    $region19: #{decoder_forward.1} parent=1 // pred_check_branch
      %50 = sbr.rel (0) target = $region21
    $region20: #{decoder_forward.1} parent=1 // pred_region
      %s52 = ssub.s32 256, 256
      %53 = vsyncadd [#allocation6], %s52
      %s54 = sshll.u32 [#allocation5], 4
      %s55 = int_to_ptr.vmem [resolvable:$true] %s54
      %60 = dma.hbm_to_vmem [thread:$0]  %s4, 256, %s55, [#allocation6], 32, 32, 2
    $region21: #{decoder_forward.1} parent=1 // pred_fallthru
      _
    // Predicated region
    $region22: #{decoder_forward.1} parent=1 // pred_check
      _
    $region23: #{decoder_forward.1} parent=1 // pred_check_branch
      %62 = sbr.rel (0) target = $region25
    $region24: #{decoder_forward.1} parent=1 // pred_region
      %s64 = ssub.s32 256, 256
      %65 = vsyncadd [#allocation6], %s64
      %s66 = sshll.u32 [#allocation7], 4
      %s67 = int_to_ptr.vmem [resolvable:$true] %s66
      %72 = dma.hbm_to_vmem [thread:$0]  %s5, 256, %s67, [#allocation6], 32, 32, 2
    $region25: #{decoder_forward.1} parent=1 // pred_fallthru
      _
    // Predicated region
    $region26: #{decoder_forward.1} parent=1 // pred_check
      _
    $region27: #{decoder_forward.1} parent=1 // pred_check_branch
      %74 = sbr.rel (0) target = $region29
    $region28: #{decoder_forward.1} parent=1 // pred_region
      %s76 = ssub.s32 256, 256
      %77 = vsyncadd [#allocation9], %s76
      %s78 = sshll.u32 [#allocation8], 4
      %s79 = int_to_ptr.vmem [resolvable:$true] %s78
      %84 = dma.hbm_to_vmem [thread:$0]  %s6, 256, %s79, [#allocation9], 32, 32, 2
    $region29: #{decoder_forward.1} parent=1 // pred_fallthru
      _
    // Predicated region
    $region30: #{decoder_forward.1} parent=1 // pred_check
      _
    $region31: #{decoder_forward.1} parent=1 // pred_check_branch
      %86 = sbr.rel (0) target = $region33
    $region32: #{decoder_forward.1} parent=1 // pred_region
      %s88 = ssub.s32 65536, 65536
      %89 = vsyncadd [#allocation9], %s88
      %s90 = sshll.u32 [#allocation10], 4
      %s91 = int_to_ptr.vmem [resolvable:$true] %s90
      %96 = dma.hbm_to_vmem [thread:$0]  %s7, 65536, %s91, [#allocation9], 512, 512, 32
    $region33: #{decoder_forward.1} parent=1 // pred_fallthru
      _
    // Predicated region
    $region34: #{decoder_forward.1} parent=1 // pred_check
      _
    $region35: #{decoder_forward.1} parent=1 // pred_check_branch
      %98 = sbr.rel (0) target = $region37
    $region36: #{decoder_forward.1} parent=1 // pred_region
      %s100 = ssub.s32 64, 64
      %101 = vsyncadd [#allocation12], %s100
      %s103 = sshll.u32 [#allocation11], 4
      %s104 = int_to_ptr.vmem [resolvable:$true] %s103
      %106 = dma.hbm_to_vmem [thread:$0]  %s8, 64, %s104, [#allocation12]
    $region37: #{decoder_forward.1} parent=1 // pred_fallthru
      _
    // Predicated region
    $region38: #{decoder_forward.1} parent=1 // pred_check
      _
    $region39: #{decoder_forward.1} parent=1 // pred_check_branch
      %108 = sbr.rel (0) target = $region41
    $region40: #{decoder_forward.1} parent=1 // pred_region
      %s110 = ssub.s32 64, 64
      %111 = vsyncadd [#allocation12], %s110
      %s113 = sshll.u32 [#allocation13], 4
      %s114 = int_to_ptr.vmem [resolvable:$true] %s113
      %116 = dma.hbm_to_vmem [thread:$0]  %s9, 64, %s114, [#allocation12]
    $region41: #{decoder_forward.1} parent=1 // pred_fallthru
      _
    // Predicated region
    $region42: #{decoder_forward.1} parent=1 // pred_check
      _
    $region43: #{decoder_forward.1} parent=1 // pred_check_branch
      %118 = sbr.rel (0) target = $region45
    $region44: #{decoder_forward.1} parent=1 // pred_region
      %s120 = ssub.s32 64, 64
      %121 = vsyncadd [#allocation15], %s120
      %s123 = sshll.u32 [#allocation14], 4
      %s124 = int_to_ptr.vmem [resolvable:$true] %s123
      %126 = dma.hbm_to_vmem [thread:$0]  %s10, 64, %s124, [#allocation15]
    $region45: #{decoder_forward.1} parent=1 // pred_fallthru
      _
    // Predicated region
    $region46: #{decoder_forward.1} parent=1 // pred_check
      _
    $region47: #{decoder_forward.1} parent=1 // pred_check_branch
      %128 = sbr.rel (0) target = $region49
    $region48: #{decoder_forward.1} parent=1 // pred_region
      %s130 = ssub.s32 16384, 16384
      %131 = vsyncadd [#allocation15], %s130
      %s132 = sshll.u32 [#allocation16], 4
      %s133 = int_to_ptr.vmem [resolvable:$true] %s132
      %138 = dma.hbm_to_vmem [thread:$0]  %s11, 16384, %s133, [#allocation15], 256, 256, 16
    $region49: #{decoder_forward.1} parent=1 // pred_fallthru
      _
    // Predicated region
    $region50: #{decoder_forward.1} parent=1 // pred_check
      _
    $region51: #{decoder_forward.1} parent=1 // pred_check_branch
      %140 = sbr.rel (0) target = $region53
    $region52: #{decoder_forward.1} parent=1 // pred_region
      %s142 = ssub.s32 32, 32
      %143 = vsyncadd [#allocation18], %s142
      %s145 = sshll.u32 [#allocation17], 4
      %s146 = int_to_ptr.vmem [resolvable:$true] %s145
      %148 = dma.hbm_to_vmem [thread:$0]  %s12, 32, %s146, [#allocation18]
    $region53: #{decoder_forward.1} parent=1 // pred_fallthru
      _
    // Predicated region
    $region54: #{decoder_forward.1} parent=1 // pred_check
      _
    $region55: #{decoder_forward.1} parent=1 // pred_check_branch
      %150 = sbr.rel (0) target = $region57
    $region56: #{decoder_forward.1} parent=1 // pred_region
      %s152 = ssub.s32 32, 32
      %153 = vsyncadd [#allocation18], %s152
      %s155 = sshll.u32 [#allocation19], 4
      %s156 = int_to_ptr.vmem [resolvable:$true] %s155
      %158 = dma.hbm_to_vmem [thread:$0]  %s13, 32, %s156, [#allocation18]
    $region57: #{decoder_forward.1} parent=1 // pred_fallthru
      _
    // Predicated region
    $region58: #{decoder_forward.1} parent=1 // pred_check
      _
    $region59: #{decoder_forward.1} parent=1 // pred_check_branch
      %160 = sbr.rel (0) target = $region61
    $region60: #{decoder_forward.1} parent=1 // pred_region
      %s162 = ssub.s32 32, 32
      %163 = vsyncadd [#allocation21], %s162
      %s165 = sshll.u32 [#allocation20], 4
      %s166 = int_to_ptr.vmem [resolvable:$true] %s165
      %168 = dma.hbm_to_vmem [thread:$0]  %s14, 32, %s166, [#allocation21]
    $region61: #{decoder_forward.1} parent=1 // pred_fallthru
      _
    // Predicated region
    $region62: #{decoder_forward.1} parent=1 // pred_check
      _
    $region63: #{decoder_forward.1} parent=1 // pred_check_branch
      %170 = sbr.rel (0) target = $region65
    $region64: #{decoder_forward.1} parent=1 // pred_region
      _
    $region65: #{decoder_forward.1} parent=1 // pred_fallthru
      _
    // Predicated region
    $region66: #{decoder_forward.1} parent=1 // pred_check
      _
    $region67: #{decoder_forward.1} parent=1 // pred_check_branch
      %172 = sbr.rel (0) target = $region69
    $region68: #{decoder_forward.1} parent=1 // pred_region
      _
    $region69: #{decoder_forward.1} parent=1 // pred_fallthru
      _
    // Predicated region
    $region70: #{decoder_forward.1} parent=1 // pred_check
      _
    $region71: #{decoder_forward.1} parent=1 // pred_check_branch
      %174 = sbr.rel (0) target = $region73
    $region72: #{decoder_forward.1} parent=1 // pred_region
      %175 = dma.done [#allocation4], 65536
    $region73: #{decoder_forward.1} parent=1 // pred_fallthru
      _
    // Predicated region
    $region74: #{decoder_forward.1} parent=1 // pred_check
      _
    $region75: #{decoder_forward.1} parent=1 // pred_check_branch
      %177 = sbr.rel (0) target = $region77
    $region76: #{decoder_forward.1} parent=1 // pred_region
      %178 = dma.done [#allocation6], 256
    $region77: #{decoder_forward.1} parent=1 // pred_fallthru
      _
    // Predicated region
    $region78: #{decoder_forward.1} parent=1 // pred_check
      _
    $region79: #{decoder_forward.1} parent=1 // pred_check_branch
      %180 = sbr.rel (0) target = $region81
    $region80: #{decoder_forward.1} parent=1 // pred_region
      %181 = dma.done [#allocation6], 256
    $region81: #{decoder_forward.1} parent=1 // pred_fallthru
      _
    // Predicated region
    $region82: #{decoder_forward.1} parent=1 // pred_check
      _
    $region83: #{decoder_forward.1} parent=1 // pred_check_branch
      %183 = sbr.rel (0) target = $region85
    $region84: #{decoder_forward.1} parent=1 // pred_region
      %184 = dma.done [#allocation9], 256
    $region85: #{decoder_forward.1} parent=1 // pred_fallthru
      _
    // Predicated region
    $region86: #{decoder_forward.1} parent=1 // pred_check
      _
    $region87: #{decoder_forward.1} parent=1 // pred_check_branch
      %186 = sbr.rel (0) target = $region89
    $region88: #{decoder_forward.1} parent=1 // pred_region
      %187 = dma.done [#allocation9], 65536
    $region89: #{decoder_forward.1} parent=1 // pred_fallthru
      _
    // Predicated region
    $region90: #{decoder_forward.1} parent=1 // pred_check
      _
    $region91: #{decoder_forward.1} parent=1 // pred_check_branch
      %189 = sbr.rel (0) target = $region93
    $region92: #{decoder_forward.1} parent=1 // pred_region
      %190 = dma.done [#allocation12], 64
    $region93: #{decoder_forward.1} parent=1 // pred_fallthru
      _
    // Predicated region
    $region94: #{decoder_forward.1} parent=1 // pred_check
      _
    $region95: #{decoder_forward.1} parent=1 // pred_check_branch
      %192 = sbr.rel (0) target = $region97
    $region96: #{decoder_forward.1} parent=1 // pred_region
      %193 = dma.done [#allocation12], 64
    $region97: #{decoder_forward.1} parent=1 // pred_fallthru
      _
    // Predicated region
    $region98: #{decoder_forward.1} parent=1 // pred_check
      _
    $region99: #{decoder_forward.1} parent=1 // pred_check_branch
      %195 = sbr.rel (0) target = $region101
    $region100: #{decoder_forward.1} parent=1 // pred_region
      %196 = dma.done [#allocation15], 64
    $region101: #{decoder_forward.1} parent=1 // pred_fallthru
      _
    // Predicated region
    $region102: #{decoder_forward.1} parent=1 // pred_check
      _
    $region103: #{decoder_forward.1} parent=1 // pred_check_branch
      %198 = sbr.rel (0) target = $region105
    $region104: #{decoder_forward.1} parent=1 // pred_region
      %199 = dma.done [#allocation15], 16384
    $region105: #{decoder_forward.1} parent=1 // pred_fallthru
      _
    // Predicated region
    $region106: #{decoder_forward.1} parent=1 // pred_check
      _
    $region107: #{decoder_forward.1} parent=1 // pred_check_branch
      %201 = sbr.rel (0) target = $region109
    $region108: #{decoder_forward.1} parent=1 // pred_region
      %202 = dma.done [#allocation18], 32
    $region109: #{decoder_forward.1} parent=1 // pred_fallthru
      _
    // Predicated region
    $region110: #{decoder_forward.1} parent=1 // pred_check
      _
    $region111: #{decoder_forward.1} parent=1 // pred_check_branch
      %204 = sbr.rel (0) target = $region113
    $region112: #{decoder_forward.1} parent=1 // pred_region
      %205 = dma.done [#allocation18], 32
    $region113: #{decoder_forward.1} parent=1 // pred_fallthru
      _
    // Predicated region
    $region114: #{decoder_forward.1} parent=1 // pred_check
      _
    $region115: #{decoder_forward.1} parent=1 // pred_check_branch
      %207 = sbr.rel (0) target = $region117
    $region116: #{decoder_forward.1} parent=1 // pred_region
      %208 = dma.done [#allocation21], 32
    $region117: #{decoder_forward.1} parent=1 // pred_fallthru
      _
    %v209 = vld [vmem:[%s0] sm:$0xff]
    %v210 = vld [vmem:[%s0 + $0x8] sm:$0xff]
    %v211 = vld [vmem:[%s1] sm:$0xff]
    %v212 = vld [vmem:[%s1 + $0x8] sm:$0xff]
    %v213 = vld [vmem:[%s2] sm:$0xff]
    %v214 = vld [vmem:[%s2 + $0x8] sm:$0xff]
    %v215 = vld [vmem:[#allocation3] sm:$0xff]
    %v216 = vld [vmem:[#allocation3 + $0x8] sm:$0xff]
    %v217 = vld [vmem:[#allocation3 + $0x10] sm:$0xff]
    %v218 = vld [vmem:[#allocation3 + $0x18] sm:$0xff]
    %v219 = vld [vmem:[#allocation3 + $0x20] sm:$0xff]
    %v220 = vld [vmem:[#allocation3 + $0x28] sm:$0xff]
    %v221 = vld [vmem:[#allocation3 + $0x30] sm:$0xff]
    %v222 = vld [vmem:[#allocation3 + $0x38] sm:$0xff]
    %v223 = vld [vmem:[#allocation3 + $0x40] sm:$0xff]
    %v224 = vld [vmem:[#allocation3 + $0x48] sm:$0xff]
    %v225 = vld [vmem:[#allocation3 + $0x50] sm:$0xff]
    %v226 = vld [vmem:[#allocation3 + $0x58] sm:$0xff]
    %v227 = vld [vmem:[#allocation3 + $0x60] sm:$0xff]
    %v228 = vld [vmem:[#allocation3 + $0x68] sm:$0xff]
    %v229 = vld [vmem:[#allocation3 + $0x70] sm:$0xff]
    %v230 = vld [vmem:[#allocation3 + $0x78] sm:$0xff]
    %v231 = vld [vmem:[#allocation3 + $0x80] sm:$0xff]
    %v232 = vld [vmem:[#allocation3 + $0x88] sm:$0xff]
    %v233 = vld [vmem:[#allocation3 + $0x90] sm:$0xff]
    %v234 = vld [vmem:[#allocation3 + $0x98] sm:$0xff]
    %v235 = vld [vmem:[#allocation3 + $0xa0] sm:$0xff]
    %v236 = vld [vmem:[#allocation3 + $0xa8] sm:$0xff]
    %v237 = vld [vmem:[#allocation3 + $0xb0] sm:$0xff]
    %v238 = vld [vmem:[#allocation3 + $0xb8] sm:$0xff]
    %v239 = vld [vmem:[#allocation3 + $0xc0] sm:$0xff]
    %v240 = vld [vmem:[#allocation3 + $0xc8] sm:$0xff]
    %v241 = vld [vmem:[#allocation3 + $0xd0] sm:$0xff]
    %v242 = vld [vmem:[#allocation3 + $0xd8] sm:$0xff]
    %v243 = vld [vmem:[#allocation3 + $0xe0] sm:$0xff]
    %v244 = vld [vmem:[#allocation3 + $0xe8] sm:$0xff]
    %v245 = vld [vmem:[#allocation3 + $0xf0] sm:$0xff]
    %v246 = vld [vmem:[#allocation3 + $0xf8] sm:$0xff]
    %v247 = vld [vmem:[#allocation3 + $0x100] sm:$0xff]
    %v248 = vld [vmem:[#allocation3 + $0x108] sm:$0xff]
    %v249 = vld [vmem:[#allocation3 + $0x110] sm:$0xff]
    %v250 = vld [vmem:[#allocation3 + $0x118] sm:$0xff]
    %v251 = vld [vmem:[#allocation3 + $0x120] sm:$0xff]
    %v252 = vld [vmem:[#allocation3 + $0x128] sm:$0xff]
    %v253 = vld [vmem:[#allocation3 + $0x130] sm:$0xff]
    %v254 = vld [vmem:[#allocation3 + $0x138] sm:$0xff]
    %v255 = vld [vmem:[#allocation3 + $0x140] sm:$0xff]
    %v256 = vld [vmem:[#allocation3 + $0x148] sm:$0xff]
    %v257 = vld [vmem:[#allocation3 + $0x150] sm:$0xff]
    %v258 = vld [vmem:[#allocation3 + $0x158] sm:$0xff]
    %v259 = vld [vmem:[#allocation3 + $0x160] sm:$0xff]
    %v260 = vld [vmem:[#allocation3 + $0x168] sm:$0xff]
    %v261 = vld [vmem:[#allocation3 + $0x170] sm:$0xff]
    %v262 = vld [vmem:[#allocation3 + $0x178] sm:$0xff]
    %v263 = vld [vmem:[#allocation3 + $0x180] sm:$0xff]
    %v264 = vld [vmem:[#allocation3 + $0x188] sm:$0xff]
    %v265 = vld [vmem:[#allocation3 + $0x190] sm:$0xff]
    %v266 = vld [vmem:[#allocation3 + $0x198] sm:$0xff]
    %v267 = vld [vmem:[#allocation3 + $0x1a0] sm:$0xff]
    %v268 = vld [vmem:[#allocation3 + $0x1a8] sm:$0xff]
    %v269 = vld [vmem:[#allocation3 + $0x1b0] sm:$0xff]
    %v270 = vld [vmem:[#allocation3 + $0x1b8] sm:$0xff]
    %v271 = vld [vmem:[#allocation3 + $0x1c0] sm:$0xff]
    %v272 = vld [vmem:[#allocation3 + $0x1c8] sm:$0xff]
    %v273 = vld [vmem:[#allocation3 + $0x1d0] sm:$0xff]
    %v274 = vld [vmem:[#allocation3 + $0x1d8] sm:$0xff]
    %v275 = vld [vmem:[#allocation3 + $0x1e0] sm:$0xff]
    %v276 = vld [vmem:[#allocation3 + $0x1e8] sm:$0xff]
    %v277 = vld [vmem:[#allocation3 + $0x1f0] sm:$0xff]
    %v278 = vld [vmem:[#allocation3 + $0x1f8] sm:$0xff]
    %v279 = vld [vmem:[#allocation5] sm:$0x3]
    %v281 = vlaneseq
    %v282 = vshrl.u32 %v281, 7
    %v283 = vsub.s32 0, %v282
    %v284 = vrot.slane %v279, %v283
    %v285 = vlaneseq
    %v286 = vshrl.u32 %v285, 7
    %v287 = vsub.s32 1, %v286
    %v288 = vrot.slane %v279, %v287
    %291 = vmatprep.subr.mxu0 %v246
    %292 = vmatpush1.msra.mxu0 %v245
    %293 = vmatprep.subr.mxu0 %v244
    %294 = vmatpush1.msra.mxu0 %v243
    %295 = vmatprep.subr.mxu0 %v242
    %296 = vmatpush1.msra.mxu0 %v241
    %297 = vmatprep.subr.mxu0 %v240
    %298 = vmatpush1.msra.mxu0 %v239
    %299 = vmatprep.subr.mxu0 %v238
    %300 = vmatpush1.msra.mxu0 %v237
    %301 = vmatprep.subr.mxu0 %v236
    %302 = vmatpush1.msra.mxu0 %v235
    %303 = vmatprep.subr.mxu0 %v234
    %304 = vmatpush1.msra.mxu0 %v233
    %305 = vmatprep.subr.mxu0 %v232
    %306 = vmatpush1.msra.mxu0 %v231
    %307 = vmatprep.subr.mxu0 %v230
    %308 = vmatpush1.msra.mxu0 %v229
    %309 = vmatprep.subr.mxu0 %v228
    %310 = vmatpush1.msra.mxu0 %v227
    %311 = vmatprep.subr.mxu0 %v226
    %312 = vmatpush1.msra.mxu0 %v225
    %313 = vmatprep.subr.mxu0 %v224
    %314 = vmatpush1.msra.mxu0 %v223
    %315 = vmatprep.subr.mxu0 %v222
    %316 = vmatpush1.msra.mxu0 %v221
    %317 = vmatprep.subr.mxu0 %v220
    %318 = vmatpush1.msra.mxu0 %v219
    %319 = vmatprep.subr.mxu0 %v218
    %320 = vmatpush1.msra.mxu0 %v217
    %321 = vmatprep.subr.mxu0 %v216
    %322 = vmatpush1.msra.mxu0 %v215
    %323 = vmatprep.subr.mxu0 %v278
    %324 = vmatpush2.msra.mxu0 %v277
    %325 = vmatprep.subr.mxu0 %v276
    %326 = vmatpush2.msra.mxu0 %v275
    %327 = vmatprep.subr.mxu0 %v274
    %328 = vmatpush2.msra.mxu0 %v273
    %329 = vmatprep.subr.mxu0 %v272
    %330 = vmatpush2.msra.mxu0 %v271
    %331 = vmatprep.subr.mxu0 %v270
    %332 = vmatpush2.msra.mxu0 %v269
    %333 = vmatprep.subr.mxu0 %v268
    %334 = vmatpush2.msra.mxu0 %v267
    %335 = vmatprep.subr.mxu0 %v266
    %336 = vmatpush2.msra.mxu0 %v265
    %337 = vmatprep.subr.mxu0 %v264
    %338 = vmatpush2.msra.mxu0 %v263
    %339 = vmatprep.subr.mxu0 %v262
    %340 = vmatpush2.msra.mxu0 %v261
    %341 = vmatprep.subr.mxu0 %v260
    %342 = vmatpush2.msra.mxu0 %v259
    %343 = vmatprep.subr.mxu0 %v258
    %344 = vmatpush2.msra.mxu0 %v257
    %345 = vmatprep.subr.mxu0 %v256
    %346 = vmatpush2.msra.mxu0 %v255
    %347 = vmatprep.subr.mxu0 %v254
    %348 = vmatpush2.msra.mxu0 %v253
    %349 = vmatprep.subr.mxu0 %v252
    %350 = vmatpush2.msra.mxu0 %v251
    %351 = vmatprep.subr.mxu0 %v250
    %352 = vmatpush2.msra.mxu0 %v249
    %353 = vmatprep.subr.mxu0 %v248
    %354 = vmatpush2.msra.mxu0 %v247
    %355 = vmatprep.mubr.f32.mxu0 %v212
    %356 = vmatmul.mubr.f32.gmra.mxu0 %v211
    %v357 = vpop.f32.mrf.mxu0
    %v358 = vadd.f32 %v284, %v357
    %v359 = vpop.f32.mrf.mxu0
    %v360 = vadd.f32 %v288, %v359
    %361 = vmatprep.mubr.f32.mxu0 %v214
    %362 = vmatmul.mubr.f32.gmra.mxu0 %v213
    %v363 = vpop.f32.mrf.mxu0
    %v364 = vadd.f32 %v284, %v363
    %v365 = vpop.f32.mrf.mxu0
    %v366 = vadd.f32 %v288, %v365
    %367 = vdwg.mxu0
    %v368 = vadd.f32 %v209, %v358
    %v369 = vadd.f32 %v210, %v360
    %v370 = vadd.f32 %v209, %v364
    %v371 = vadd.f32 %v210, %v366
    %v372 = vld [vmem:[#allocation7] sm:$0x3]
    %v373 = vld [vmem:[#allocation8] sm:$0x3]
    %v374 = vadd.f32 %v368, %v369
    %375 = vadd.xlane.f32.xlu0 %v374
    %v376 = vpop.xlane.xlu0 %375
    %v377 = vadd.f32 %v370, %v371
    %378 = vadd.xlane.f32.xlu0 %v377
    %v379 = vpop.xlane.xlu0 %378
    %v380 = vrcp.pop 256.0
    %v381 = vmul.f32 %v376, %v380
    %v382 = vmul.f32 %v379, %v380
    %v383 = vsub.f32 %v368, %v381
    %v384 = vsub.f32 %v369, %v381
    %v385 = vsub.f32 %v370, %v382
    %v386 = vsub.f32 %v371, %v382
    %v387 = vmul.f32 %v383, %v383
    %v388 = vmul.f32 %v384, %v384
    %v389 = vmul.f32 %v385, %v385
    %v390 = vmul.f32 %v386, %v386
    %v391 = vadd.f32 %v387, %v388
    %392 = vadd.xlane.f32.xlu0 %v391
    %v393 = vpop.xlane.xlu0 %392
    %v394 = vadd.f32 %v389, %v390
    %395 = vadd.xlane.f32.xlu0 %v394
    %v396 = vpop.xlane.xlu0 %395
    %v397 = vmul.f32 %v393, %v380
    %v398 = vmul.f32 %v396, %v380
    %v399 = vadd.f32 %v397, 1e-05
    %v400 = vadd.f32 %v398, 1e-05
    %v401 = vrsqrt.pop %v399
    %v402 = vrsqrt.pop %v400
    %v403 = vmul.f32 %v383, %v401
    %v404 = vmul.f32 %v384, %v401
    %v405 = vmul.f32 %v385, %v402
    %v406 = vmul.f32 %v386, %v402
    %v408 = vlaneseq
    %v409 = vshrl.u32 %v408, 7
    %v410 = vsub.s32 0, %v409
    %v411 = vrot.slane %v372, %v410
    %v412 = vlaneseq
    %v413 = vshrl.u32 %v412, 7
    %v414 = vsub.s32 1, %v413
    %v415 = vrot.slane %v372, %v414
    %v418 = vmul.f32 %v403, %v411
    %v419 = vmul.f32 %v404, %v415
    %v420 = vmul.f32 %v405, %v411
    %v421 = vmul.f32 %v406, %v415
    %v423 = vlaneseq
    %v424 = vshrl.u32 %v423, 7
    %v425 = vsub.s32 0, %v424
    %v426 = vrot.slane %v373, %v425
    %v427 = vlaneseq
    %v428 = vshrl.u32 %v427, 7
    %v429 = vsub.s32 1, %v428
    %v430 = vrot.slane %v373, %v429
    %v433 = vadd.f32 %v418, %v426
    %v434 = vadd.f32 %v419, %v430
    %v435 = vadd.f32 %v420, %v426
    %v436 = vadd.f32 %v421, %v430
    %s437 = scalar_lea.vmem [#allocation3], 512
    %v438 = vld [vmem:[%s437] sm:$0xff]
    %v439 = vld [vmem:[%s437 + $0x8] sm:$0xff]
    %v440 = vld [vmem:[%s437 + $0x10] sm:$0xff]
    %v441 = vld [vmem:[%s437 + $0x18] sm:$0xff]
    %v442 = vld [vmem:[%s437 + $0x20] sm:$0xff]
    %v443 = vld [vmem:[%s437 + $0x28] sm:$0xff]
    %v444 = vld [vmem:[%s437 + $0x30] sm:$0xff]
    %v445 = vld [vmem:[%s437 + $0x38] sm:$0xff]
    %v446 = vld [vmem:[%s437 + $0x40] sm:$0xff]
    %v447 = vld [vmem:[%s437 + $0x48] sm:$0xff]
    %v448 = vld [vmem:[%s437 + $0x50] sm:$0xff]
    %v449 = vld [vmem:[%s437 + $0x58] sm:$0xff]
    %v450 = vld [vmem:[%s437 + $0x60] sm:$0xff]
    %v451 = vld [vmem:[%s437 + $0x68] sm:$0xff]
    %v452 = vld [vmem:[%s437 + $0x70] sm:$0xff]
    %v453 = vld [vmem:[%s437 + $0x78] sm:$0xff]
    %v454 = vld [vmem:[%s437 + $0x80] sm:$0xff]
    %v455 = vld [vmem:[%s437 + $0x88] sm:$0xff]
    %v456 = vld [vmem:[%s437 + $0x90] sm:$0xff]
    %v457 = vld [vmem:[%s437 + $0x98] sm:$0xff]
    %v458 = vld [vmem:[%s437 + $0xa0] sm:$0xff]
    %v459 = vld [vmem:[%s437 + $0xa8] sm:$0xff]
    %v460 = vld [vmem:[%s437 + $0xb0] sm:$0xff]
    %v461 = vld [vmem:[%s437 + $0xb8] sm:$0xff]
    %v462 = vld [vmem:[%s437 + $0xc0] sm:$0xff]
    %v463 = vld [vmem:[%s437 + $0xc8] sm:$0xff]
    %v464 = vld [vmem:[%s437 + $0xd0] sm:$0xff]
    %v465 = vld [vmem:[%s437 + $0xd8] sm:$0xff]
    %v466 = vld [vmem:[%s437 + $0xe0] sm:$0xff]
    %v467 = vld [vmem:[%s437 + $0xe8] sm:$0xff]
    %v468 = vld [vmem:[%s437 + $0xf0] sm:$0xff]
    %v469 = vld [vmem:[%s437 + $0xf8] sm:$0xff]
    %v470 = vld [vmem:[%s437 + $0x100] sm:$0xff]
    %v471 = vld [vmem:[%s437 + $0x108] sm:$0xff]
    %v472 = vld [vmem:[%s437 + $0x110] sm:$0xff]
    %v473 = vld [vmem:[%s437 + $0x118] sm:$0xff]
    %v474 = vld [vmem:[%s437 + $0x120] sm:$0xff]
    %v475 = vld [vmem:[%s437 + $0x128] sm:$0xff]
    %v476 = vld [vmem:[%s437 + $0x130] sm:$0xff]
    %v477 = vld [vmem:[%s437 + $0x138] sm:$0xff]
    %v478 = vld [vmem:[%s437 + $0x140] sm:$0xff]
    %v479 = vld [vmem:[%s437 + $0x148] sm:$0xff]
    %v480 = vld [vmem:[%s437 + $0x150] sm:$0xff]
    %v481 = vld [vmem:[%s437 + $0x158] sm:$0xff]
    %v482 = vld [vmem:[%s437 + $0x160] sm:$0xff]
    %v483 = vld [vmem:[%s437 + $0x168] sm:$0xff]
    %v484 = vld [vmem:[%s437 + $0x170] sm:$0xff]
    %v485 = vld [vmem:[%s437 + $0x178] sm:$0xff]
    %v486 = vld [vmem:[%s437 + $0x180] sm:$0xff]
    %v487 = vld [vmem:[%s437 + $0x188] sm:$0xff]
    %v488 = vld [vmem:[%s437 + $0x190] sm:$0xff]
    %v489 = vld [vmem:[%s437 + $0x198] sm:$0xff]
    %v490 = vld [vmem:[%s437 + $0x1a0] sm:$0xff]
    %v491 = vld [vmem:[%s437 + $0x1a8] sm:$0xff]
    %v492 = vld [vmem:[%s437 + $0x1b0] sm:$0xff]
    %v493 = vld [vmem:[%s437 + $0x1b8] sm:$0xff]
    %v494 = vld [vmem:[%s437 + $0x1c0] sm:$0xff]
    %v495 = vld [vmem:[%s437 + $0x1c8] sm:$0xff]
    %v496 = vld [vmem:[%s437 + $0x1d0] sm:$0xff]
    %v497 = vld [vmem:[%s437 + $0x1d8] sm:$0xff]
    %v498 = vld [vmem:[%s437 + $0x1e0] sm:$0xff]
    %v499 = vld [vmem:[%s437 + $0x1e8] sm:$0xff]
    %v500 = vld [vmem:[%s437 + $0x1f0] sm:$0xff]
    %v501 = vld [vmem:[%s437 + $0x1f8] sm:$0xff]
    %s502 = scalar_lea.vmem [#allocation5], 2
    %v503 = vld [vmem:[%s502] sm:$0x3]
    %v505 = vlaneseq
    %v506 = vshrl.u32 %v505, 7
    %v507 = vsub.s32 0, %v506
    %v508 = vrot.slane %v503, %v507
    %v509 = vlaneseq
    %v510 = vshrl.u32 %v509, 7
    %v511 = vsub.s32 1, %v510
    %v512 = vrot.slane %v503, %v511
    %515 = vmatprep.subr.mxu0 %v469
    %516 = vmatpush1.msra.mxu0 %v468
    %517 = vmatprep.subr.mxu0 %v467
    %518 = vmatpush1.msra.mxu0 %v466
    %519 = vmatprep.subr.mxu0 %v465
    %520 = vmatpush1.msra.mxu0 %v464
    %521 = vmatprep.subr.mxu0 %v463
    %522 = vmatpush1.msra.mxu0 %v462
    %523 = vmatprep.subr.mxu0 %v461
    %524 = vmatpush1.msra.mxu0 %v460
    %525 = vmatprep.subr.mxu0 %v459
    %526 = vmatpush1.msra.mxu0 %v458
    %527 = vmatprep.subr.mxu0 %v457
    %528 = vmatpush1.msra.mxu0 %v456
    %529 = vmatprep.subr.mxu0 %v455
    %530 = vmatpush1.msra.mxu0 %v454
    %531 = vmatprep.subr.mxu0 %v453
    %532 = vmatpush1.msra.mxu0 %v452
    %533 = vmatprep.subr.mxu0 %v451
    %534 = vmatpush1.msra.mxu0 %v450
    %535 = vmatprep.subr.mxu0 %v449
    %536 = vmatpush1.msra.mxu0 %v448
    %537 = vmatprep.subr.mxu0 %v447
    %538 = vmatpush1.msra.mxu0 %v446
    %539 = vmatprep.subr.mxu0 %v445
    %540 = vmatpush1.msra.mxu0 %v444
    %541 = vmatprep.subr.mxu0 %v443
    %542 = vmatpush1.msra.mxu0 %v442
    %543 = vmatprep.subr.mxu0 %v441
    %544 = vmatpush1.msra.mxu0 %v440
    %545 = vmatprep.subr.mxu0 %v439
    %546 = vmatpush1.msra.mxu0 %v438
    %547 = vmatprep.subr.mxu0 %v501
    %548 = vmatpush2.msra.mxu0 %v500
    %549 = vmatprep.subr.mxu0 %v499
    %550 = vmatpush2.msra.mxu0 %v498
    %551 = vmatprep.subr.mxu0 %v497
    %552 = vmatpush2.msra.mxu0 %v496
    %553 = vmatprep.subr.mxu0 %v495
    %554 = vmatpush2.msra.mxu0 %v494
    %555 = vmatprep.subr.mxu0 %v493
    %556 = vmatpush2.msra.mxu0 %v492
    %557 = vmatprep.subr.mxu0 %v491
    %558 = vmatpush2.msra.mxu0 %v490
    %559 = vmatprep.subr.mxu0 %v489
    %560 = vmatpush2.msra.mxu0 %v488
    %561 = vmatprep.subr.mxu0 %v487
    %562 = vmatpush2.msra.mxu0 %v486
    %563 = vmatprep.subr.mxu0 %v485
    %564 = vmatpush2.msra.mxu0 %v484
    %565 = vmatprep.subr.mxu0 %v483
    %566 = vmatpush2.msra.mxu0 %v482
    %567 = vmatprep.subr.mxu0 %v481
    %568 = vmatpush2.msra.mxu0 %v480
    %569 = vmatprep.subr.mxu0 %v479
    %570 = vmatpush2.msra.mxu0 %v478
    %571 = vmatprep.subr.mxu0 %v477
    %572 = vmatpush2.msra.mxu0 %v476
    %573 = vmatprep.subr.mxu0 %v475
    %574 = vmatpush2.msra.mxu0 %v474
    %575 = vmatprep.subr.mxu0 %v473
    %576 = vmatpush2.msra.mxu0 %v472
    %577 = vmatprep.subr.mxu0 %v471
    %578 = vmatpush2.msra.mxu0 %v470
    %579 = vmatprep.mubr.f32.mxu0 %v210
    %580 = vmatmul.mubr.f32.gmra.mxu0 %v209
    %v581 = vpop.f32.mrf.mxu0
    %v582 = vadd.f32 %v508, %v581
    %v583 = vpop.f32.mrf.mxu0
    %v584 = vadd.f32 %v512, %v583
    %585 = vdwg.mxu0
    %v586 = vadd.f32 %v211, %v582
    %v587 = vadd.f32 %v212, %v584
    %v588 = vadd.f32 %v213, %v582
    %v589 = vadd.f32 %v214, %v584
    %s590 = scalar_lea.vmem [#allocation7], 2
    %v591 = vld [vmem:[%s590] sm:$0x3]
    %s592 = scalar_lea.vmem [#allocation8], 2
    %v593 = vld [vmem:[%s592] sm:$0x3]
    %v594 = vadd.f32 %v586, %v587
    %595 = vadd.xlane.f32.xlu0 %v594
    %v596 = vpop.xlane.xlu0 %595
    %v597 = vadd.f32 %v588, %v589
    %598 = vadd.xlane.f32.xlu0 %v597
    %v599 = vpop.xlane.xlu0 %598
    %v600 = vmul.f32 %v596, %v380
    %v601 = vmul.f32 %v599, %v380
    %v602 = vsub.f32 %v586, %v600
    %v603 = vsub.f32 %v587, %v600
    %v604 = vsub.f32 %v588, %v601
    %v605 = vsub.f32 %v589, %v601
    %v606 = vmul.f32 %v602, %v602
    %v607 = vmul.f32 %v603, %v603
    %v608 = vmul.f32 %v604, %v604
    %v609 = vmul.f32 %v605, %v605
    %v610 = vadd.f32 %v606, %v607
    %611 = vadd.xlane.f32.xlu0 %v610
    %v612 = vpop.xlane.xlu0 %611
    %v613 = vadd.f32 %v608, %v609
    %614 = vadd.xlane.f32.xlu0 %v613
    %v615 = vpop.xlane.xlu0 %614
    %v616 = vmul.f32 %v612, %v380
    %v617 = vmul.f32 %v615, %v380
    %v618 = vadd.f32 %v616, 1e-05
    %v619 = vadd.f32 %v617, 1e-05
    %v620 = vrsqrt.pop %v618
    %v621 = vrsqrt.pop %v619
    %v622 = vmul.f32 %v602, %v620
    %v623 = vmul.f32 %v603, %v620
    %v624 = vmul.f32 %v604, %v621
    %v625 = vmul.f32 %v605, %v621
    %v627 = vlaneseq
    %v628 = vshrl.u32 %v627, 7
    %v629 = vsub.s32 0, %v628
    %v630 = vrot.slane %v591, %v629
    %v631 = vlaneseq
    %v632 = vshrl.u32 %v631, 7
    %v633 = vsub.s32 1, %v632
    %v634 = vrot.slane %v591, %v633
    %v637 = vmul.f32 %v622, %v630
    %v638 = vmul.f32 %v623, %v634
    %v639 = vmul.f32 %v624, %v630
    %v640 = vmul.f32 %v625, %v634
    %v642 = vlaneseq
    %v643 = vshrl.u32 %v642, 7
    %v644 = vsub.s32 0, %v643
    %v645 = vrot.slane %v593, %v644
    %v646 = vlaneseq
    %v647 = vshrl.u32 %v646, 7
    %v648 = vsub.s32 1, %v647
    %v649 = vrot.slane %v593, %v648
    %v652 = vadd.f32 %v637, %v645
    %v653 = vadd.f32 %v638, %v649
    %v654 = vadd.f32 %v639, %v645
    %v655 = vadd.f32 %v640, %v649
    %s656 = scalar_lea.vmem [#allocation3], 1024
    %v657 = vld [vmem:[%s656] sm:$0xff]
    %v658 = vld [vmem:[%s656 + $0x8] sm:$0xff]
    %v659 = vld [vmem:[%s656 + $0x10] sm:$0xff]
    %v660 = vld [vmem:[%s656 + $0x18] sm:$0xff]
    %v661 = vld [vmem:[%s656 + $0x20] sm:$0xff]
    %v662 = vld [vmem:[%s656 + $0x28] sm:$0xff]
    %v663 = vld [vmem:[%s656 + $0x30] sm:$0xff]
    %v664 = vld [vmem:[%s656 + $0x38] sm:$0xff]
    %v665 = vld [vmem:[%s656 + $0x40] sm:$0xff]
    %v666 = vld [vmem:[%s656 + $0x48] sm:$0xff]
    %v667 = vld [vmem:[%s656 + $0x50] sm:$0xff]
    %v668 = vld [vmem:[%s656 + $0x58] sm:$0xff]
    %v669 = vld [vmem:[%s656 + $0x60] sm:$0xff]
    %v670 = vld [vmem:[%s656 + $0x68] sm:$0xff]
    %v671 = vld [vmem:[%s656 + $0x70] sm:$0xff]
    %v672 = vld [vmem:[%s656 + $0x78] sm:$0xff]
    %v673 = vld [vmem:[%s656 + $0x80] sm:$0xff]
    %v674 = vld [vmem:[%s656 + $0x88] sm:$0xff]
    %v675 = vld [vmem:[%s656 + $0x90] sm:$0xff]
    %v676 = vld [vmem:[%s656 + $0x98] sm:$0xff]
    %v677 = vld [vmem:[%s656 + $0xa0] sm:$0xff]
    %v678 = vld [vmem:[%s656 + $0xa8] sm:$0xff]
    %v679 = vld [vmem:[%s656 + $0xb0] sm:$0xff]
    %v680 = vld [vmem:[%s656 + $0xb8] sm:$0xff]
    %v681 = vld [vmem:[%s656 + $0xc0] sm:$0xff]
    %v682 = vld [vmem:[%s656 + $0xc8] sm:$0xff]
    %v683 = vld [vmem:[%s656 + $0xd0] sm:$0xff]
    %v684 = vld [vmem:[%s656 + $0xd8] sm:$0xff]
    %v685 = vld [vmem:[%s656 + $0xe0] sm:$0xff]
    %v686 = vld [vmem:[%s656 + $0xe8] sm:$0xff]
    %v687 = vld [vmem:[%s656 + $0xf0] sm:$0xff]
    %v688 = vld [vmem:[%s656 + $0xf8] sm:$0xff]
    %v689 = vld [vmem:[%s656 + $0x100] sm:$0xff]
    %v690 = vld [vmem:[%s656 + $0x108] sm:$0xff]
    %v691 = vld [vmem:[%s656 + $0x110] sm:$0xff]
    %v692 = vld [vmem:[%s656 + $0x118] sm:$0xff]
    %v693 = vld [vmem:[%s656 + $0x120] sm:$0xff]
    %v694 = vld [vmem:[%s656 + $0x128] sm:$0xff]
    %v695 = vld [vmem:[%s656 + $0x130] sm:$0xff]
    %v696 = vld [vmem:[%s656 + $0x138] sm:$0xff]
    %v697 = vld [vmem:[%s656 + $0x140] sm:$0xff]
    %v698 = vld [vmem:[%s656 + $0x148] sm:$0xff]
    %v699 = vld [vmem:[%s656 + $0x150] sm:$0xff]
    %v700 = vld [vmem:[%s656 + $0x158] sm:$0xff]
    %v701 = vld [vmem:[%s656 + $0x160] sm:$0xff]
    %v702 = vld [vmem:[%s656 + $0x168] sm:$0xff]
    %v703 = vld [vmem:[%s656 + $0x170] sm:$0xff]
    %v704 = vld [vmem:[%s656 + $0x178] sm:$0xff]
    %v705 = vld [vmem:[%s656 + $0x180] sm:$0xff]
    %v706 = vld [vmem:[%s656 + $0x188] sm:$0xff]
    %v707 = vld [vmem:[%s656 + $0x190] sm:$0xff]
    %v708 = vld [vmem:[%s656 + $0x198] sm:$0xff]
    %v709 = vld [vmem:[%s656 + $0x1a0] sm:$0xff]
    %v710 = vld [vmem:[%s656 + $0x1a8] sm:$0xff]
    %v711 = vld [vmem:[%s656 + $0x1b0] sm:$0xff]
    %v712 = vld [vmem:[%s656 + $0x1b8] sm:$0xff]
    %v713 = vld [vmem:[%s656 + $0x1c0] sm:$0xff]
    %v714 = vld [vmem:[%s656 + $0x1c8] sm:$0xff]
    %v715 = vld [vmem:[%s656 + $0x1d0] sm:$0xff]
    %v716 = vld [vmem:[%s656 + $0x1d8] sm:$0xff]
    %v717 = vld [vmem:[%s656 + $0x1e0] sm:$0xff]
    %v718 = vld [vmem:[%s656 + $0x1e8] sm:$0xff]
    %v719 = vld [vmem:[%s656 + $0x1f0] sm:$0xff]
    %v720 = vld [vmem:[%s656 + $0x1f8] sm:$0xff]
    %s721 = scalar_lea.vmem [#allocation5], 4
    %v722 = vld [vmem:[%s721] sm:$0x3]
    %v724 = vlaneseq
    %v725 = vshrl.u32 %v724, 7
    %v726 = vsub.s32 0, %v725
    %v727 = vrot.slane %v722, %v726
    %v728 = vlaneseq
    %v729 = vshrl.u32 %v728, 7
    %v730 = vsub.s32 1, %v729
    %v731 = vrot.slane %v722, %v730
    %734 = vmatprep.subr.mxu0 %v688
    %735 = vmatpush1.msra.mxu0 %v687
    %736 = vmatprep.subr.mxu0 %v686
    %737 = vmatpush1.msra.mxu0 %v685
    %738 = vmatprep.subr.mxu0 %v684
    %739 = vmatpush1.msra.mxu0 %v683
    %740 = vmatprep.subr.mxu0 %v682
    %741 = vmatpush1.msra.mxu0 %v681
    %742 = vmatprep.subr.mxu0 %v680
    %743 = vmatpush1.msra.mxu0 %v679
    %744 = vmatprep.subr.mxu0 %v678
    %745 = vmatpush1.msra.mxu0 %v677
    %746 = vmatprep.subr.mxu0 %v676
    %747 = vmatpush1.msra.mxu0 %v675
    %748 = vmatprep.subr.mxu0 %v674
    %749 = vmatpush1.msra.mxu0 %v673
    %750 = vmatprep.subr.mxu0 %v672
    %751 = vmatpush1.msra.mxu0 %v671
    %752 = vmatprep.subr.mxu0 %v670
    %753 = vmatpush1.msra.mxu0 %v669
    %754 = vmatprep.subr.mxu0 %v668
    %755 = vmatpush1.msra.mxu0 %v667
    %756 = vmatprep.subr.mxu0 %v666
    %757 = vmatpush1.msra.mxu0 %v665
    %758 = vmatprep.subr.mxu0 %v664
    %759 = vmatpush1.msra.mxu0 %v663
    %760 = vmatprep.subr.mxu0 %v662
    %761 = vmatpush1.msra.mxu0 %v661
    %762 = vmatprep.subr.mxu0 %v660
    %763 = vmatpush1.msra.mxu0 %v659
    %764 = vmatprep.subr.mxu0 %v658
    %765 = vmatpush1.msra.mxu0 %v657
    %766 = vmatprep.subr.mxu0 %v720
    %767 = vmatpush2.msra.mxu0 %v719
    %768 = vmatprep.subr.mxu0 %v718
    %769 = vmatpush2.msra.mxu0 %v717
    %770 = vmatprep.subr.mxu0 %v716
    %771 = vmatpush2.msra.mxu0 %v715
    %772 = vmatprep.subr.mxu0 %v714
    %773 = vmatpush2.msra.mxu0 %v713
    %774 = vmatprep.subr.mxu0 %v712
    %775 = vmatpush2.msra.mxu0 %v711
    %776 = vmatprep.subr.mxu0 %v710
    %777 = vmatpush2.msra.mxu0 %v709
    %778 = vmatprep.subr.mxu0 %v708
    %779 = vmatpush2.msra.mxu0 %v707
    %780 = vmatprep.subr.mxu0 %v706
    %781 = vmatpush2.msra.mxu0 %v705
    %782 = vmatprep.subr.mxu0 %v704
    %783 = vmatpush2.msra.mxu0 %v703
    %784 = vmatprep.subr.mxu0 %v702
    %785 = vmatpush2.msra.mxu0 %v701
    %786 = vmatprep.subr.mxu0 %v700
    %787 = vmatpush2.msra.mxu0 %v699
    %788 = vmatprep.subr.mxu0 %v698
    %789 = vmatpush2.msra.mxu0 %v697
    %790 = vmatprep.subr.mxu0 %v696
    %791 = vmatpush2.msra.mxu0 %v695
    %792 = vmatprep.subr.mxu0 %v694
    %793 = vmatpush2.msra.mxu0 %v693
    %794 = vmatprep.subr.mxu0 %v692
    %795 = vmatpush2.msra.mxu0 %v691
    %796 = vmatprep.subr.mxu0 %v690
    %797 = vmatpush2.msra.mxu0 %v689
    %798 = vmatprep.mubr.f32.mxu0 %v434
    %799 = vmatmul.mubr.f32.gmra.mxu0 %v433
    %v800 = vpop.f32.mrf.mxu0
    %v801 = vadd.f32 %v727, %v800
    %v802 = vpop.f32.mrf.mxu0
    %v803 = vadd.f32 %v731, %v802
    %804 = vmatprep.mubr.f32.mxu0 %v436
    %805 = vmatmul.mubr.f32.gmra.mxu0 %v435
    %v806 = vpop.f32.mrf.mxu0
    %v807 = vadd.f32 %v727, %v806
    %v808 = vpop.f32.mrf.mxu0
    %v809 = vadd.f32 %v731, %v808
    %810 = vdwg.mxu0
    %s811 = scalar_lea.vmem [#allocation7], 4
    %v812 = vld [vmem:[%s811] sm:$0x3]
    %s813 = scalar_lea.vmem [#allocation8], 4
    %v814 = vld [vmem:[%s813] sm:$0x3]
    %v815 = vadd.f32 %v801, %v803
    %816 = vadd.xlane.f32.xlu0 %v815
    %v817 = vpop.xlane.xlu0 %816
    %v818 = vadd.f32 %v807, %v809
    %819 = vadd.xlane.f32.xlu0 %v818
    %v820 = vpop.xlane.xlu0 %819
    %v821 = vmul.f32 %v817, %v380
    %v822 = vmul.f32 %v820, %v380
    %v823 = vsub.f32 %v801, %v821
    %v824 = vsub.f32 %v803, %v821
    %v825 = vsub.f32 %v807, %v822
    %v826 = vsub.f32 %v809, %v822
    %v827 = vmul.f32 %v823, %v823
    %v828 = vmul.f32 %v824, %v824
    %v829 = vmul.f32 %v825, %v825
    %v830 = vmul.f32 %v826, %v826
    %v831 = vadd.f32 %v827, %v828
    %832 = vadd.xlane.f32.xlu0 %v831
    %v833 = vpop.xlane.xlu0 %832
    %v834 = vadd.f32 %v829, %v830
    %835 = vadd.xlane.f32.xlu0 %v834
    %v836 = vpop.xlane.xlu0 %835
    %v837 = vmul.f32 %v833, %v380
    %v838 = vmul.f32 %v836, %v380
    %v839 = vadd.f32 %v837, 1e-05
    %v840 = vadd.f32 %v838, 1e-05
    %v841 = vrsqrt.pop %v839
    %v842 = vrsqrt.pop %v840
    %v843 = vmul.f32 %v823, %v841
    %v844 = vmul.f32 %v824, %v841
    %v845 = vmul.f32 %v825, %v842
    %v846 = vmul.f32 %v826, %v842
    %v848 = vlaneseq
    %v849 = vshrl.u32 %v848, 7
    %v850 = vsub.s32 0, %v849
    %v851 = vrot.slane %v812, %v850
    %v852 = vlaneseq
    %v853 = vshrl.u32 %v852, 7
    %v854 = vsub.s32 1, %v853
    %v855 = vrot.slane %v812, %v854
    %v858 = vmul.f32 %v843, %v851
    %v859 = vmul.f32 %v844, %v855
    %v860 = vmul.f32 %v845, %v851
    %v861 = vmul.f32 %v846, %v855
    %v863 = vlaneseq
    %v864 = vshrl.u32 %v863, 7
    %v865 = vsub.s32 0, %v864
    %v866 = vrot.slane %v814, %v865
    %v867 = vlaneseq
    %v868 = vshrl.u32 %v867, 7
    %v869 = vsub.s32 1, %v868
    %v870 = vrot.slane %v814, %v869
    %v873 = vadd.f32 %v858, %v866
    %v874 = vadd.f32 %v859, %v870
    %v875 = vadd.f32 %v860, %v866
    %v876 = vadd.f32 %v861, %v870
    %s877 = scalar_lea.vmem [#allocation3], 1536
    %v878 = vld [vmem:[%s877] sm:$0xff]
    %v879 = vld [vmem:[%s877 + $0x8] sm:$0xff]
    %v880 = vld [vmem:[%s877 + $0x10] sm:$0xff]
    %v881 = vld [vmem:[%s877 + $0x18] sm:$0xff]
    %v882 = vld [vmem:[%s877 + $0x20] sm:$0xff]
    %v883 = vld [vmem:[%s877 + $0x28] sm:$0xff]
    %v884 = vld [vmem:[%s877 + $0x30] sm:$0xff]
    %v885 = vld [vmem:[%s877 + $0x38] sm:$0xff]
    %v886 = vld [vmem:[%s877 + $0x40] sm:$0xff]
    %v887 = vld [vmem:[%s877 + $0x48] sm:$0xff]
    %v888 = vld [vmem:[%s877 + $0x50] sm:$0xff]
    %v889 = vld [vmem:[%s877 + $0x58] sm:$0xff]
    %v890 = vld [vmem:[%s877 + $0x60] sm:$0xff]
    %v891 = vld [vmem:[%s877 + $0x68] sm:$0xff]
    %v892 = vld [vmem:[%s877 + $0x70] sm:$0xff]
    %v893 = vld [vmem:[%s877 + $0x78] sm:$0xff]
    %v894 = vld [vmem:[%s877 + $0x80] sm:$0xff]
    %v895 = vld [vmem:[%s877 + $0x88] sm:$0xff]
    %v896 = vld [vmem:[%s877 + $0x90] sm:$0xff]
    %v897 = vld [vmem:[%s877 + $0x98] sm:$0xff]
    %v898 = vld [vmem:[%s877 + $0xa0] sm:$0xff]
    %v899 = vld [vmem:[%s877 + $0xa8] sm:$0xff]
    %v900 = vld [vmem:[%s877 + $0xb0] sm:$0xff]
    %v901 = vld [vmem:[%s877 + $0xb8] sm:$0xff]
    %v902 = vld [vmem:[%s877 + $0xc0] sm:$0xff]
    %v903 = vld [vmem:[%s877 + $0xc8] sm:$0xff]
    %v904 = vld [vmem:[%s877 + $0xd0] sm:$0xff]
    %v905 = vld [vmem:[%s877 + $0xd8] sm:$0xff]
    %v906 = vld [vmem:[%s877 + $0xe0] sm:$0xff]
    %v907 = vld [vmem:[%s877 + $0xe8] sm:$0xff]
    %v908 = vld [vmem:[%s877 + $0xf0] sm:$0xff]
    %v909 = vld [vmem:[%s877 + $0xf8] sm:$0xff]
    %v910 = vld [vmem:[%s877 + $0x100] sm:$0xff]
    %v911 = vld [vmem:[%s877 + $0x108] sm:$0xff]
    %v912 = vld [vmem:[%s877 + $0x110] sm:$0xff]
    %v913 = vld [vmem:[%s877 + $0x118] sm:$0xff]
    %v914 = vld [vmem:[%s877 + $0x120] sm:$0xff]
    %v915 = vld [vmem:[%s877 + $0x128] sm:$0xff]
    %v916 = vld [vmem:[%s877 + $0x130] sm:$0xff]
    %v917 = vld [vmem:[%s877 + $0x138] sm:$0xff]
    %v918 = vld [vmem:[%s877 + $0x140] sm:$0xff]
    %v919 = vld [vmem:[%s877 + $0x148] sm:$0xff]
    %v920 = vld [vmem:[%s877 + $0x150] sm:$0xff]
    %v921 = vld [vmem:[%s877 + $0x158] sm:$0xff]
    %v922 = vld [vmem:[%s877 + $0x160] sm:$0xff]
    %v923 = vld [vmem:[%s877 + $0x168] sm:$0xff]
    %v924 = vld [vmem:[%s877 + $0x170] sm:$0xff]
    %v925 = vld [vmem:[%s877 + $0x178] sm:$0xff]
    %v926 = vld [vmem:[%s877 + $0x180] sm:$0xff]
    %v927 = vld [vmem:[%s877 + $0x188] sm:$0xff]
    %v928 = vld [vmem:[%s877 + $0x190] sm:$0xff]
    %v929 = vld [vmem:[%s877 + $0x198] sm:$0xff]
    %v930 = vld [vmem:[%s877 + $0x1a0] sm:$0xff]
    %v931 = vld [vmem:[%s877 + $0x1a8] sm:$0xff]
    %v932 = vld [vmem:[%s877 + $0x1b0] sm:$0xff]
    %v933 = vld [vmem:[%s877 + $0x1b8] sm:$0xff]
    %v934 = vld [vmem:[%s877 + $0x1c0] sm:$0xff]
    %v935 = vld [vmem:[%s877 + $0x1c8] sm:$0xff]
    %v936 = vld [vmem:[%s877 + $0x1d0] sm:$0xff]
    %v937 = vld [vmem:[%s877 + $0x1d8] sm:$0xff]
    %v938 = vld [vmem:[%s877 + $0x1e0] sm:$0xff]
    %v939 = vld [vmem:[%s877 + $0x1e8] sm:$0xff]
    %v940 = vld [vmem:[%s877 + $0x1f0] sm:$0xff]
    %v941 = vld [vmem:[%s877 + $0x1f8] sm:$0xff]
    %s942 = scalar_lea.vmem [#allocation5], 6
    %v943 = vld [vmem:[%s942] sm:$0x3]
    %v945 = vlaneseq
    %v946 = vshrl.u32 %v945, 7
    %v947 = vsub.s32 0, %v946
    %v948 = vrot.slane %v943, %v947
    %v949 = vlaneseq
    %v950 = vshrl.u32 %v949, 7
    %v951 = vsub.s32 1, %v950
    %v952 = vrot.slane %v943, %v951
    %955 = vmatprep.subr.mxu0 %v909
    %956 = vmatpush1.msra.mxu0 %v908
    %957 = vmatprep.subr.mxu0 %v907
    %958 = vmatpush1.msra.mxu0 %v906
    %959 = vmatprep.subr.mxu0 %v905
    %960 = vmatpush1.msra.mxu0 %v904
    %961 = vmatprep.subr.mxu0 %v903
    %962 = vmatpush1.msra.mxu0 %v902
    %963 = vmatprep.subr.mxu0 %v901
    %964 = vmatpush1.msra.mxu0 %v900
    %965 = vmatprep.subr.mxu0 %v899
    %966 = vmatpush1.msra.mxu0 %v898
    %967 = vmatprep.subr.mxu0 %v897
    %968 = vmatpush1.msra.mxu0 %v896
    %969 = vmatprep.subr.mxu0 %v895
    %970 = vmatpush1.msra.mxu0 %v894
    %971 = vmatprep.subr.mxu0 %v893
    %972 = vmatpush1.msra.mxu0 %v892
    %973 = vmatprep.subr.mxu0 %v891
    %974 = vmatpush1.msra.mxu0 %v890
    %975 = vmatprep.subr.mxu0 %v889
    %976 = vmatpush1.msra.mxu0 %v888
    %977 = vmatprep.subr.mxu0 %v887
    %978 = vmatpush1.msra.mxu0 %v886
    %979 = vmatprep.subr.mxu0 %v885
    %980 = vmatpush1.msra.mxu0 %v884
    %981 = vmatprep.subr.mxu0 %v883
    %982 = vmatpush1.msra.mxu0 %v882
    %983 = vmatprep.subr.mxu0 %v881
    %984 = vmatpush1.msra.mxu0 %v880
    %985 = vmatprep.subr.mxu0 %v879
    %986 = vmatpush1.msra.mxu0 %v878
    %987 = vmatprep.subr.mxu0 %v941
    %988 = vmatpush2.msra.mxu0 %v940
    %989 = vmatprep.subr.mxu0 %v939
    %990 = vmatpush2.msra.mxu0 %v938
    %991 = vmatprep.subr.mxu0 %v937
    %992 = vmatpush2.msra.mxu0 %v936
    %993 = vmatprep.subr.mxu0 %v935
    %994 = vmatpush2.msra.mxu0 %v934
    %995 = vmatprep.subr.mxu0 %v933
    %996 = vmatpush2.msra.mxu0 %v932
    %997 = vmatprep.subr.mxu0 %v931
    %998 = vmatpush2.msra.mxu0 %v930
    %999 = vmatprep.subr.mxu0 %v929
    %1000 = vmatpush2.msra.mxu0 %v928
    %1001 = vmatprep.subr.mxu0 %v927
    %1002 = vmatpush2.msra.mxu0 %v926
    %1003 = vmatprep.subr.mxu0 %v925
    %1004 = vmatpush2.msra.mxu0 %v924
    %1005 = vmatprep.subr.mxu0 %v923
    %1006 = vmatpush2.msra.mxu0 %v922
    %1007 = vmatprep.subr.mxu0 %v921
    %1008 = vmatpush2.msra.mxu0 %v920
    %1009 = vmatprep.subr.mxu0 %v919
    %1010 = vmatpush2.msra.mxu0 %v918
    %1011 = vmatprep.subr.mxu0 %v917
    %1012 = vmatpush2.msra.mxu0 %v916
    %1013 = vmatprep.subr.mxu0 %v915
    %1014 = vmatpush2.msra.mxu0 %v914
    %1015 = vmatprep.subr.mxu0 %v913
    %1016 = vmatpush2.msra.mxu0 %v912
    %1017 = vmatprep.subr.mxu0 %v911
    %1018 = vmatpush2.msra.mxu0 %v910
    %1019 = vmatprep.mubr.f32.mxu0 %v653
    %1020 = vmatmul.mubr.f32.gmra.mxu0 %v652
    %v1021 = vpop.f32.mrf.mxu0
    %v1022 = vadd.f32 %v948, %v1021
    %v1023 = vpop.f32.mrf.mxu0
    %v1024 = vadd.f32 %v952, %v1023
    %1025 = vmatprep.mubr.f32.mxu0 %v655
    %1026 = vmatmul.mubr.f32.gmra.mxu0 %v654
    %v1027 = vpop.f32.mrf.mxu0
    %v1028 = vadd.f32 %v948, %v1027
    %v1029 = vpop.f32.mrf.mxu0
    %v1030 = vadd.f32 %v952, %v1029
    %1031 = vdwg.mxu0
    %s1032 = scalar_lea.vmem [#allocation7], 6
    %v1033 = vld [vmem:[%s1032] sm:$0x3]
    %s1034 = scalar_lea.vmem [#allocation8], 6
    %v1035 = vld [vmem:[%s1034] sm:$0x3]
    %v1036 = vadd.f32 %v1022, %v1024
    %1037 = vadd.xlane.f32.xlu0 %v1036
    %v1038 = vpop.xlane.xlu0 %1037
    %v1039 = vadd.f32 %v1028, %v1030
    %1040 = vadd.xlane.f32.xlu0 %v1039
    %v1041 = vpop.xlane.xlu0 %1040
    %v1042 = vmul.f32 %v1038, %v380
    %v1043 = vmul.f32 %v1041, %v380
    %v1044 = vsub.f32 %v1022, %v1042
    %v1045 = vsub.f32 %v1024, %v1042
    %v1046 = vsub.f32 %v1028, %v1043
    %v1047 = vsub.f32 %v1030, %v1043
    %v1048 = vmul.f32 %v1044, %v1044
    %v1049 = vmul.f32 %v1045, %v1045
    %v1050 = vmul.f32 %v1046, %v1046
    %v1051 = vmul.f32 %v1047, %v1047
    %v1052 = vadd.f32 %v1048, %v1049
    %1053 = vadd.xlane.f32.xlu0 %v1052
    %v1054 = vpop.xlane.xlu0 %1053
    %v1055 = vadd.f32 %v1050, %v1051
    %1056 = vadd.xlane.f32.xlu0 %v1055
    %v1057 = vpop.xlane.xlu0 %1056
    %v1058 = vmul.f32 %v1054, %v380
    %v1059 = vmul.f32 %v1057, %v380
    %v1060 = vadd.f32 %v1058, 1e-05
    %v1061 = vadd.f32 %v1059, 1e-05
    %v1062 = vrsqrt.pop %v1060
    %v1063 = vrsqrt.pop %v1061
    %v1064 = vmul.f32 %v1044, %v1062
    %v1065 = vmul.f32 %v1045, %v1062
    %v1066 = vmul.f32 %v1046, %v1063
    %v1067 = vmul.f32 %v1047, %v1063
    %v1069 = vlaneseq
    %v1070 = vshrl.u32 %v1069, 7
    %v1071 = vsub.s32 0, %v1070
    %v1072 = vrot.slane %v1033, %v1071
    %v1073 = vlaneseq
    %v1074 = vshrl.u32 %v1073, 7
    %v1075 = vsub.s32 1, %v1074
    %v1076 = vrot.slane %v1033, %v1075
    %v1079 = vmul.f32 %v1064, %v1072
    %v1080 = vmul.f32 %v1065, %v1076
    %v1081 = vmul.f32 %v1066, %v1072
    %v1082 = vmul.f32 %v1067, %v1076
    %v1084 = vlaneseq
    %v1085 = vshrl.u32 %v1084, 7
    %v1086 = vsub.s32 0, %v1085
    %v1087 = vrot.slane %v1035, %v1086
    %v1088 = vlaneseq
    %v1089 = vshrl.u32 %v1088, 7
    %v1090 = vsub.s32 1, %v1089
    %v1091 = vrot.slane %v1035, %v1090
    %v1094 = vadd.f32 %v1079, %v1087
    %v1095 = vadd.f32 %v1080, %v1091
    %v1096 = vadd.f32 %v1081, %v1087
    %v1097 = vadd.f32 %v1082, %v1091
    %s1098 = scalar_lea.vmem [#allocation3], 2048
    %v1099 = vld [vmem:[%s1098] sm:$0xff]
    %v1100 = vld [vmem:[%s1098 + $0x8] sm:$0xff]
    %v1101 = vld [vmem:[%s1098 + $0x10] sm:$0xff]
    %v1102 = vld [vmem:[%s1098 + $0x18] sm:$0xff]
    %v1103 = vld [vmem:[%s1098 + $0x20] sm:$0xff]
    %v1104 = vld [vmem:[%s1098 + $0x28] sm:$0xff]
    %v1105 = vld [vmem:[%s1098 + $0x30] sm:$0xff]
    %v1106 = vld [vmem:[%s1098 + $0x38] sm:$0xff]
    %v1107 = vld [vmem:[%s1098 + $0x40] sm:$0xff]
    %v1108 = vld [vmem:[%s1098 + $0x48] sm:$0xff]
    %v1109 = vld [vmem:[%s1098 + $0x50] sm:$0xff]
    %v1110 = vld [vmem:[%s1098 + $0x58] sm:$0xff]
    %v1111 = vld [vmem:[%s1098 + $0x60] sm:$0xff]
    %v1112 = vld [vmem:[%s1098 + $0x68] sm:$0xff]
    %v1113 = vld [vmem:[%s1098 + $0x70] sm:$0xff]
    %v1114 = vld [vmem:[%s1098 + $0x78] sm:$0xff]
    %v1115 = vld [vmem:[%s1098 + $0x80] sm:$0xff]
    %v1116 = vld [vmem:[%s1098 + $0x88] sm:$0xff]
    %v1117 = vld [vmem:[%s1098 + $0x90] sm:$0xff]
    %v1118 = vld [vmem:[%s1098 + $0x98] sm:$0xff]
    %v1119 = vld [vmem:[%s1098 + $0xa0] sm:$0xff]
    %v1120 = vld [vmem:[%s1098 + $0xa8] sm:$0xff]
    %v1121 = vld [vmem:[%s1098 + $0xb0] sm:$0xff]
    %v1122 = vld [vmem:[%s1098 + $0xb8] sm:$0xff]
    %v1123 = vld [vmem:[%s1098 + $0xc0] sm:$0xff]
    %v1124 = vld [vmem:[%s1098 + $0xc8] sm:$0xff]
    %v1125 = vld [vmem:[%s1098 + $0xd0] sm:$0xff]
    %v1126 = vld [vmem:[%s1098 + $0xd8] sm:$0xff]
    %v1127 = vld [vmem:[%s1098 + $0xe0] sm:$0xff]
    %v1128 = vld [vmem:[%s1098 + $0xe8] sm:$0xff]
    %v1129 = vld [vmem:[%s1098 + $0xf0] sm:$0xff]
    %v1130 = vld [vmem:[%s1098 + $0xf8] sm:$0xff]
    %v1131 = vld [vmem:[%s1098 + $0x100] sm:$0xff]
    %v1132 = vld [vmem:[%s1098 + $0x108] sm:$0xff]
    %v1133 = vld [vmem:[%s1098 + $0x110] sm:$0xff]
    %v1134 = vld [vmem:[%s1098 + $0x118] sm:$0xff]
    %v1135 = vld [vmem:[%s1098 + $0x120] sm:$0xff]
    %v1136 = vld [vmem:[%s1098 + $0x128] sm:$0xff]
    %v1137 = vld [vmem:[%s1098 + $0x130] sm:$0xff]
    %v1138 = vld [vmem:[%s1098 + $0x138] sm:$0xff]
    %v1139 = vld [vmem:[%s1098 + $0x140] sm:$0xff]
    %v1140 = vld [vmem:[%s1098 + $0x148] sm:$0xff]
    %v1141 = vld [vmem:[%s1098 + $0x150] sm:$0xff]
    %v1142 = vld [vmem:[%s1098 + $0x158] sm:$0xff]
    %v1143 = vld [vmem:[%s1098 + $0x160] sm:$0xff]
    %v1144 = vld [vmem:[%s1098 + $0x168] sm:$0xff]
    %v1145 = vld [vmem:[%s1098 + $0x170] sm:$0xff]
    %v1146 = vld [vmem:[%s1098 + $0x178] sm:$0xff]
    %v1147 = vld [vmem:[%s1098 + $0x180] sm:$0xff]
    %v1148 = vld [vmem:[%s1098 + $0x188] sm:$0xff]
    %v1149 = vld [vmem:[%s1098 + $0x190] sm:$0xff]
    %v1150 = vld [vmem:[%s1098 + $0x198] sm:$0xff]
    %v1151 = vld [vmem:[%s1098 + $0x1a0] sm:$0xff]
    %v1152 = vld [vmem:[%s1098 + $0x1a8] sm:$0xff]
    %v1153 = vld [vmem:[%s1098 + $0x1b0] sm:$0xff]
    %v1154 = vld [vmem:[%s1098 + $0x1b8] sm:$0xff]
    %v1155 = vld [vmem:[%s1098 + $0x1c0] sm:$0xff]
    %v1156 = vld [vmem:[%s1098 + $0x1c8] sm:$0xff]
    %v1157 = vld [vmem:[%s1098 + $0x1d0] sm:$0xff]
    %v1158 = vld [vmem:[%s1098 + $0x1d8] sm:$0xff]
    %v1159 = vld [vmem:[%s1098 + $0x1e0] sm:$0xff]
    %v1160 = vld [vmem:[%s1098 + $0x1e8] sm:$0xff]
    %v1161 = vld [vmem:[%s1098 + $0x1f0] sm:$0xff]
    %v1162 = vld [vmem:[%s1098 + $0x1f8] sm:$0xff]
    %1163 = vmatprep.subr.mxu0 %v1130
    %1164 = vmatpush1.msra.mxu0 %v1129
    %1165 = vmatprep.subr.mxu0 %v1128
    %1166 = vmatpush1.msra.mxu0 %v1127
    %1167 = vmatprep.subr.mxu0 %v1126
    %1168 = vmatpush1.msra.mxu0 %v1125
    %1169 = vmatprep.subr.mxu0 %v1124
    %1170 = vmatpush1.msra.mxu0 %v1123
    %1171 = vmatprep.subr.mxu0 %v1122
    %1172 = vmatpush1.msra.mxu0 %v1121
    %1173 = vmatprep.subr.mxu0 %v1120
    %1174 = vmatpush1.msra.mxu0 %v1119
    %1175 = vmatprep.subr.mxu0 %v1118
    %1176 = vmatpush1.msra.mxu0 %v1117
    %1177 = vmatprep.subr.mxu0 %v1116
    %1178 = vmatpush1.msra.mxu0 %v1115
    %1179 = vmatprep.subr.mxu0 %v1114
    %1180 = vmatpush1.msra.mxu0 %v1113
    %1181 = vmatprep.subr.mxu0 %v1112
    %1182 = vmatpush1.msra.mxu0 %v1111
    %1183 = vmatprep.subr.mxu0 %v1110
    %1184 = vmatpush1.msra.mxu0 %v1109
    %1185 = vmatprep.subr.mxu0 %v1108
    %1186 = vmatpush1.msra.mxu0 %v1107
    %1187 = vmatprep.subr.mxu0 %v1106
    %1188 = vmatpush1.msra.mxu0 %v1105
    %1189 = vmatprep.subr.mxu0 %v1104
    %1190 = vmatpush1.msra.mxu0 %v1103
    %1191 = vmatprep.subr.mxu0 %v1102
    %1192 = vmatpush1.msra.mxu0 %v1101
    %1193 = vmatprep.subr.mxu0 %v1100
    %1194 = vmatpush1.msra.mxu0 %v1099
    %1195 = vmatprep.subr.mxu0 %v1162
    %1196 = vmatpush2.msra.mxu0 %v1161
    %1197 = vmatprep.subr.mxu0 %v1160
    %1198 = vmatpush2.msra.mxu0 %v1159
    %1199 = vmatprep.subr.mxu0 %v1158
    %1200 = vmatpush2.msra.mxu0 %v1157
    %1201 = vmatprep.subr.mxu0 %v1156
    %1202 = vmatpush2.msra.mxu0 %v1155
    %1203 = vmatprep.subr.mxu0 %v1154
    %1204 = vmatpush2.msra.mxu0 %v1153
    %1205 = vmatprep.subr.mxu0 %v1152
    %1206 = vmatpush2.msra.mxu0 %v1151
    %1207 = vmatprep.subr.mxu0 %v1150
    %1208 = vmatpush2.msra.mxu0 %v1149
    %1209 = vmatprep.subr.mxu0 %v1148
    %1210 = vmatpush2.msra.mxu0 %v1147
    %1211 = vmatprep.subr.mxu0 %v1146
    %1212 = vmatpush2.msra.mxu0 %v1145
    %1213 = vmatprep.subr.mxu0 %v1144
    %1214 = vmatpush2.msra.mxu0 %v1143
    %1215 = vmatprep.subr.mxu0 %v1142
    %1216 = vmatpush2.msra.mxu0 %v1141
    %1217 = vmatprep.subr.mxu0 %v1140
    %1218 = vmatpush2.msra.mxu0 %v1139
    %1219 = vmatprep.subr.mxu0 %v1138
    %1220 = vmatpush2.msra.mxu0 %v1137
    %1221 = vmatprep.subr.mxu0 %v1136
    %1222 = vmatpush2.msra.mxu0 %v1135
    %1223 = vmatprep.subr.mxu0 %v1134
    %1224 = vmatpush2.msra.mxu0 %v1133
    %1225 = vmatprep.subr.mxu0 %v1132
    %1226 = vmatpush2.msra.mxu0 %v1131
    %1227 = vmatprep.mubr.f32.mxu0 %v1097
    %1228 = vmatmul.mubr.f32.gmra.mxu0 %v1096
    %v1229 = vpop.f32.mrf.mxu0
    %v1230 = vadd.f32 0.0, %v1229
    %v1231 = vpop.f32.mrf.mxu0
    %v1232 = vadd.f32 0.0, %v1231
    %1233 = vdwg.mxu0
    %v1234 = vadd.f32 %v1094, %v1230
    %v1235 = vadd.f32 %v1095, %v1232
    %s1236 = scalar_lea.vmem [#allocation5], 8
    %v1237 = vld [vmem:[%s1236] sm:$0x3]
    %v1239 = vlaneseq
    %v1240 = vshrl.u32 %v1239, 7
    %v1241 = vsub.s32 0, %v1240
    %v1242 = vrot.slane %v1237, %v1241
    %v1243 = vlaneseq
    %v1244 = vshrl.u32 %v1243, 7
    %v1245 = vsub.s32 1, %v1244
    %v1246 = vrot.slane %v1237, %v1245
    %v1249 = vadd.f32 %v1234, %v1242
    %v1250 = vadd.f32 %v1235, %v1246
    %s1251 = scalar_lea.vmem [#allocation7], 8
    %v1252 = vld [vmem:[%s1251] sm:$0x3]
    %s1253 = scalar_lea.vmem [#allocation8], 8
    %v1254 = vld [vmem:[%s1253] sm:$0x3]
    %v1255 = vadd.f32 %v1249, %v1250
    %1256 = vadd.xlane.f32.xlu0 %v1255
    %v1257 = vpop.xlane.xlu0 %1256
    %v1258 = vmul.f32 %v1257, %v380
    %v1259 = vsub.f32 %v1249, %v1258
    %v1260 = vsub.f32 %v1250, %v1258
    %v1261 = vmul.f32 %v1259, %v1259
    %v1262 = vmul.f32 %v1260, %v1260
    %v1263 = vadd.f32 %v1261, %v1262
    %1264 = vadd.xlane.f32.xlu0 %v1263
    %v1265 = vpop.xlane.xlu0 %1264
    %v1266 = vmul.f32 %v1265, %v380
    %v1267 = vadd.f32 %v1266, 1e-05
    %v1268 = vrsqrt.pop %v1267
    %v1269 = vmul.f32 %v1259, %v1268
    %v1270 = vmul.f32 %v1260, %v1268
    %v1272 = vlaneseq
    %v1273 = vshrl.u32 %v1272, 7
    %v1274 = vsub.s32 0, %v1273
    %v1275 = vrot.slane %v1252, %v1274
    %v1276 = vlaneseq
    %v1277 = vshrl.u32 %v1276, 7
    %v1278 = vsub.s32 1, %v1277
    %v1279 = vrot.slane %v1252, %v1278
    %v1282 = vmul.f32 %v1269, %v1275
    %v1283 = vmul.f32 %v1270, %v1279
    %v1285 = vlaneseq
    %v1286 = vshrl.u32 %v1285, 7
    %v1287 = vsub.s32 0, %v1286
    %v1288 = vrot.slane %v1254, %v1287
    %v1289 = vlaneseq
    %v1290 = vshrl.u32 %v1289, 7
    %v1291 = vsub.s32 1, %v1290
    %v1292 = vrot.slane %v1254, %v1291
    %v1295 = vadd.f32 %v1282, %v1288
    %v1296 = vadd.f32 %v1283, %v1292
    %s1297 = scalar_lea.vmem [#allocation3], 2560
    %v1298 = vld [vmem:[%s1297] sm:$0xff]
    %v1299 = vld [vmem:[%s1297 + $0x8] sm:$0xff]
    %v1300 = vld [vmem:[%s1297 + $0x10] sm:$0xff]
    %v1301 = vld [vmem:[%s1297 + $0x18] sm:$0xff]
    %v1302 = vld [vmem:[%s1297 + $0x20] sm:$0xff]
    %v1303 = vld [vmem:[%s1297 + $0x28] sm:$0xff]
    %v1304 = vld [vmem:[%s1297 + $0x30] sm:$0xff]
    %v1305 = vld [vmem:[%s1297 + $0x38] sm:$0xff]
    %v1306 = vld [vmem:[%s1297 + $0x40] sm:$0xff]
    %v1307 = vld [vmem:[%s1297 + $0x48] sm:$0xff]
    %v1308 = vld [vmem:[%s1297 + $0x50] sm:$0xff]
    %v1309 = vld [vmem:[%s1297 + $0x58] sm:$0xff]
    %v1310 = vld [vmem:[%s1297 + $0x60] sm:$0xff]
    %v1311 = vld [vmem:[%s1297 + $0x68] sm:$0xff]
    %v1312 = vld [vmem:[%s1297 + $0x70] sm:$0xff]
    %v1313 = vld [vmem:[%s1297 + $0x78] sm:$0xff]
    %v1314 = vld [vmem:[%s1297 + $0x80] sm:$0xff]
    %v1315 = vld [vmem:[%s1297 + $0x88] sm:$0xff]
    %v1316 = vld [vmem:[%s1297 + $0x90] sm:$0xff]
    %v1317 = vld [vmem:[%s1297 + $0x98] sm:$0xff]
    %v1318 = vld [vmem:[%s1297 + $0xa0] sm:$0xff]
    %v1319 = vld [vmem:[%s1297 + $0xa8] sm:$0xff]
    %v1320 = vld [vmem:[%s1297 + $0xb0] sm:$0xff]
    %v1321 = vld [vmem:[%s1297 + $0xb8] sm:$0xff]
    %v1322 = vld [vmem:[%s1297 + $0xc0] sm:$0xff]
    %v1323 = vld [vmem:[%s1297 + $0xc8] sm:$0xff]
    %v1324 = vld [vmem:[%s1297 + $0xd0] sm:$0xff]
    %v1325 = vld [vmem:[%s1297 + $0xd8] sm:$0xff]
    %v1326 = vld [vmem:[%s1297 + $0xe0] sm:$0xff]
    %v1327 = vld [vmem:[%s1297 + $0xe8] sm:$0xff]
    %v1328 = vld [vmem:[%s1297 + $0xf0] sm:$0xff]
    %v1329 = vld [vmem:[%s1297 + $0xf8] sm:$0xff]
    %v1330 = vld [vmem:[%s1297 + $0x100] sm:$0xff]
    %v1331 = vld [vmem:[%s1297 + $0x108] sm:$0xff]
    %v1332 = vld [vmem:[%s1297 + $0x110] sm:$0xff]
    %v1333 = vld [vmem:[%s1297 + $0x118] sm:$0xff]
    %v1334 = vld [vmem:[%s1297 + $0x120] sm:$0xff]
    %v1335 = vld [vmem:[%s1297 + $0x128] sm:$0xff]
    %v1336 = vld [vmem:[%s1297 + $0x130] sm:$0xff]
    %v1337 = vld [vmem:[%s1297 + $0x138] sm:$0xff]
    %v1338 = vld [vmem:[%s1297 + $0x140] sm:$0xff]
    %v1339 = vld [vmem:[%s1297 + $0x148] sm:$0xff]
    %v1340 = vld [vmem:[%s1297 + $0x150] sm:$0xff]
    %v1341 = vld [vmem:[%s1297 + $0x158] sm:$0xff]
    %v1342 = vld [vmem:[%s1297 + $0x160] sm:$0xff]
    %v1343 = vld [vmem:[%s1297 + $0x168] sm:$0xff]
    %v1344 = vld [vmem:[%s1297 + $0x170] sm:$0xff]
    %v1345 = vld [vmem:[%s1297 + $0x178] sm:$0xff]
    %v1346 = vld [vmem:[%s1297 + $0x180] sm:$0xff]
    %v1347 = vld [vmem:[%s1297 + $0x188] sm:$0xff]
    %v1348 = vld [vmem:[%s1297 + $0x190] sm:$0xff]
    %v1349 = vld [vmem:[%s1297 + $0x198] sm:$0xff]
    %v1350 = vld [vmem:[%s1297 + $0x1a0] sm:$0xff]
    %v1351 = vld [vmem:[%s1297 + $0x1a8] sm:$0xff]
    %v1352 = vld [vmem:[%s1297 + $0x1b0] sm:$0xff]
    %v1353 = vld [vmem:[%s1297 + $0x1b8] sm:$0xff]
    %v1354 = vld [vmem:[%s1297 + $0x1c0] sm:$0xff]
    %v1355 = vld [vmem:[%s1297 + $0x1c8] sm:$0xff]
    %v1356 = vld [vmem:[%s1297 + $0x1d0] sm:$0xff]
    %v1357 = vld [vmem:[%s1297 + $0x1d8] sm:$0xff]
    %v1358 = vld [vmem:[%s1297 + $0x1e0] sm:$0xff]
    %v1359 = vld [vmem:[%s1297 + $0x1e8] sm:$0xff]
    %v1360 = vld [vmem:[%s1297 + $0x1f0] sm:$0xff]
    %v1361 = vld [vmem:[%s1297 + $0x1f8] sm:$0xff]
    %1362 = vmatprep.subr.mxu0 %v1329
    %1363 = vmatpush1.msra.mxu0 %v1328
    %1364 = vmatprep.subr.mxu0 %v1327
    %1365 = vmatpush1.msra.mxu0 %v1326
    %1366 = vmatprep.subr.mxu0 %v1325
    %1367 = vmatpush1.msra.mxu0 %v1324
    %1368 = vmatprep.subr.mxu0 %v1323
    %1369 = vmatpush1.msra.mxu0 %v1322
    %1370 = vmatprep.subr.mxu0 %v1321
    %1371 = vmatpush1.msra.mxu0 %v1320
    %1372 = vmatprep.subr.mxu0 %v1319
    %1373 = vmatpush1.msra.mxu0 %v1318
    %1374 = vmatprep.subr.mxu0 %v1317
    %1375 = vmatpush1.msra.mxu0 %v1316
    %1376 = vmatprep.subr.mxu0 %v1315
    %1377 = vmatpush1.msra.mxu0 %v1314
    %1378 = vmatprep.subr.mxu0 %v1313
    %1379 = vmatpush1.msra.mxu0 %v1312
    %1380 = vmatprep.subr.mxu0 %v1311
    %1381 = vmatpush1.msra.mxu0 %v1310
    %1382 = vmatprep.subr.mxu0 %v1309
    %1383 = vmatpush1.msra.mxu0 %v1308
    %1384 = vmatprep.subr.mxu0 %v1307
    %1385 = vmatpush1.msra.mxu0 %v1306
    %1386 = vmatprep.subr.mxu0 %v1305
    %1387 = vmatpush1.msra.mxu0 %v1304
    %1388 = vmatprep.subr.mxu0 %v1303
    %1389 = vmatpush1.msra.mxu0 %v1302
    %1390 = vmatprep.subr.mxu0 %v1301
    %1391 = vmatpush1.msra.mxu0 %v1300
    %1392 = vmatprep.subr.mxu0 %v1299
    %1393 = vmatpush1.msra.mxu0 %v1298
    %1394 = vmatprep.subr.mxu0 %v1361
    %1395 = vmatpush2.msra.mxu0 %v1360
    %1396 = vmatprep.subr.mxu0 %v1359
    %1397 = vmatpush2.msra.mxu0 %v1358
    %1398 = vmatprep.subr.mxu0 %v1357
    %1399 = vmatpush2.msra.mxu0 %v1356
    %1400 = vmatprep.subr.mxu0 %v1355
    %1401 = vmatpush2.msra.mxu0 %v1354
    %1402 = vmatprep.subr.mxu0 %v1353
    %1403 = vmatpush2.msra.mxu0 %v1352
    %1404 = vmatprep.subr.mxu0 %v1351
    %1405 = vmatpush2.msra.mxu0 %v1350
    %1406 = vmatprep.subr.mxu0 %v1349
    %1407 = vmatpush2.msra.mxu0 %v1348
    %1408 = vmatprep.subr.mxu0 %v1347
    %1409 = vmatpush2.msra.mxu0 %v1346
    %1410 = vmatprep.subr.mxu0 %v1345
    %1411 = vmatpush2.msra.mxu0 %v1344
    %1412 = vmatprep.subr.mxu0 %v1343
    %1413 = vmatpush2.msra.mxu0 %v1342
    %1414 = vmatprep.subr.mxu0 %v1341
    %1415 = vmatpush2.msra.mxu0 %v1340
    %1416 = vmatprep.subr.mxu0 %v1339
    %1417 = vmatpush2.msra.mxu0 %v1338
    %1418 = vmatprep.subr.mxu0 %v1337
    %1419 = vmatpush2.msra.mxu0 %v1336
    %1420 = vmatprep.subr.mxu0 %v1335
    %1421 = vmatpush2.msra.mxu0 %v1334
    %1422 = vmatprep.subr.mxu0 %v1333
    %1423 = vmatpush2.msra.mxu0 %v1332
    %1424 = vmatprep.subr.mxu0 %v1331
    %1425 = vmatpush2.msra.mxu0 %v1330
    %1426 = vmatprep.mubr.f32.mxu0 %v1095
    %1427 = vmatmul.mubr.f32.gmra.mxu0 %v1094
    %v1428 = vpop.f32.mrf.mxu0
    %v1429 = vadd.f32 0.0, %v1428
    %v1430 = vpop.f32.mrf.mxu0
    %v1431 = vadd.f32 0.0, %v1430
    %1432 = vdwg.mxu0
    %v1433 = vadd.f32 %v1096, %v1429
    %v1434 = vadd.f32 %v1097, %v1431
    %s1435 = scalar_lea.vmem [#allocation5], 10
    %v1436 = vld [vmem:[%s1435] sm:$0x3]
    %v1438 = vlaneseq
    %v1439 = vshrl.u32 %v1438, 7
    %v1440 = vsub.s32 0, %v1439
    %v1441 = vrot.slane %v1436, %v1440
    %v1442 = vlaneseq
    %v1443 = vshrl.u32 %v1442, 7
    %v1444 = vsub.s32 1, %v1443
    %v1445 = vrot.slane %v1436, %v1444
    %v1448 = vadd.f32 %v1433, %v1441
    %v1449 = vadd.f32 %v1434, %v1445
    %s1450 = scalar_lea.vmem [#allocation7], 10
    %v1451 = vld [vmem:[%s1450] sm:$0x3]
    %s1452 = scalar_lea.vmem [#allocation8], 10
    %v1453 = vld [vmem:[%s1452] sm:$0x3]
    %v1454 = vadd.f32 %v1448, %v1449
    %1455 = vadd.xlane.f32.xlu0 %v1454
    %v1456 = vpop.xlane.xlu0 %1455
    %v1457 = vmul.f32 %v1456, %v380
    %v1458 = vsub.f32 %v1448, %v1457
    %v1459 = vsub.f32 %v1449, %v1457
    %v1460 = vmul.f32 %v1458, %v1458
    %v1461 = vmul.f32 %v1459, %v1459
    %v1462 = vadd.f32 %v1460, %v1461
    %1463 = vadd.xlane.f32.xlu0 %v1462
    %v1464 = vpop.xlane.xlu0 %1463
    %v1465 = vmul.f32 %v1464, %v380
    %v1466 = vadd.f32 %v1465, 1e-05
    %v1467 = vrsqrt.pop %v1466
    %v1468 = vmul.f32 %v1458, %v1467
    %v1469 = vmul.f32 %v1459, %v1467
    %v1471 = vlaneseq
    %v1472 = vshrl.u32 %v1471, 7
    %v1473 = vsub.s32 0, %v1472
    %v1474 = vrot.slane %v1451, %v1473
    %v1475 = vlaneseq
    %v1476 = vshrl.u32 %v1475, 7
    %v1477 = vsub.s32 1, %v1476
    %v1478 = vrot.slane %v1451, %v1477
    %v1481 = vmul.f32 %v1468, %v1474
    %v1482 = vmul.f32 %v1469, %v1478
    %v1484 = vlaneseq
    %v1485 = vshrl.u32 %v1484, 7
    %v1486 = vsub.s32 0, %v1485
    %v1487 = vrot.slane %v1453, %v1486
    %v1488 = vlaneseq
    %v1489 = vshrl.u32 %v1488, 7
    %v1490 = vsub.s32 1, %v1489
    %v1491 = vrot.slane %v1453, %v1490
    %v1494 = vadd.f32 %v1481, %v1487
    %v1495 = vadd.f32 %v1482, %v1491
    %s1496 = scalar_lea.vmem [#allocation3], 3072
    %v1497 = vld [vmem:[%s1496] sm:$0xff]
    %v1498 = vld [vmem:[%s1496 + $0x8] sm:$0xff]
    %v1499 = vld [vmem:[%s1496 + $0x10] sm:$0xff]
    %v1500 = vld [vmem:[%s1496 + $0x18] sm:$0xff]
    %v1501 = vld [vmem:[%s1496 + $0x20] sm:$0xff]
    %v1502 = vld [vmem:[%s1496 + $0x28] sm:$0xff]
    %v1503 = vld [vmem:[%s1496 + $0x30] sm:$0xff]
    %v1504 = vld [vmem:[%s1496 + $0x38] sm:$0xff]
    %v1505 = vld [vmem:[%s1496 + $0x40] sm:$0xff]
    %v1506 = vld [vmem:[%s1496 + $0x48] sm:$0xff]
    %v1507 = vld [vmem:[%s1496 + $0x50] sm:$0xff]
    %v1508 = vld [vmem:[%s1496 + $0x58] sm:$0xff]
    %v1509 = vld [vmem:[%s1496 + $0x60] sm:$0xff]
    %v1510 = vld [vmem:[%s1496 + $0x68] sm:$0xff]
    %v1511 = vld [vmem:[%s1496 + $0x70] sm:$0xff]
    %v1512 = vld [vmem:[%s1496 + $0x78] sm:$0xff]
    %v1513 = vld [vmem:[%s1496 + $0x80] sm:$0xff]
    %v1514 = vld [vmem:[%s1496 + $0x88] sm:$0xff]
    %v1515 = vld [vmem:[%s1496 + $0x90] sm:$0xff]
    %v1516 = vld [vmem:[%s1496 + $0x98] sm:$0xff]
    %v1517 = vld [vmem:[%s1496 + $0xa0] sm:$0xff]
    %v1518 = vld [vmem:[%s1496 + $0xa8] sm:$0xff]
    %v1519 = vld [vmem:[%s1496 + $0xb0] sm:$0xff]
    %v1520 = vld [vmem:[%s1496 + $0xb8] sm:$0xff]
    %v1521 = vld [vmem:[%s1496 + $0xc0] sm:$0xff]
    %v1522 = vld [vmem:[%s1496 + $0xc8] sm:$0xff]
    %v1523 = vld [vmem:[%s1496 + $0xd0] sm:$0xff]
    %v1524 = vld [vmem:[%s1496 + $0xd8] sm:$0xff]
    %v1525 = vld [vmem:[%s1496 + $0xe0] sm:$0xff]
    %v1526 = vld [vmem:[%s1496 + $0xe8] sm:$0xff]
    %v1527 = vld [vmem:[%s1496 + $0xf0] sm:$0xff]
    %v1528 = vld [vmem:[%s1496 + $0xf8] sm:$0xff]
    %v1529 = vld [vmem:[%s1496 + $0x100] sm:$0xff]
    %v1530 = vld [vmem:[%s1496 + $0x108] sm:$0xff]
    %v1531 = vld [vmem:[%s1496 + $0x110] sm:$0xff]
    %v1532 = vld [vmem:[%s1496 + $0x118] sm:$0xff]
    %v1533 = vld [vmem:[%s1496 + $0x120] sm:$0xff]
    %v1534 = vld [vmem:[%s1496 + $0x128] sm:$0xff]
    %v1535 = vld [vmem:[%s1496 + $0x130] sm:$0xff]
    %v1536 = vld [vmem:[%s1496 + $0x138] sm:$0xff]
    %v1537 = vld [vmem:[%s1496 + $0x140] sm:$0xff]
    %v1538 = vld [vmem:[%s1496 + $0x148] sm:$0xff]
    %v1539 = vld [vmem:[%s1496 + $0x150] sm:$0xff]
    %v1540 = vld [vmem:[%s1496 + $0x158] sm:$0xff]
    %v1541 = vld [vmem:[%s1496 + $0x160] sm:$0xff]
    %v1542 = vld [vmem:[%s1496 + $0x168] sm:$0xff]
    %v1543 = vld [vmem:[%s1496 + $0x170] sm:$0xff]
    %v1544 = vld [vmem:[%s1496 + $0x178] sm:$0xff]
    %v1545 = vld [vmem:[%s1496 + $0x180] sm:$0xff]
    %v1546 = vld [vmem:[%s1496 + $0x188] sm:$0xff]
    %v1547 = vld [vmem:[%s1496 + $0x190] sm:$0xff]
    %v1548 = vld [vmem:[%s1496 + $0x198] sm:$0xff]
    %v1549 = vld [vmem:[%s1496 + $0x1a0] sm:$0xff]
    %v1550 = vld [vmem:[%s1496 + $0x1a8] sm:$0xff]
    %v1551 = vld [vmem:[%s1496 + $0x1b0] sm:$0xff]
    %v1552 = vld [vmem:[%s1496 + $0x1b8] sm:$0xff]
    %v1553 = vld [vmem:[%s1496 + $0x1c0] sm:$0xff]
    %v1554 = vld [vmem:[%s1496 + $0x1c8] sm:$0xff]
    %v1555 = vld [vmem:[%s1496 + $0x1d0] sm:$0xff]
    %v1556 = vld [vmem:[%s1496 + $0x1d8] sm:$0xff]
    %v1557 = vld [vmem:[%s1496 + $0x1e0] sm:$0xff]
    %v1558 = vld [vmem:[%s1496 + $0x1e8] sm:$0xff]
    %v1559 = vld [vmem:[%s1496 + $0x1f0] sm:$0xff]
    %v1560 = vld [vmem:[%s1496 + $0x1f8] sm:$0xff]
    %1561 = vmatprep.subr.mxu0 %v1528
    %1562 = vmatpush1.msra.mxu0 %v1527
    %1563 = vmatprep.subr.mxu0 %v1526
    %1564 = vmatpush1.msra.mxu0 %v1525
    %1565 = vmatprep.subr.mxu0 %v1524
    %1566 = vmatpush1.msra.mxu0 %v1523
    %1567 = vmatprep.subr.mxu0 %v1522
    %1568 = vmatpush1.msra.mxu0 %v1521
    %1569 = vmatprep.subr.mxu0 %v1520
    %1570 = vmatpush1.msra.mxu0 %v1519
    %1571 = vmatprep.subr.mxu0 %v1518
    %1572 = vmatpush1.msra.mxu0 %v1517
    %1573 = vmatprep.subr.mxu0 %v1516
    %1574 = vmatpush1.msra.mxu0 %v1515
    %1575 = vmatprep.subr.mxu0 %v1514
    %1576 = vmatpush1.msra.mxu0 %v1513
    %1577 = vmatprep.subr.mxu0 %v1512
    %1578 = vmatpush1.msra.mxu0 %v1511
    %1579 = vmatprep.subr.mxu0 %v1510
    %1580 = vmatpush1.msra.mxu0 %v1509
    %1581 = vmatprep.subr.mxu0 %v1508
    %1582 = vmatpush1.msra.mxu0 %v1507
    %1583 = vmatprep.subr.mxu0 %v1506
    %1584 = vmatpush1.msra.mxu0 %v1505
    %1585 = vmatprep.subr.mxu0 %v1504
    %1586 = vmatpush1.msra.mxu0 %v1503
    %1587 = vmatprep.subr.mxu0 %v1502
    %1588 = vmatpush1.msra.mxu0 %v1501
    %1589 = vmatprep.subr.mxu0 %v1500
    %1590 = vmatpush1.msra.mxu0 %v1499
    %1591 = vmatprep.subr.mxu0 %v1498
    %1592 = vmatpush1.msra.mxu0 %v1497
    %1593 = vmatprep.subr.mxu0 %v1560
    %1594 = vmatpush2.msra.mxu0 %v1559
    %1595 = vmatprep.subr.mxu0 %v1558
    %1596 = vmatpush2.msra.mxu0 %v1557
    %1597 = vmatprep.subr.mxu0 %v1556
    %1598 = vmatpush2.msra.mxu0 %v1555
    %1599 = vmatprep.subr.mxu0 %v1554
    %1600 = vmatpush2.msra.mxu0 %v1553
    %1601 = vmatprep.subr.mxu0 %v1552
    %1602 = vmatpush2.msra.mxu0 %v1551
    %1603 = vmatprep.subr.mxu0 %v1550
    %1604 = vmatpush2.msra.mxu0 %v1549
    %1605 = vmatprep.subr.mxu0 %v1548
    %1606 = vmatpush2.msra.mxu0 %v1547
    %1607 = vmatprep.subr.mxu0 %v1546
    %1608 = vmatpush2.msra.mxu0 %v1545
    %1609 = vmatprep.subr.mxu0 %v1544
    %1610 = vmatpush2.msra.mxu0 %v1543
    %1611 = vmatprep.subr.mxu0 %v1542
    %1612 = vmatpush2.msra.mxu0 %v1541
    %1613 = vmatprep.subr.mxu0 %v1540
    %1614 = vmatpush2.msra.mxu0 %v1539
    %1615 = vmatprep.subr.mxu0 %v1538
    %1616 = vmatpush2.msra.mxu0 %v1537
    %1617 = vmatprep.subr.mxu0 %v1536
    %1618 = vmatpush2.msra.mxu0 %v1535
    %1619 = vmatprep.subr.mxu0 %v1534
    %1620 = vmatpush2.msra.mxu0 %v1533
    %1621 = vmatprep.subr.mxu0 %v1532
    %1622 = vmatpush2.msra.mxu0 %v1531
    %1623 = vmatprep.subr.mxu0 %v1530
    %1624 = vmatpush2.msra.mxu0 %v1529
    %1625 = vmatprep.mubr.f32.mxu0 %v876
    %1626 = vmatmul.mubr.f32.gmra.mxu0 %v875
    %v1627 = vpop.f32.mrf.mxu0
    %v1628 = vadd.f32 0.0, %v1627
    %v1629 = vpop.f32.mrf.mxu0
    %v1630 = vadd.f32 0.0, %v1629
    %1631 = vdwg.mxu0
    %v1632 = vadd.f32 %v873, %v1628
    %v1633 = vadd.f32 %v874, %v1630
    %s1634 = scalar_lea.vmem [#allocation5], 12
    %v1635 = vld [vmem:[%s1634] sm:$0x3]
    %v1637 = vlaneseq
    %v1638 = vshrl.u32 %v1637, 7
    %v1639 = vsub.s32 0, %v1638
    %v1640 = vrot.slane %v1635, %v1639
    %v1641 = vlaneseq
    %v1642 = vshrl.u32 %v1641, 7
    %v1643 = vsub.s32 1, %v1642
    %v1644 = vrot.slane %v1635, %v1643
    %v1647 = vadd.f32 %v1632, %v1640
    %v1648 = vadd.f32 %v1633, %v1644
    %s1649 = scalar_lea.vmem [#allocation7], 12
    %v1650 = vld [vmem:[%s1649] sm:$0x3]
    %s1651 = scalar_lea.vmem [#allocation8], 12
    %v1652 = vld [vmem:[%s1651] sm:$0x3]
    %v1653 = vadd.f32 %v1647, %v1648
    %1654 = vadd.xlane.f32.xlu0 %v1653
    %v1655 = vpop.xlane.xlu0 %1654
    %v1656 = vmul.f32 %v1655, %v380
    %v1657 = vsub.f32 %v1647, %v1656
    %v1658 = vsub.f32 %v1648, %v1656
    %v1659 = vmul.f32 %v1657, %v1657
    %v1660 = vmul.f32 %v1658, %v1658
    %v1661 = vadd.f32 %v1659, %v1660
    %1662 = vadd.xlane.f32.xlu0 %v1661
    %v1663 = vpop.xlane.xlu0 %1662
    %v1664 = vmul.f32 %v1663, %v380
    %v1665 = vadd.f32 %v1664, 1e-05
    %v1666 = vrsqrt.pop %v1665
    %v1667 = vmul.f32 %v1657, %v1666
    %v1668 = vmul.f32 %v1658, %v1666
    %v1670 = vlaneseq
    %v1671 = vshrl.u32 %v1670, 7
    %v1672 = vsub.s32 0, %v1671
    %v1673 = vrot.slane %v1650, %v1672
    %v1674 = vlaneseq
    %v1675 = vshrl.u32 %v1674, 7
    %v1676 = vsub.s32 1, %v1675
    %v1677 = vrot.slane %v1650, %v1676
    %v1680 = vmul.f32 %v1667, %v1673
    %v1681 = vmul.f32 %v1668, %v1677
    %v1683 = vlaneseq
    %v1684 = vshrl.u32 %v1683, 7
    %v1685 = vsub.s32 0, %v1684
    %v1686 = vrot.slane %v1652, %v1685
    %v1687 = vlaneseq
    %v1688 = vshrl.u32 %v1687, 7
    %v1689 = vsub.s32 1, %v1688
    %v1690 = vrot.slane %v1652, %v1689
    %v1693 = vadd.f32 %v1680, %v1686
    %v1694 = vadd.f32 %v1681, %v1690
    %s1695 = scalar_lea.vmem [#allocation3], 3584
    %v1696 = vld [vmem:[%s1695] sm:$0xff]
    %v1697 = vld [vmem:[%s1695 + $0x8] sm:$0xff]
    %v1698 = vld [vmem:[%s1695 + $0x10] sm:$0xff]
    %v1699 = vld [vmem:[%s1695 + $0x18] sm:$0xff]
    %v1700 = vld [vmem:[%s1695 + $0x20] sm:$0xff]
    %v1701 = vld [vmem:[%s1695 + $0x28] sm:$0xff]
    %v1702 = vld [vmem:[%s1695 + $0x30] sm:$0xff]
    %v1703 = vld [vmem:[%s1695 + $0x38] sm:$0xff]
    %v1704 = vld [vmem:[%s1695 + $0x40] sm:$0xff]
    %v1705 = vld [vmem:[%s1695 + $0x48] sm:$0xff]
    %v1706 = vld [vmem:[%s1695 + $0x50] sm:$0xff]
    %v1707 = vld [vmem:[%s1695 + $0x58] sm:$0xff]
    %v1708 = vld [vmem:[%s1695 + $0x60] sm:$0xff]
    %v1709 = vld [vmem:[%s1695 + $0x68] sm:$0xff]
    %v1710 = vld [vmem:[%s1695 + $0x70] sm:$0xff]
    %v1711 = vld [vmem:[%s1695 + $0x78] sm:$0xff]
    %v1712 = vld [vmem:[%s1695 + $0x80] sm:$0xff]
    %v1713 = vld [vmem:[%s1695 + $0x88] sm:$0xff]
    %v1714 = vld [vmem:[%s1695 + $0x90] sm:$0xff]
    %v1715 = vld [vmem:[%s1695 + $0x98] sm:$0xff]
    %v1716 = vld [vmem:[%s1695 + $0xa0] sm:$0xff]
    %v1717 = vld [vmem:[%s1695 + $0xa8] sm:$0xff]
    %v1718 = vld [vmem:[%s1695 + $0xb0] sm:$0xff]
    %v1719 = vld [vmem:[%s1695 + $0xb8] sm:$0xff]
    %v1720 = vld [vmem:[%s1695 + $0xc0] sm:$0xff]
    %v1721 = vld [vmem:[%s1695 + $0xc8] sm:$0xff]
    %v1722 = vld [vmem:[%s1695 + $0xd0] sm:$0xff]
    %v1723 = vld [vmem:[%s1695 + $0xd8] sm:$0xff]
    %v1724 = vld [vmem:[%s1695 + $0xe0] sm:$0xff]
    %v1725 = vld [vmem:[%s1695 + $0xe8] sm:$0xff]
    %v1726 = vld [vmem:[%s1695 + $0xf0] sm:$0xff]
    %v1727 = vld [vmem:[%s1695 + $0xf8] sm:$0xff]
    %v1728 = vld [vmem:[%s1695 + $0x100] sm:$0xff]
    %v1729 = vld [vmem:[%s1695 + $0x108] sm:$0xff]
    %v1730 = vld [vmem:[%s1695 + $0x110] sm:$0xff]
    %v1731 = vld [vmem:[%s1695 + $0x118] sm:$0xff]
    %v1732 = vld [vmem:[%s1695 + $0x120] sm:$0xff]
    %v1733 = vld [vmem:[%s1695 + $0x128] sm:$0xff]
    %v1734 = vld [vmem:[%s1695 + $0x130] sm:$0xff]
    %v1735 = vld [vmem:[%s1695 + $0x138] sm:$0xff]
    %v1736 = vld [vmem:[%s1695 + $0x140] sm:$0xff]
    %v1737 = vld [vmem:[%s1695 + $0x148] sm:$0xff]
    %v1738 = vld [vmem:[%s1695 + $0x150] sm:$0xff]
    %v1739 = vld [vmem:[%s1695 + $0x158] sm:$0xff]
    %v1740 = vld [vmem:[%s1695 + $0x160] sm:$0xff]
    %v1741 = vld [vmem:[%s1695 + $0x168] sm:$0xff]
    %v1742 = vld [vmem:[%s1695 + $0x170] sm:$0xff]
    %v1743 = vld [vmem:[%s1695 + $0x178] sm:$0xff]
    %v1744 = vld [vmem:[%s1695 + $0x180] sm:$0xff]
    %v1745 = vld [vmem:[%s1695 + $0x188] sm:$0xff]
    %v1746 = vld [vmem:[%s1695 + $0x190] sm:$0xff]
    %v1747 = vld [vmem:[%s1695 + $0x198] sm:$0xff]
    %v1748 = vld [vmem:[%s1695 + $0x1a0] sm:$0xff]
    %v1749 = vld [vmem:[%s1695 + $0x1a8] sm:$0xff]
    %v1750 = vld [vmem:[%s1695 + $0x1b0] sm:$0xff]
    %v1751 = vld [vmem:[%s1695 + $0x1b8] sm:$0xff]
    %v1752 = vld [vmem:[%s1695 + $0x1c0] sm:$0xff]
    %v1753 = vld [vmem:[%s1695 + $0x1c8] sm:$0xff]
    %v1754 = vld [vmem:[%s1695 + $0x1d0] sm:$0xff]
    %v1755 = vld [vmem:[%s1695 + $0x1d8] sm:$0xff]
    %v1756 = vld [vmem:[%s1695 + $0x1e0] sm:$0xff]
    %v1757 = vld [vmem:[%s1695 + $0x1e8] sm:$0xff]
    %v1758 = vld [vmem:[%s1695 + $0x1f0] sm:$0xff]
    %v1759 = vld [vmem:[%s1695 + $0x1f8] sm:$0xff]
    %1760 = vmatprep.subr.mxu0 %v1727
    %1761 = vmatpush1.msra.mxu0 %v1726
    %1762 = vmatprep.subr.mxu0 %v1725
    %1763 = vmatpush1.msra.mxu0 %v1724
    %1764 = vmatprep.subr.mxu0 %v1723
    %1765 = vmatpush1.msra.mxu0 %v1722
    %1766 = vmatprep.subr.mxu0 %v1721
    %1767 = vmatpush1.msra.mxu0 %v1720
    %1768 = vmatprep.subr.mxu0 %v1719
    %1769 = vmatpush1.msra.mxu0 %v1718
    %1770 = vmatprep.subr.mxu0 %v1717
    %1771 = vmatpush1.msra.mxu0 %v1716
    %1772 = vmatprep.subr.mxu0 %v1715
    %1773 = vmatpush1.msra.mxu0 %v1714
    %1774 = vmatprep.subr.mxu0 %v1713
    %1775 = vmatpush1.msra.mxu0 %v1712
    %1776 = vmatprep.subr.mxu0 %v1711
    %1777 = vmatpush1.msra.mxu0 %v1710
    %1778 = vmatprep.subr.mxu0 %v1709
    %1779 = vmatpush1.msra.mxu0 %v1708
    %1780 = vmatprep.subr.mxu0 %v1707
    %1781 = vmatpush1.msra.mxu0 %v1706
    %1782 = vmatprep.subr.mxu0 %v1705
    %1783 = vmatpush1.msra.mxu0 %v1704
    %1784 = vmatprep.subr.mxu0 %v1703
    %1785 = vmatpush1.msra.mxu0 %v1702
    %1786 = vmatprep.subr.mxu0 %v1701
    %1787 = vmatpush1.msra.mxu0 %v1700
    %1788 = vmatprep.subr.mxu0 %v1699
    %1789 = vmatpush1.msra.mxu0 %v1698
    %1790 = vmatprep.subr.mxu0 %v1697
    %1791 = vmatpush1.msra.mxu0 %v1696
    %1792 = vmatprep.subr.mxu0 %v1759
    %1793 = vmatpush2.msra.mxu0 %v1758
    %1794 = vmatprep.subr.mxu0 %v1757
    %1795 = vmatpush2.msra.mxu0 %v1756
    %1796 = vmatprep.subr.mxu0 %v1755
    %1797 = vmatpush2.msra.mxu0 %v1754
    %1798 = vmatprep.subr.mxu0 %v1753
    %1799 = vmatpush2.msra.mxu0 %v1752
    %1800 = vmatprep.subr.mxu0 %v1751
    %1801 = vmatpush2.msra.mxu0 %v1750
    %1802 = vmatprep.subr.mxu0 %v1749
    %1803 = vmatpush2.msra.mxu0 %v1748
    %1804 = vmatprep.subr.mxu0 %v1747
    %1805 = vmatpush2.msra.mxu0 %v1746
    %1806 = vmatprep.subr.mxu0 %v1745
    %1807 = vmatpush2.msra.mxu0 %v1744
    %1808 = vmatprep.subr.mxu0 %v1743
    %1809 = vmatpush2.msra.mxu0 %v1742
    %1810 = vmatprep.subr.mxu0 %v1741
    %1811 = vmatpush2.msra.mxu0 %v1740
    %1812 = vmatprep.subr.mxu0 %v1739
    %1813 = vmatpush2.msra.mxu0 %v1738
    %1814 = vmatprep.subr.mxu0 %v1737
    %1815 = vmatpush2.msra.mxu0 %v1736
    %1816 = vmatprep.subr.mxu0 %v1735
    %1817 = vmatpush2.msra.mxu0 %v1734
    %1818 = vmatprep.subr.mxu0 %v1733
    %1819 = vmatpush2.msra.mxu0 %v1732
    %1820 = vmatprep.subr.mxu0 %v1731
    %1821 = vmatpush2.msra.mxu0 %v1730
    %1822 = vmatprep.subr.mxu0 %v1729
    %1823 = vmatpush2.msra.mxu0 %v1728
    %1824 = vmatprep.mubr.f32.mxu0 %v874
    %1825 = vmatmul.mubr.f32.gmra.mxu0 %v873
    %v1826 = vpop.f32.mrf.mxu0
    %v1827 = vadd.f32 0.0, %v1826
    %v1828 = vpop.f32.mrf.mxu0
    %v1829 = vadd.f32 0.0, %v1828
    %1830 = vdwg.mxu0
    %v1831 = vadd.f32 %v875, %v1827
    %v1832 = vadd.f32 %v876, %v1829
    %s1833 = scalar_lea.vmem [#allocation5], 14
    %v1834 = vld [vmem:[%s1833] sm:$0x3]
    %v1836 = vlaneseq
    %v1837 = vshrl.u32 %v1836, 7
    %v1838 = vsub.s32 0, %v1837
    %v1839 = vrot.slane %v1834, %v1838
    %v1840 = vlaneseq
    %v1841 = vshrl.u32 %v1840, 7
    %v1842 = vsub.s32 1, %v1841
    %v1843 = vrot.slane %v1834, %v1842
    %v1846 = vadd.f32 %v1831, %v1839
    %v1847 = vadd.f32 %v1832, %v1843
    %s1848 = scalar_lea.vmem [#allocation7], 14
    %v1849 = vld [vmem:[%s1848] sm:$0x3]
    %s1850 = scalar_lea.vmem [#allocation8], 14
    %v1851 = vld [vmem:[%s1850] sm:$0x3]
    %v1852 = vadd.f32 %v1846, %v1847
    %1853 = vadd.xlane.f32.xlu0 %v1852
    %v1854 = vpop.xlane.xlu0 %1853
    %v1855 = vmul.f32 %v1854, %v380
    %v1856 = vsub.f32 %v1846, %v1855
    %v1857 = vsub.f32 %v1847, %v1855
    %v1858 = vmul.f32 %v1856, %v1856
    %v1859 = vmul.f32 %v1857, %v1857
    %v1860 = vadd.f32 %v1858, %v1859
    %1861 = vadd.xlane.f32.xlu0 %v1860
    %v1862 = vpop.xlane.xlu0 %1861
    %v1863 = vmul.f32 %v1862, %v380
    %v1864 = vadd.f32 %v1863, 1e-05
    %v1865 = vrsqrt.pop %v1864
    %v1866 = vmul.f32 %v1856, %v1865
    %v1867 = vmul.f32 %v1857, %v1865
    %v1869 = vlaneseq
    %v1870 = vshrl.u32 %v1869, 7
    %v1871 = vsub.s32 0, %v1870
    %v1872 = vrot.slane %v1849, %v1871
    %v1873 = vlaneseq
    %v1874 = vshrl.u32 %v1873, 7
    %v1875 = vsub.s32 1, %v1874
    %v1876 = vrot.slane %v1849, %v1875
    %v1879 = vmul.f32 %v1866, %v1872
    %v1880 = vmul.f32 %v1867, %v1876
    %v1882 = vlaneseq
    %v1883 = vshrl.u32 %v1882, 7
    %v1884 = vsub.s32 0, %v1883
    %v1885 = vrot.slane %v1851, %v1884
    %v1886 = vlaneseq
    %v1887 = vshrl.u32 %v1886, 7
    %v1888 = vsub.s32 1, %v1887
    %v1889 = vrot.slane %v1851, %v1888
    %v1892 = vadd.f32 %v1879, %v1885
    %v1893 = vadd.f32 %v1880, %v1889
    %v1894 = vld [vmem:[#allocation10] sm:$0xff]
    %v1895 = vld [vmem:[#allocation10 + $0x8] sm:$0xff]
    %v1896 = vld [vmem:[#allocation10 + $0x10] sm:$0xff]
    %v1897 = vld [vmem:[#allocation10 + $0x18] sm:$0xff]
    %v1898 = vld [vmem:[#allocation10 + $0x20] sm:$0xff]
    %v1899 = vld [vmem:[#allocation10 + $0x28] sm:$0xff]
    %v1900 = vld [vmem:[#allocation10 + $0x30] sm:$0xff]
    %v1901 = vld [vmem:[#allocation10 + $0x38] sm:$0xff]
    %v1902 = vld [vmem:[#allocation10 + $0x40] sm:$0xff]
    %v1903 = vld [vmem:[#allocation10 + $0x48] sm:$0xff]
    %v1904 = vld [vmem:[#allocation10 + $0x50] sm:$0xff]
    %v1905 = vld [vmem:[#allocation10 + $0x58] sm:$0xff]
    %v1906 = vld [vmem:[#allocation10 + $0x60] sm:$0xff]
    %v1907 = vld [vmem:[#allocation10 + $0x68] sm:$0xff]
    %v1908 = vld [vmem:[#allocation10 + $0x70] sm:$0xff]
    %v1909 = vld [vmem:[#allocation10 + $0x78] sm:$0xff]
    %v1910 = vld [vmem:[#allocation10 + $0x80] sm:$0xff]
    %v1911 = vld [vmem:[#allocation10 + $0x88] sm:$0xff]
    %v1912 = vld [vmem:[#allocation10 + $0x90] sm:$0xff]
    %v1913 = vld [vmem:[#allocation10 + $0x98] sm:$0xff]
    %v1914 = vld [vmem:[#allocation10 + $0xa0] sm:$0xff]
    %v1915 = vld [vmem:[#allocation10 + $0xa8] sm:$0xff]
    %v1916 = vld [vmem:[#allocation10 + $0xb0] sm:$0xff]
    %v1917 = vld [vmem:[#allocation10 + $0xb8] sm:$0xff]
    %v1918 = vld [vmem:[#allocation10 + $0xc0] sm:$0xff]
    %v1919 = vld [vmem:[#allocation10 + $0xc8] sm:$0xff]
    %v1920 = vld [vmem:[#allocation10 + $0xd0] sm:$0xff]
    %v1921 = vld [vmem:[#allocation10 + $0xd8] sm:$0xff]
    %v1922 = vld [vmem:[#allocation10 + $0xe0] sm:$0xff]
    %v1923 = vld [vmem:[#allocation10 + $0xe8] sm:$0xff]
    %v1924 = vld [vmem:[#allocation10 + $0xf0] sm:$0xff]
    %v1925 = vld [vmem:[#allocation10 + $0xf8] sm:$0xff]
    %v1926 = vld [vmem:[#allocation10 + $0x100] sm:$0xff]
    %v1927 = vld [vmem:[#allocation10 + $0x108] sm:$0xff]
    %v1928 = vld [vmem:[#allocation10 + $0x110] sm:$0xff]
    %v1929 = vld [vmem:[#allocation10 + $0x118] sm:$0xff]
    %v1930 = vld [vmem:[#allocation10 + $0x120] sm:$0xff]
    %v1931 = vld [vmem:[#allocation10 + $0x128] sm:$0xff]
    %v1932 = vld [vmem:[#allocation10 + $0x130] sm:$0xff]
    %v1933 = vld [vmem:[#allocation10 + $0x138] sm:$0xff]
    %v1934 = vld [vmem:[#allocation10 + $0x140] sm:$0xff]
    %v1935 = vld [vmem:[#allocation10 + $0x148] sm:$0xff]
    %v1936 = vld [vmem:[#allocation10 + $0x150] sm:$0xff]
    %v1937 = vld [vmem:[#allocation10 + $0x158] sm:$0xff]
    %v1938 = vld [vmem:[#allocation10 + $0x160] sm:$0xff]
    %v1939 = vld [vmem:[#allocation10 + $0x168] sm:$0xff]
    %v1940 = vld [vmem:[#allocation10 + $0x170] sm:$0xff]
    %v1941 = vld [vmem:[#allocation10 + $0x178] sm:$0xff]
    %v1942 = vld [vmem:[#allocation10 + $0x180] sm:$0xff]
    %v1943 = vld [vmem:[#allocation10 + $0x188] sm:$0xff]
    %v1944 = vld [vmem:[#allocation10 + $0x190] sm:$0xff]
    %v1945 = vld [vmem:[#allocation10 + $0x198] sm:$0xff]
    %v1946 = vld [vmem:[#allocation10 + $0x1a0] sm:$0xff]
    %v1947 = vld [vmem:[#allocation10 + $0x1a8] sm:$0xff]
    %v1948 = vld [vmem:[#allocation10 + $0x1b0] sm:$0xff]
    %v1949 = vld [vmem:[#allocation10 + $0x1b8] sm:$0xff]
    %v1950 = vld [vmem:[#allocation10 + $0x1c0] sm:$0xff]
    %v1951 = vld [vmem:[#allocation10 + $0x1c8] sm:$0xff]
    %v1952 = vld [vmem:[#allocation10 + $0x1d0] sm:$0xff]
    %v1953 = vld [vmem:[#allocation10 + $0x1d8] sm:$0xff]
    %v1954 = vld [vmem:[#allocation10 + $0x1e0] sm:$0xff]
    %v1955 = vld [vmem:[#allocation10 + $0x1e8] sm:$0xff]
    %v1956 = vld [vmem:[#allocation10 + $0x1f0] sm:$0xff]
    %v1957 = vld [vmem:[#allocation10 + $0x1f8] sm:$0xff]
    %v1958 = vld [vmem:[#allocation10 + $0x200] sm:$0xff]
    %v1959 = vld [vmem:[#allocation10 + $0x208] sm:$0xff]
    %v1960 = vld [vmem:[#allocation10 + $0x210] sm:$0xff]
    %v1961 = vld [vmem:[#allocation10 + $0x218] sm:$0xff]
    %v1962 = vld [vmem:[#allocation10 + $0x220] sm:$0xff]
    %v1963 = vld [vmem:[#allocation10 + $0x228] sm:$0xff]
    %v1964 = vld [vmem:[#allocation10 + $0x230] sm:$0xff]
    %v1965 = vld [vmem:[#allocation10 + $0x238] sm:$0xff]
    %v1966 = vld [vmem:[#allocation10 + $0x240] sm:$0xff]
    %v1967 = vld [vmem:[#allocation10 + $0x248] sm:$0xff]
    %v1968 = vld [vmem:[#allocation10 + $0x250] sm:$0xff]
    %v1969 = vld [vmem:[#allocation10 + $0x258] sm:$0xff]
    %v1970 = vld [vmem:[#allocation10 + $0x260] sm:$0xff]
    %v1971 = vld [vmem:[#allocation10 + $0x268] sm:$0xff]
    %v1972 = vld [vmem:[#allocation10 + $0x270] sm:$0xff]
    %v1973 = vld [vmem:[#allocation10 + $0x278] sm:$0xff]
    %v1974 = vld [vmem:[#allocation10 + $0x280] sm:$0xff]
    %v1975 = vld [vmem:[#allocation10 + $0x288] sm:$0xff]
    %v1976 = vld [vmem:[#allocation10 + $0x290] sm:$0xff]
    %v1977 = vld [vmem:[#allocation10 + $0x298] sm:$0xff]
    %v1978 = vld [vmem:[#allocation10 + $0x2a0] sm:$0xff]
    %v1979 = vld [vmem:[#allocation10 + $0x2a8] sm:$0xff]
    %v1980 = vld [vmem:[#allocation10 + $0x2b0] sm:$0xff]
    %v1981 = vld [vmem:[#allocation10 + $0x2b8] sm:$0xff]
    %v1982 = vld [vmem:[#allocation10 + $0x2c0] sm:$0xff]
    %v1983 = vld [vmem:[#allocation10 + $0x2c8] sm:$0xff]
    %v1984 = vld [vmem:[#allocation10 + $0x2d0] sm:$0xff]
    %v1985 = vld [vmem:[#allocation10 + $0x2d8] sm:$0xff]
    %v1986 = vld [vmem:[#allocation10 + $0x2e0] sm:$0xff]
    %v1987 = vld [vmem:[#allocation10 + $0x2e8] sm:$0xff]
    %v1988 = vld [vmem:[#allocation10 + $0x2f0] sm:$0xff]
    %v1989 = vld [vmem:[#allocation10 + $0x2f8] sm:$0xff]
    %v1990 = vld [vmem:[#allocation10 + $0x300] sm:$0xff]
    %v1991 = vld [vmem:[#allocation10 + $0x308] sm:$0xff]
    %v1992 = vld [vmem:[#allocation10 + $0x310] sm:$0xff]
    %v1993 = vld [vmem:[#allocation10 + $0x318] sm:$0xff]
    %v1994 = vld [vmem:[#allocation10 + $0x320] sm:$0xff]
    %v1995 = vld [vmem:[#allocation10 + $0x328] sm:$0xff]
    %v1996 = vld [vmem:[#allocation10 + $0x330] sm:$0xff]
    %v1997 = vld [vmem:[#allocation10 + $0x338] sm:$0xff]
    %v1998 = vld [vmem:[#allocation10 + $0x340] sm:$0xff]
    %v1999 = vld [vmem:[#allocation10 + $0x348] sm:$0xff]
    %v2000 = vld [vmem:[#allocation10 + $0x350] sm:$0xff]
    %v2001 = vld [vmem:[#allocation10 + $0x358] sm:$0xff]
    %v2002 = vld [vmem:[#allocation10 + $0x360] sm:$0xff]
    %v2003 = vld [vmem:[#allocation10 + $0x368] sm:$0xff]
    %v2004 = vld [vmem:[#allocation10 + $0x370] sm:$0xff]
    %v2005 = vld [vmem:[#allocation10 + $0x378] sm:$0xff]
    %v2006 = vld [vmem:[#allocation10 + $0x380] sm:$0xff]
    %v2007 = vld [vmem:[#allocation10 + $0x388] sm:$0xff]
    %v2008 = vld [vmem:[#allocation10 + $0x390] sm:$0xff]
    %v2009 = vld [vmem:[#allocation10 + $0x398] sm:$0xff]
    %v2010 = vld [vmem:[#allocation10 + $0x3a0] sm:$0xff]
    %v2011 = vld [vmem:[#allocation10 + $0x3a8] sm:$0xff]
    %v2012 = vld [vmem:[#allocation10 + $0x3b0] sm:$0xff]
    %v2013 = vld [vmem:[#allocation10 + $0x3b8] sm:$0xff]
    %v2014 = vld [vmem:[#allocation10 + $0x3c0] sm:$0xff]
    %v2015 = vld [vmem:[#allocation10 + $0x3c8] sm:$0xff]
    %v2016 = vld [vmem:[#allocation10 + $0x3d0] sm:$0xff]
    %v2017 = vld [vmem:[#allocation10 + $0x3d8] sm:$0xff]
    %v2018 = vld [vmem:[#allocation10 + $0x3e0] sm:$0xff]
    %v2019 = vld [vmem:[#allocation10 + $0x3e8] sm:$0xff]
    %v2020 = vld [vmem:[#allocation10 + $0x3f0] sm:$0xff]
    %v2021 = vld [vmem:[#allocation10 + $0x3f8] sm:$0xff]
    %v2022 = vld [vmem:[#allocation10 + $0x400] sm:$0xff]
    %v2023 = vld [vmem:[#allocation10 + $0x408] sm:$0xff]
    %v2024 = vld [vmem:[#allocation10 + $0x410] sm:$0xff]
    %v2025 = vld [vmem:[#allocation10 + $0x418] sm:$0xff]
    %v2026 = vld [vmem:[#allocation10 + $0x420] sm:$0xff]
    %v2027 = vld [vmem:[#allocation10 + $0x428] sm:$0xff]
    %v2028 = vld [vmem:[#allocation10 + $0x430] sm:$0xff]
    %v2029 = vld [vmem:[#allocation10 + $0x438] sm:$0xff]
    %v2030 = vld [vmem:[#allocation10 + $0x440] sm:$0xff]
    %v2031 = vld [vmem:[#allocation10 + $0x448] sm:$0xff]
    %v2032 = vld [vmem:[#allocation10 + $0x450] sm:$0xff]
    %v2033 = vld [vmem:[#allocation10 + $0x458] sm:$0xff]
    %v2034 = vld [vmem:[#allocation10 + $0x460] sm:$0xff]
    %v2035 = vld [vmem:[#allocation10 + $0x468] sm:$0xff]
    %v2036 = vld [vmem:[#allocation10 + $0x470] sm:$0xff]
    %v2037 = vld [vmem:[#allocation10 + $0x478] sm:$0xff]
    %v2038 = vld [vmem:[#allocation10 + $0x480] sm:$0xff]
    %v2039 = vld [vmem:[#allocation10 + $0x488] sm:$0xff]
    %v2040 = vld [vmem:[#allocation10 + $0x490] sm:$0xff]
    %v2041 = vld [vmem:[#allocation10 + $0x498] sm:$0xff]
    %v2042 = vld [vmem:[#allocation10 + $0x4a0] sm:$0xff]
    %v2043 = vld [vmem:[#allocation10 + $0x4a8] sm:$0xff]
    %v2044 = vld [vmem:[#allocation10 + $0x4b0] sm:$0xff]
    %v2045 = vld [vmem:[#allocation10 + $0x4b8] sm:$0xff]
    %v2046 = vld [vmem:[#allocation10 + $0x4c0] sm:$0xff]
    %v2047 = vld [vmem:[#allocation10 + $0x4c8] sm:$0xff]
    %v2048 = vld [vmem:[#allocation10 + $0x4d0] sm:$0xff]
    %v2049 = vld [vmem:[#allocation10 + $0x4d8] sm:$0xff]
    %v2050 = vld [vmem:[#allocation10 + $0x4e0] sm:$0xff]
    %v2051 = vld [vmem:[#allocation10 + $0x4e8] sm:$0xff]
    %v2052 = vld [vmem:[#allocation10 + $0x4f0] sm:$0xff]
    %v2053 = vld [vmem:[#allocation10 + $0x4f8] sm:$0xff]
    %v2054 = vld [vmem:[#allocation10 + $0x500] sm:$0xff]
    %v2055 = vld [vmem:[#allocation10 + $0x508] sm:$0xff]
    %v2056 = vld [vmem:[#allocation10 + $0x510] sm:$0xff]
    %v2057 = vld [vmem:[#allocation10 + $0x518] sm:$0xff]
    %v2058 = vld [vmem:[#allocation10 + $0x520] sm:$0xff]
    %v2059 = vld [vmem:[#allocation10 + $0x528] sm:$0xff]
    %v2060 = vld [vmem:[#allocation10 + $0x530] sm:$0xff]
    %v2061 = vld [vmem:[#allocation10 + $0x538] sm:$0xff]
    %v2062 = vld [vmem:[#allocation10 + $0x540] sm:$0xff]
    %v2063 = vld [vmem:[#allocation10 + $0x548] sm:$0xff]
    %v2064 = vld [vmem:[#allocation10 + $0x550] sm:$0xff]
    %v2065 = vld [vmem:[#allocation10 + $0x558] sm:$0xff]
    %v2066 = vld [vmem:[#allocation10 + $0x560] sm:$0xff]
    %v2067 = vld [vmem:[#allocation10 + $0x568] sm:$0xff]
    %v2068 = vld [vmem:[#allocation10 + $0x570] sm:$0xff]
    %v2069 = vld [vmem:[#allocation10 + $0x578] sm:$0xff]
    %v2070 = vld [vmem:[#allocation10 + $0x580] sm:$0xff]
    %v2071 = vld [vmem:[#allocation10 + $0x588] sm:$0xff]
    %v2072 = vld [vmem:[#allocation10 + $0x590] sm:$0xff]
    %v2073 = vld [vmem:[#allocation10 + $0x598] sm:$0xff]
    %v2074 = vld [vmem:[#allocation10 + $0x5a0] sm:$0xff]
    %v2075 = vld [vmem:[#allocation10 + $0x5a8] sm:$0xff]
    %v2076 = vld [vmem:[#allocation10 + $0x5b0] sm:$0xff]
    %v2077 = vld [vmem:[#allocation10 + $0x5b8] sm:$0xff]
    %v2078 = vld [vmem:[#allocation10 + $0x5c0] sm:$0xff]
    %v2079 = vld [vmem:[#allocation10 + $0x5c8] sm:$0xff]
    %v2080 = vld [vmem:[#allocation10 + $0x5d0] sm:$0xff]
    %v2081 = vld [vmem:[#allocation10 + $0x5d8] sm:$0xff]
    %v2082 = vld [vmem:[#allocation10 + $0x5e0] sm:$0xff]
    %v2083 = vld [vmem:[#allocation10 + $0x5e8] sm:$0xff]
    %v2084 = vld [vmem:[#allocation10 + $0x5f0] sm:$0xff]
    %v2085 = vld [vmem:[#allocation10 + $0x5f8] sm:$0xff]
    %v2086 = vld [vmem:[#allocation10 + $0x600] sm:$0xff]
    %v2087 = vld [vmem:[#allocation10 + $0x608] sm:$0xff]
    %v2088 = vld [vmem:[#allocation10 + $0x610] sm:$0xff]
    %v2089 = vld [vmem:[#allocation10 + $0x618] sm:$0xff]
    %v2090 = vld [vmem:[#allocation10 + $0x620] sm:$0xff]
    %v2091 = vld [vmem:[#allocation10 + $0x628] sm:$0xff]
    %v2092 = vld [vmem:[#allocation10 + $0x630] sm:$0xff]
    %v2093 = vld [vmem:[#allocation10 + $0x638] sm:$0xff]
    %v2094 = vld [vmem:[#allocation10 + $0x640] sm:$0xff]
    %v2095 = vld [vmem:[#allocation10 + $0x648] sm:$0xff]
    %v2096 = vld [vmem:[#allocation10 + $0x650] sm:$0xff]
    %v2097 = vld [vmem:[#allocation10 + $0x658] sm:$0xff]
    %v2098 = vld [vmem:[#allocation10 + $0x660] sm:$0xff]
    %v2099 = vld [vmem:[#allocation10 + $0x668] sm:$0xff]
    %v2100 = vld [vmem:[#allocation10 + $0x670] sm:$0xff]
    %v2101 = vld [vmem:[#allocation10 + $0x678] sm:$0xff]
    %v2102 = vld [vmem:[#allocation10 + $0x680] sm:$0xff]
    %v2103 = vld [vmem:[#allocation10 + $0x688] sm:$0xff]
    %v2104 = vld [vmem:[#allocation10 + $0x690] sm:$0xff]
    %v2105 = vld [vmem:[#allocation10 + $0x698] sm:$0xff]
    %v2106 = vld [vmem:[#allocation10 + $0x6a0] sm:$0xff]
    %v2107 = vld [vmem:[#allocation10 + $0x6a8] sm:$0xff]
    %v2108 = vld [vmem:[#allocation10 + $0x6b0] sm:$0xff]
    %v2109 = vld [vmem:[#allocation10 + $0x6b8] sm:$0xff]
    %v2110 = vld [vmem:[#allocation10 + $0x6c0] sm:$0xff]
    %v2111 = vld [vmem:[#allocation10 + $0x6c8] sm:$0xff]
    %v2112 = vld [vmem:[#allocation10 + $0x6d0] sm:$0xff]
    %v2113 = vld [vmem:[#allocation10 + $0x6d8] sm:$0xff]
    %v2114 = vld [vmem:[#allocation10 + $0x6e0] sm:$0xff]
    %v2115 = vld [vmem:[#allocation10 + $0x6e8] sm:$0xff]
    %v2116 = vld [vmem:[#allocation10 + $0x6f0] sm:$0xff]
    %v2117 = vld [vmem:[#allocation10 + $0x6f8] sm:$0xff]
    %v2118 = vld [vmem:[#allocation10 + $0x700] sm:$0xff]
    %v2119 = vld [vmem:[#allocation10 + $0x708] sm:$0xff]
    %v2120 = vld [vmem:[#allocation10 + $0x710] sm:$0xff]
    %v2121 = vld [vmem:[#allocation10 + $0x718] sm:$0xff]
    %v2122 = vld [vmem:[#allocation10 + $0x720] sm:$0xff]
    %v2123 = vld [vmem:[#allocation10 + $0x728] sm:$0xff]
    %v2124 = vld [vmem:[#allocation10 + $0x730] sm:$0xff]
    %v2125 = vld [vmem:[#allocation10 + $0x738] sm:$0xff]
    %v2126 = vld [vmem:[#allocation10 + $0x740] sm:$0xff]
    %v2127 = vld [vmem:[#allocation10 + $0x748] sm:$0xff]
    %v2128 = vld [vmem:[#allocation10 + $0x750] sm:$0xff]
    %v2129 = vld [vmem:[#allocation10 + $0x758] sm:$0xff]
    %v2130 = vld [vmem:[#allocation10 + $0x760] sm:$0xff]
    %v2131 = vld [vmem:[#allocation10 + $0x768] sm:$0xff]
    %v2132 = vld [vmem:[#allocation10 + $0x770] sm:$0xff]
    %v2133 = vld [vmem:[#allocation10 + $0x778] sm:$0xff]
    %v2134 = vld [vmem:[#allocation10 + $0x780] sm:$0xff]
    %v2135 = vld [vmem:[#allocation10 + $0x788] sm:$0xff]
    %v2136 = vld [vmem:[#allocation10 + $0x790] sm:$0xff]
    %v2137 = vld [vmem:[#allocation10 + $0x798] sm:$0xff]
    %v2138 = vld [vmem:[#allocation10 + $0x7a0] sm:$0xff]
    %v2139 = vld [vmem:[#allocation10 + $0x7a8] sm:$0xff]
    %v2140 = vld [vmem:[#allocation10 + $0x7b0] sm:$0xff]
    %v2141 = vld [vmem:[#allocation10 + $0x7b8] sm:$0xff]
    %v2142 = vld [vmem:[#allocation10 + $0x7c0] sm:$0xff]
    %v2143 = vld [vmem:[#allocation10 + $0x7c8] sm:$0xff]
    %v2144 = vld [vmem:[#allocation10 + $0x7d0] sm:$0xff]
    %v2145 = vld [vmem:[#allocation10 + $0x7d8] sm:$0xff]
    %v2146 = vld [vmem:[#allocation10 + $0x7e0] sm:$0xff]
    %v2147 = vld [vmem:[#allocation10 + $0x7e8] sm:$0xff]
    %v2148 = vld [vmem:[#allocation10 + $0x7f0] sm:$0xff]
    %v2149 = vld [vmem:[#allocation10 + $0x7f8] sm:$0xff]
    %v2150 = vld [vmem:[#allocation10 + $0x800] sm:$0xff]
    %v2151 = vld [vmem:[#allocation10 + $0x808] sm:$0xff]
    %v2152 = vld [vmem:[#allocation10 + $0x810] sm:$0xff]
    %v2153 = vld [vmem:[#allocation10 + $0x818] sm:$0xff]
    %v2154 = vld [vmem:[#allocation10 + $0x820] sm:$0xff]
    %v2155 = vld [vmem:[#allocation10 + $0x828] sm:$0xff]
    %v2156 = vld [vmem:[#allocation10 + $0x830] sm:$0xff]
    %v2157 = vld [vmem:[#allocation10 + $0x838] sm:$0xff]
    %v2158 = vld [vmem:[#allocation10 + $0x840] sm:$0xff]
    %v2159 = vld [vmem:[#allocation10 + $0x848] sm:$0xff]
    %v2160 = vld [vmem:[#allocation10 + $0x850] sm:$0xff]
    %v2161 = vld [vmem:[#allocation10 + $0x858] sm:$0xff]
    %v2162 = vld [vmem:[#allocation10 + $0x860] sm:$0xff]
    %v2163 = vld [vmem:[#allocation10 + $0x868] sm:$0xff]
    %v2164 = vld [vmem:[#allocation10 + $0x870] sm:$0xff]
    %v2165 = vld [vmem:[#allocation10 + $0x878] sm:$0xff]
    %v2166 = vld [vmem:[#allocation10 + $0x880] sm:$0xff]
    %v2167 = vld [vmem:[#allocation10 + $0x888] sm:$0xff]
    %v2168 = vld [vmem:[#allocation10 + $0x890] sm:$0xff]
    %v2169 = vld [vmem:[#allocation10 + $0x898] sm:$0xff]
    %v2170 = vld [vmem:[#allocation10 + $0x8a0] sm:$0xff]
    %v2171 = vld [vmem:[#allocation10 + $0x8a8] sm:$0xff]
    %v2172 = vld [vmem:[#allocation10 + $0x8b0] sm:$0xff]
    %v2173 = vld [vmem:[#allocation10 + $0x8b8] sm:$0xff]
    %v2174 = vld [vmem:[#allocation10 + $0x8c0] sm:$0xff]
    %v2175 = vld [vmem:[#allocation10 + $0x8c8] sm:$0xff]
    %v2176 = vld [vmem:[#allocation10 + $0x8d0] sm:$0xff]
    %v2177 = vld [vmem:[#allocation10 + $0x8d8] sm:$0xff]
    %v2178 = vld [vmem:[#allocation10 + $0x8e0] sm:$0xff]
    %v2179 = vld [vmem:[#allocation10 + $0x8e8] sm:$0xff]
    %v2180 = vld [vmem:[#allocation10 + $0x8f0] sm:$0xff]
    %v2181 = vld [vmem:[#allocation10 + $0x8f8] sm:$0xff]
    %v2182 = vld [vmem:[#allocation10 + $0x900] sm:$0xff]
    %v2183 = vld [vmem:[#allocation10 + $0x908] sm:$0xff]
    %v2184 = vld [vmem:[#allocation10 + $0x910] sm:$0xff]
    %v2185 = vld [vmem:[#allocation10 + $0x918] sm:$0xff]
    %v2186 = vld [vmem:[#allocation10 + $0x920] sm:$0xff]
    %v2187 = vld [vmem:[#allocation10 + $0x928] sm:$0xff]
    %v2188 = vld [vmem:[#allocation10 + $0x930] sm:$0xff]
    %v2189 = vld [vmem:[#allocation10 + $0x938] sm:$0xff]
    %v2190 = vld [vmem:[#allocation10 + $0x940] sm:$0xff]
    %v2191 = vld [vmem:[#allocation10 + $0x948] sm:$0xff]
    %v2192 = vld [vmem:[#allocation10 + $0x950] sm:$0xff]
    %v2193 = vld [vmem:[#allocation10 + $0x958] sm:$0xff]
    %v2194 = vld [vmem:[#allocation10 + $0x960] sm:$0xff]
    %v2195 = vld [vmem:[#allocation10 + $0x968] sm:$0xff]
    %v2196 = vld [vmem:[#allocation10 + $0x970] sm:$0xff]
    %v2197 = vld [vmem:[#allocation10 + $0x978] sm:$0xff]
    %v2198 = vld [vmem:[#allocation10 + $0x980] sm:$0xff]
    %v2199 = vld [vmem:[#allocation10 + $0x988] sm:$0xff]
    %v2200 = vld [vmem:[#allocation10 + $0x990] sm:$0xff]
    %v2201 = vld [vmem:[#allocation10 + $0x998] sm:$0xff]
    %v2202 = vld [vmem:[#allocation10 + $0x9a0] sm:$0xff]
    %v2203 = vld [vmem:[#allocation10 + $0x9a8] sm:$0xff]
    %v2204 = vld [vmem:[#allocation10 + $0x9b0] sm:$0xff]
    %v2205 = vld [vmem:[#allocation10 + $0x9b8] sm:$0xff]
    %v2206 = vld [vmem:[#allocation10 + $0x9c0] sm:$0xff]
    %v2207 = vld [vmem:[#allocation10 + $0x9c8] sm:$0xff]
    %v2208 = vld [vmem:[#allocation10 + $0x9d0] sm:$0xff]
    %v2209 = vld [vmem:[#allocation10 + $0x9d8] sm:$0xff]
    %v2210 = vld [vmem:[#allocation10 + $0x9e0] sm:$0xff]
    %v2211 = vld [vmem:[#allocation10 + $0x9e8] sm:$0xff]
    %v2212 = vld [vmem:[#allocation10 + $0x9f0] sm:$0xff]
    %v2213 = vld [vmem:[#allocation10 + $0x9f8] sm:$0xff]
    %v2214 = vld [vmem:[#allocation10 + $0xa00] sm:$0xff]
    %v2215 = vld [vmem:[#allocation10 + $0xa08] sm:$0xff]
    %v2216 = vld [vmem:[#allocation10 + $0xa10] sm:$0xff]
    %v2217 = vld [vmem:[#allocation10 + $0xa18] sm:$0xff]
    %v2218 = vld [vmem:[#allocation10 + $0xa20] sm:$0xff]
    %v2219 = vld [vmem:[#allocation10 + $0xa28] sm:$0xff]
    %v2220 = vld [vmem:[#allocation10 + $0xa30] sm:$0xff]
    %v2221 = vld [vmem:[#allocation10 + $0xa38] sm:$0xff]
    %v2222 = vld [vmem:[#allocation10 + $0xa40] sm:$0xff]
    %v2223 = vld [vmem:[#allocation10 + $0xa48] sm:$0xff]
    %v2224 = vld [vmem:[#allocation10 + $0xa50] sm:$0xff]
    %v2225 = vld [vmem:[#allocation10 + $0xa58] sm:$0xff]
    %v2226 = vld [vmem:[#allocation10 + $0xa60] sm:$0xff]
    %v2227 = vld [vmem:[#allocation10 + $0xa68] sm:$0xff]
    %v2228 = vld [vmem:[#allocation10 + $0xa70] sm:$0xff]
    %v2229 = vld [vmem:[#allocation10 + $0xa78] sm:$0xff]
    %v2230 = vld [vmem:[#allocation10 + $0xa80] sm:$0xff]
    %v2231 = vld [vmem:[#allocation10 + $0xa88] sm:$0xff]
    %v2232 = vld [vmem:[#allocation10 + $0xa90] sm:$0xff]
    %v2233 = vld [vmem:[#allocation10 + $0xa98] sm:$0xff]
    %v2234 = vld [vmem:[#allocation10 + $0xaa0] sm:$0xff]
    %v2235 = vld [vmem:[#allocation10 + $0xaa8] sm:$0xff]
    %v2236 = vld [vmem:[#allocation10 + $0xab0] sm:$0xff]
    %v2237 = vld [vmem:[#allocation10 + $0xab8] sm:$0xff]
    %v2238 = vld [vmem:[#allocation10 + $0xac0] sm:$0xff]
    %v2239 = vld [vmem:[#allocation10 + $0xac8] sm:$0xff]
    %v2240 = vld [vmem:[#allocation10 + $0xad0] sm:$0xff]
    %v2241 = vld [vmem:[#allocation10 + $0xad8] sm:$0xff]
    %v2242 = vld [vmem:[#allocation10 + $0xae0] sm:$0xff]
    %v2243 = vld [vmem:[#allocation10 + $0xae8] sm:$0xff]
    %v2244 = vld [vmem:[#allocation10 + $0xaf0] sm:$0xff]
    %v2245 = vld [vmem:[#allocation10 + $0xaf8] sm:$0xff]
    %v2246 = vld [vmem:[#allocation10 + $0xb00] sm:$0xff]
    %v2247 = vld [vmem:[#allocation10 + $0xb08] sm:$0xff]
    %v2248 = vld [vmem:[#allocation10 + $0xb10] sm:$0xff]
    %v2249 = vld [vmem:[#allocation10 + $0xb18] sm:$0xff]
    %v2250 = vld [vmem:[#allocation10 + $0xb20] sm:$0xff]
    %v2251 = vld [vmem:[#allocation10 + $0xb28] sm:$0xff]
    %v2252 = vld [vmem:[#allocation10 + $0xb30] sm:$0xff]
    %v2253 = vld [vmem:[#allocation10 + $0xb38] sm:$0xff]
    %v2254 = vld [vmem:[#allocation10 + $0xb40] sm:$0xff]
    %v2255 = vld [vmem:[#allocation10 + $0xb48] sm:$0xff]
    %v2256 = vld [vmem:[#allocation10 + $0xb50] sm:$0xff]
    %v2257 = vld [vmem:[#allocation10 + $0xb58] sm:$0xff]
    %v2258 = vld [vmem:[#allocation10 + $0xb60] sm:$0xff]
    %v2259 = vld [vmem:[#allocation10 + $0xb68] sm:$0xff]
    %v2260 = vld [vmem:[#allocation10 + $0xb70] sm:$0xff]
    %v2261 = vld [vmem:[#allocation10 + $0xb78] sm:$0xff]
    %v2262 = vld [vmem:[#allocation10 + $0xb80] sm:$0xff]
    %v2263 = vld [vmem:[#allocation10 + $0xb88] sm:$0xff]
    %v2264 = vld [vmem:[#allocation10 + $0xb90] sm:$0xff]
    %v2265 = vld [vmem:[#allocation10 + $0xb98] sm:$0xff]
    %v2266 = vld [vmem:[#allocation10 + $0xba0] sm:$0xff]
    %v2267 = vld [vmem:[#allocation10 + $0xba8] sm:$0xff]
    %v2268 = vld [vmem:[#allocation10 + $0xbb0] sm:$0xff]
    %v2269 = vld [vmem:[#allocation10 + $0xbb8] sm:$0xff]
    %v2270 = vld [vmem:[#allocation10 + $0xbc0] sm:$0xff]
    %v2271 = vld [vmem:[#allocation10 + $0xbc8] sm:$0xff]
    %v2272 = vld [vmem:[#allocation10 + $0xbd0] sm:$0xff]
    %v2273 = vld [vmem:[#allocation10 + $0xbd8] sm:$0xff]
    %v2274 = vld [vmem:[#allocation10 + $0xbe0] sm:$0xff]
    %v2275 = vld [vmem:[#allocation10 + $0xbe8] sm:$0xff]
    %v2276 = vld [vmem:[#allocation10 + $0xbf0] sm:$0xff]
    %v2277 = vld [vmem:[#allocation10 + $0xbf8] sm:$0xff]
    %v2278 = vld [vmem:[#allocation10 + $0xc00] sm:$0xff]
    %v2279 = vld [vmem:[#allocation10 + $0xc08] sm:$0xff]
    %v2280 = vld [vmem:[#allocation10 + $0xc10] sm:$0xff]
    %v2281 = vld [vmem:[#allocation10 + $0xc18] sm:$0xff]
    %v2282 = vld [vmem:[#allocation10 + $0xc20] sm:$0xff]
    %v2283 = vld [vmem:[#allocation10 + $0xc28] sm:$0xff]
    %v2284 = vld [vmem:[#allocation10 + $0xc30] sm:$0xff]
    %v2285 = vld [vmem:[#allocation10 + $0xc38] sm:$0xff]
    %v2286 = vld [vmem:[#allocation10 + $0xc40] sm:$0xff]
    %v2287 = vld [vmem:[#allocation10 + $0xc48] sm:$0xff]
    %v2288 = vld [vmem:[#allocation10 + $0xc50] sm:$0xff]
    %v2289 = vld [vmem:[#allocation10 + $0xc58] sm:$0xff]
    %v2290 = vld [vmem:[#allocation10 + $0xc60] sm:$0xff]
    %v2291 = vld [vmem:[#allocation10 + $0xc68] sm:$0xff]
    %v2292 = vld [vmem:[#allocation10 + $0xc70] sm:$0xff]
    %v2293 = vld [vmem:[#allocation10 + $0xc78] sm:$0xff]
    %v2294 = vld [vmem:[#allocation10 + $0xc80] sm:$0xff]
    %v2295 = vld [vmem:[#allocation10 + $0xc88] sm:$0xff]
    %v2296 = vld [vmem:[#allocation10 + $0xc90] sm:$0xff]
    %v2297 = vld [vmem:[#allocation10 + $0xc98] sm:$0xff]
    %v2298 = vld [vmem:[#allocation10 + $0xca0] sm:$0xff]
    %v2299 = vld [vmem:[#allocation10 + $0xca8] sm:$0xff]
    %v2300 = vld [vmem:[#allocation10 + $0xcb0] sm:$0xff]
    %v2301 = vld [vmem:[#allocation10 + $0xcb8] sm:$0xff]
    %v2302 = vld [vmem:[#allocation10 + $0xcc0] sm:$0xff]
    %v2303 = vld [vmem:[#allocation10 + $0xcc8] sm:$0xff]
    %v2304 = vld [vmem:[#allocation10 + $0xcd0] sm:$0xff]
    %v2305 = vld [vmem:[#allocation10 + $0xcd8] sm:$0xff]
    %v2306 = vld [vmem:[#allocation10 + $0xce0] sm:$0xff]
    %v2307 = vld [vmem:[#allocation10 + $0xce8] sm:$0xff]
    %v2308 = vld [vmem:[#allocation10 + $0xcf0] sm:$0xff]
    %v2309 = vld [vmem:[#allocation10 + $0xcf8] sm:$0xff]
    %v2310 = vld [vmem:[#allocation10 + $0xd00] sm:$0xff]
    %v2311 = vld [vmem:[#allocation10 + $0xd08] sm:$0xff]
    %v2312 = vld [vmem:[#allocation10 + $0xd10] sm:$0xff]
    %v2313 = vld [vmem:[#allocation10 + $0xd18] sm:$0xff]
    %v2314 = vld [vmem:[#allocation10 + $0xd20] sm:$0xff]
    %v2315 = vld [vmem:[#allocation10 + $0xd28] sm:$0xff]
    %v2316 = vld [vmem:[#allocation10 + $0xd30] sm:$0xff]
    %v2317 = vld [vmem:[#allocation10 + $0xd38] sm:$0xff]
    %v2318 = vld [vmem:[#allocation10 + $0xd40] sm:$0xff]
    %v2319 = vld [vmem:[#allocation10 + $0xd48] sm:$0xff]
    %v2320 = vld [vmem:[#allocation10 + $0xd50] sm:$0xff]
    %v2321 = vld [vmem:[#allocation10 + $0xd58] sm:$0xff]
    %v2322 = vld [vmem:[#allocation10 + $0xd60] sm:$0xff]
    %v2323 = vld [vmem:[#allocation10 + $0xd68] sm:$0xff]
    %v2324 = vld [vmem:[#allocation10 + $0xd70] sm:$0xff]
    %v2325 = vld [vmem:[#allocation10 + $0xd78] sm:$0xff]
    %v2326 = vld [vmem:[#allocation10 + $0xd80] sm:$0xff]
    %v2327 = vld [vmem:[#allocation10 + $0xd88] sm:$0xff]
    %v2328 = vld [vmem:[#allocation10 + $0xd90] sm:$0xff]
    %v2329 = vld [vmem:[#allocation10 + $0xd98] sm:$0xff]
    %v2330 = vld [vmem:[#allocation10 + $0xda0] sm:$0xff]
    %v2331 = vld [vmem:[#allocation10 + $0xda8] sm:$0xff]
    %v2332 = vld [vmem:[#allocation10 + $0xdb0] sm:$0xff]
    %v2333 = vld [vmem:[#allocation10 + $0xdb8] sm:$0xff]
    %v2334 = vld [vmem:[#allocation10 + $0xdc0] sm:$0xff]
    %v2335 = vld [vmem:[#allocation10 + $0xdc8] sm:$0xff]
    %v2336 = vld [vmem:[#allocation10 + $0xdd0] sm:$0xff]
    %v2337 = vld [vmem:[#allocation10 + $0xdd8] sm:$0xff]
    %v2338 = vld [vmem:[#allocation10 + $0xde0] sm:$0xff]
    %v2339 = vld [vmem:[#allocation10 + $0xde8] sm:$0xff]
    %v2340 = vld [vmem:[#allocation10 + $0xdf0] sm:$0xff]
    %v2341 = vld [vmem:[#allocation10 + $0xdf8] sm:$0xff]
    %v2342 = vld [vmem:[#allocation10 + $0xe00] sm:$0xff]
    %v2343 = vld [vmem:[#allocation10 + $0xe08] sm:$0xff]
    %v2344 = vld [vmem:[#allocation10 + $0xe10] sm:$0xff]
    %v2345 = vld [vmem:[#allocation10 + $0xe18] sm:$0xff]
    %v2346 = vld [vmem:[#allocation10 + $0xe20] sm:$0xff]
    %v2347 = vld [vmem:[#allocation10 + $0xe28] sm:$0xff]
    %v2348 = vld [vmem:[#allocation10 + $0xe30] sm:$0xff]
    %v2349 = vld [vmem:[#allocation10 + $0xe38] sm:$0xff]
    %v2350 = vld [vmem:[#allocation10 + $0xe40] sm:$0xff]
    %v2351 = vld [vmem:[#allocation10 + $0xe48] sm:$0xff]
    %v2352 = vld [vmem:[#allocation10 + $0xe50] sm:$0xff]
    %v2353 = vld [vmem:[#allocation10 + $0xe58] sm:$0xff]
    %v2354 = vld [vmem:[#allocation10 + $0xe60] sm:$0xff]
    %v2355 = vld [vmem:[#allocation10 + $0xe68] sm:$0xff]
    %v2356 = vld [vmem:[#allocation10 + $0xe70] sm:$0xff]
    %v2357 = vld [vmem:[#allocation10 + $0xe78] sm:$0xff]
    %v2358 = vld [vmem:[#allocation10 + $0xe80] sm:$0xff]
    %v2359 = vld [vmem:[#allocation10 + $0xe88] sm:$0xff]
    %v2360 = vld [vmem:[#allocation10 + $0xe90] sm:$0xff]
    %v2361 = vld [vmem:[#allocation10 + $0xe98] sm:$0xff]
    %v2362 = vld [vmem:[#allocation10 + $0xea0] sm:$0xff]
    %v2363 = vld [vmem:[#allocation10 + $0xea8] sm:$0xff]
    %v2364 = vld [vmem:[#allocation10 + $0xeb0] sm:$0xff]
    %v2365 = vld [vmem:[#allocation10 + $0xeb8] sm:$0xff]
    %v2366 = vld [vmem:[#allocation10 + $0xec0] sm:$0xff]
    %v2367 = vld [vmem:[#allocation10 + $0xec8] sm:$0xff]
    %v2368 = vld [vmem:[#allocation10 + $0xed0] sm:$0xff]
    %v2369 = vld [vmem:[#allocation10 + $0xed8] sm:$0xff]
    %v2370 = vld [vmem:[#allocation10 + $0xee0] sm:$0xff]
    %v2371 = vld [vmem:[#allocation10 + $0xee8] sm:$0xff]
    %v2372 = vld [vmem:[#allocation10 + $0xef0] sm:$0xff]
    %v2373 = vld [vmem:[#allocation10 + $0xef8] sm:$0xff]
    %v2374 = vld [vmem:[#allocation10 + $0xf00] sm:$0xff]
    %v2375 = vld [vmem:[#allocation10 + $0xf08] sm:$0xff]
    %v2376 = vld [vmem:[#allocation10 + $0xf10] sm:$0xff]
    %v2377 = vld [vmem:[#allocation10 + $0xf18] sm:$0xff]
    %v2378 = vld [vmem:[#allocation10 + $0xf20] sm:$0xff]
    %v2379 = vld [vmem:[#allocation10 + $0xf28] sm:$0xff]
    %v2380 = vld [vmem:[#allocation10 + $0xf30] sm:$0xff]
    %v2381 = vld [vmem:[#allocation10 + $0xf38] sm:$0xff]
    %v2382 = vld [vmem:[#allocation10 + $0xf40] sm:$0xff]
    %v2383 = vld [vmem:[#allocation10 + $0xf48] sm:$0xff]
    %v2384 = vld [vmem:[#allocation10 + $0xf50] sm:$0xff]
    %v2385 = vld [vmem:[#allocation10 + $0xf58] sm:$0xff]
    %v2386 = vld [vmem:[#allocation10 + $0xf60] sm:$0xff]
    %v2387 = vld [vmem:[#allocation10 + $0xf68] sm:$0xff]
    %v2388 = vld [vmem:[#allocation10 + $0xf70] sm:$0xff]
    %v2389 = vld [vmem:[#allocation10 + $0xf78] sm:$0xff]
    %v2390 = vld [vmem:[#allocation10 + $0xf80] sm:$0xff]
    %v2391 = vld [vmem:[#allocation10 + $0xf88] sm:$0xff]
    %v2392 = vld [vmem:[#allocation10 + $0xf90] sm:$0xff]
    %v2393 = vld [vmem:[#allocation10 + $0xf98] sm:$0xff]
    %v2394 = vld [vmem:[#allocation10 + $0xfa0] sm:$0xff]
    %v2395 = vld [vmem:[#allocation10 + $0xfa8] sm:$0xff]
    %v2396 = vld [vmem:[#allocation10 + $0xfb0] sm:$0xff]
    %v2397 = vld [vmem:[#allocation10 + $0xfb8] sm:$0xff]
    %v2398 = vld [vmem:[#allocation10 + $0xfc0] sm:$0xff]
    %v2399 = vld [vmem:[#allocation10 + $0xfc8] sm:$0xff]
    %v2400 = vld [vmem:[#allocation10 + $0xfd0] sm:$0xff]
    %v2401 = vld [vmem:[#allocation10 + $0xfd8] sm:$0xff]
    %v2402 = vld [vmem:[#allocation10 + $0xfe0] sm:$0xff]
    %v2403 = vld [vmem:[#allocation10 + $0xfe8] sm:$0xff]
    %v2404 = vld [vmem:[#allocation10 + $0xff0] sm:$0xff]
    %v2405 = vld [vmem:[#allocation10 + $0xff8] sm:$0xff]
    %v2406 = vld [vmem:[#allocation11] sm:$0xf]
    %v2408 = vlaneseq
    %v2409 = vshrl.u32 %v2408, 7
    %v2410 = vsub.s32 0, %v2409
    %v2411 = vrot.slane %v2406, %v2410
    %v2412 = vlaneseq
    %v2413 = vshrl.u32 %v2412, 7
    %v2414 = vsub.s32 1, %v2413
    %v2415 = vrot.slane %v2406, %v2414
    %v2416 = vlaneseq
    %v2417 = vshrl.u32 %v2416, 7
    %v2418 = vsub.s32 2, %v2417
    %v2419 = vrot.slane %v2406, %v2418
    %v2420 = vlaneseq
    %v2421 = vshrl.u32 %v2420, 7
    %v2422 = vsub.s32 3, %v2421
    %v2423 = vrot.slane %v2406, %v2422
    %2428 = vmatprep.subr.mxu0 %v1955
    %2429 = vmatpush1.msra.mxu0 %v1954
    %2430 = vmatprep.subr.mxu0 %v1951
    %2431 = vmatpush1.msra.mxu0 %v1950
    %2432 = vmatprep.subr.mxu0 %v1947
    %2433 = vmatpush1.msra.mxu0 %v1946
    %2434 = vmatprep.subr.mxu0 %v1943
    %2435 = vmatpush1.msra.mxu0 %v1942
    %2436 = vmatprep.subr.mxu0 %v1939
    %2437 = vmatpush1.msra.mxu0 %v1938
    %2438 = vmatprep.subr.mxu0 %v1935
    %2439 = vmatpush1.msra.mxu0 %v1934
    %2440 = vmatprep.subr.mxu0 %v1931
    %2441 = vmatpush1.msra.mxu0 %v1930
    %2442 = vmatprep.subr.mxu0 %v1927
    %2443 = vmatpush1.msra.mxu0 %v1926
    %2444 = vmatprep.subr.mxu0 %v1923
    %2445 = vmatpush1.msra.mxu0 %v1922
    %2446 = vmatprep.subr.mxu0 %v1919
    %2447 = vmatpush1.msra.mxu0 %v1918
    %2448 = vmatprep.subr.mxu0 %v1915
    %2449 = vmatpush1.msra.mxu0 %v1914
    %2450 = vmatprep.subr.mxu0 %v1911
    %2451 = vmatpush1.msra.mxu0 %v1910
    %2452 = vmatprep.subr.mxu0 %v1907
    %2453 = vmatpush1.msra.mxu0 %v1906
    %2454 = vmatprep.subr.mxu0 %v1903
    %2455 = vmatpush1.msra.mxu0 %v1902
    %2456 = vmatprep.subr.mxu0 %v1899
    %2457 = vmatpush1.msra.mxu0 %v1898
    %2458 = vmatprep.subr.mxu0 %v1895
    %2459 = vmatpush1.msra.mxu0 %v1894
    %2460 = vmatprep.subr.mxu0 %v2019
    %2461 = vmatpush2.msra.mxu0 %v2018
    %2462 = vmatprep.subr.mxu0 %v2015
    %2463 = vmatpush2.msra.mxu0 %v2014
    %2464 = vmatprep.subr.mxu0 %v2011
    %2465 = vmatpush2.msra.mxu0 %v2010
    %2466 = vmatprep.subr.mxu0 %v2007
    %2467 = vmatpush2.msra.mxu0 %v2006
    %2468 = vmatprep.subr.mxu0 %v2003
    %2469 = vmatpush2.msra.mxu0 %v2002
    %2470 = vmatprep.subr.mxu0 %v1999
    %2471 = vmatpush2.msra.mxu0 %v1998
    %2472 = vmatprep.subr.mxu0 %v1995
    %2473 = vmatpush2.msra.mxu0 %v1994
    %2474 = vmatprep.subr.mxu0 %v1991
    %2475 = vmatpush2.msra.mxu0 %v1990
    %2476 = vmatprep.subr.mxu0 %v1987
    %2477 = vmatpush2.msra.mxu0 %v1986
    %2478 = vmatprep.subr.mxu0 %v1983
    %2479 = vmatpush2.msra.mxu0 %v1982
    %2480 = vmatprep.subr.mxu0 %v1979
    %2481 = vmatpush2.msra.mxu0 %v1978
    %2482 = vmatprep.subr.mxu0 %v1975
    %2483 = vmatpush2.msra.mxu0 %v1974
    %2484 = vmatprep.subr.mxu0 %v1971
    %2485 = vmatpush2.msra.mxu0 %v1970
    %2486 = vmatprep.subr.mxu0 %v1967
    %2487 = vmatpush2.msra.mxu0 %v1966
    %2488 = vmatprep.subr.mxu0 %v1963
    %2489 = vmatpush2.msra.mxu0 %v1962
    %2490 = vmatprep.subr.mxu0 %v1959
    %2491 = vmatpush2.msra.mxu0 %v1958
    %2492 = vmatprep.mubr.f32.mxu0 %v1296
    %2493 = vmatmul.mubr.f32.gmra.mxu0 %v1295
    %v2494 = vpop.f32.mrf.mxu0
    %v2495 = vadd.f32 %v2411, %v2494
    %v2496 = vpop.f32.mrf.mxu0
    %v2497 = vadd.f32 %v2415, %v2496
    %2498 = vdwg.mxu0
    %2499 = vmatprep.subr.mxu0 %v2083
    %2500 = vmatpush1.msra.mxu0 %v2082
    %2501 = vmatprep.subr.mxu0 %v2079
    %2502 = vmatpush1.msra.mxu0 %v2078
    %2503 = vmatprep.subr.mxu0 %v2075
    %2504 = vmatpush1.msra.mxu0 %v2074
    %2505 = vmatprep.subr.mxu0 %v2071
    %2506 = vmatpush1.msra.mxu0 %v2070
    %2507 = vmatprep.subr.mxu0 %v2067
    %2508 = vmatpush1.msra.mxu0 %v2066
    %2509 = vmatprep.subr.mxu0 %v2063
    %2510 = vmatpush1.msra.mxu0 %v2062
    %2511 = vmatprep.subr.mxu0 %v2059
    %2512 = vmatpush1.msra.mxu0 %v2058
    %2513 = vmatprep.subr.mxu0 %v2055
    %2514 = vmatpush1.msra.mxu0 %v2054
    %2515 = vmatprep.subr.mxu0 %v2051
    %2516 = vmatpush1.msra.mxu0 %v2050
    %2517 = vmatprep.subr.mxu0 %v2047
    %2518 = vmatpush1.msra.mxu0 %v2046
    %2519 = vmatprep.subr.mxu0 %v2043
    %2520 = vmatpush1.msra.mxu0 %v2042
    %2521 = vmatprep.subr.mxu0 %v2039
    %2522 = vmatpush1.msra.mxu0 %v2038
    %2523 = vmatprep.subr.mxu0 %v2035
    %2524 = vmatpush1.msra.mxu0 %v2034
    %2525 = vmatprep.subr.mxu0 %v2031
    %2526 = vmatpush1.msra.mxu0 %v2030
    %2527 = vmatprep.subr.mxu0 %v2027
    %2528 = vmatpush1.msra.mxu0 %v2026
    %2529 = vmatprep.subr.mxu0 %v2023
    %2530 = vmatpush1.msra.mxu0 %v2022
    %2531 = vmatprep.subr.mxu0 %v2147
    %2532 = vmatpush2.msra.mxu0 %v2146
    %2533 = vmatprep.subr.mxu0 %v2143
    %2534 = vmatpush2.msra.mxu0 %v2142
    %2535 = vmatprep.subr.mxu0 %v2139
    %2536 = vmatpush2.msra.mxu0 %v2138
    %2537 = vmatprep.subr.mxu0 %v2135
    %2538 = vmatpush2.msra.mxu0 %v2134
    %2539 = vmatprep.subr.mxu0 %v2131
    %2540 = vmatpush2.msra.mxu0 %v2130
    %2541 = vmatprep.subr.mxu0 %v2127
    %2542 = vmatpush2.msra.mxu0 %v2126
    %2543 = vmatprep.subr.mxu0 %v2123
    %2544 = vmatpush2.msra.mxu0 %v2122
    %2545 = vmatprep.subr.mxu0 %v2119
    %2546 = vmatpush2.msra.mxu0 %v2118
    %2547 = vmatprep.subr.mxu0 %v2115
    %2548 = vmatpush2.msra.mxu0 %v2114
    %2549 = vmatprep.subr.mxu0 %v2111
    %2550 = vmatpush2.msra.mxu0 %v2110
    %2551 = vmatprep.subr.mxu0 %v2107
    %2552 = vmatpush2.msra.mxu0 %v2106
    %2553 = vmatprep.subr.mxu0 %v2103
    %2554 = vmatpush2.msra.mxu0 %v2102
    %2555 = vmatprep.subr.mxu0 %v2099
    %2556 = vmatpush2.msra.mxu0 %v2098
    %2557 = vmatprep.subr.mxu0 %v2095
    %2558 = vmatpush2.msra.mxu0 %v2094
    %2559 = vmatprep.subr.mxu0 %v2091
    %2560 = vmatpush2.msra.mxu0 %v2090
    %2561 = vmatprep.subr.mxu0 %v2087
    %2562 = vmatpush2.msra.mxu0 %v2086
    %2563 = vmatprep.mubr.f32.mxu0 %v1495
    %2564 = vmatmul.mubr.f32.gmra.mxu0 %v1494
    %v2565 = vpop.f32.mrf.mxu0
    %v2566 = vadd.f32 %v2495, %v2565
    %v2567 = vpop.f32.mrf.mxu0
    %v2568 = vadd.f32 %v2497, %v2567
    %2569 = vdwg.mxu0
    %2570 = vmatprep.subr.mxu0 %v2211
    %2571 = vmatpush1.msra.mxu0 %v2210
    %2572 = vmatprep.subr.mxu0 %v2207
    %2573 = vmatpush1.msra.mxu0 %v2206
    %2574 = vmatprep.subr.mxu0 %v2203
    %2575 = vmatpush1.msra.mxu0 %v2202
    %2576 = vmatprep.subr.mxu0 %v2199
    %2577 = vmatpush1.msra.mxu0 %v2198
    %2578 = vmatprep.subr.mxu0 %v2195
    %2579 = vmatpush1.msra.mxu0 %v2194
    %2580 = vmatprep.subr.mxu0 %v2191
    %2581 = vmatpush1.msra.mxu0 %v2190
    %2582 = vmatprep.subr.mxu0 %v2187
    %2583 = vmatpush1.msra.mxu0 %v2186
    %2584 = vmatprep.subr.mxu0 %v2183
    %2585 = vmatpush1.msra.mxu0 %v2182
    %2586 = vmatprep.subr.mxu0 %v2179
    %2587 = vmatpush1.msra.mxu0 %v2178
    %2588 = vmatprep.subr.mxu0 %v2175
    %2589 = vmatpush1.msra.mxu0 %v2174
    %2590 = vmatprep.subr.mxu0 %v2171
    %2591 = vmatpush1.msra.mxu0 %v2170
    %2592 = vmatprep.subr.mxu0 %v2167
    %2593 = vmatpush1.msra.mxu0 %v2166
    %2594 = vmatprep.subr.mxu0 %v2163
    %2595 = vmatpush1.msra.mxu0 %v2162
    %2596 = vmatprep.subr.mxu0 %v2159
    %2597 = vmatpush1.msra.mxu0 %v2158
    %2598 = vmatprep.subr.mxu0 %v2155
    %2599 = vmatpush1.msra.mxu0 %v2154
    %2600 = vmatprep.subr.mxu0 %v2151
    %2601 = vmatpush1.msra.mxu0 %v2150
    %2602 = vmatprep.subr.mxu0 %v2275
    %2603 = vmatpush2.msra.mxu0 %v2274
    %2604 = vmatprep.subr.mxu0 %v2271
    %2605 = vmatpush2.msra.mxu0 %v2270
    %2606 = vmatprep.subr.mxu0 %v2267
    %2607 = vmatpush2.msra.mxu0 %v2266
    %2608 = vmatprep.subr.mxu0 %v2263
    %2609 = vmatpush2.msra.mxu0 %v2262
    %2610 = vmatprep.subr.mxu0 %v2259
    %2611 = vmatpush2.msra.mxu0 %v2258
    %2612 = vmatprep.subr.mxu0 %v2255
    %2613 = vmatpush2.msra.mxu0 %v2254
    %2614 = vmatprep.subr.mxu0 %v2251
    %2615 = vmatpush2.msra.mxu0 %v2250
    %2616 = vmatprep.subr.mxu0 %v2247
    %2617 = vmatpush2.msra.mxu0 %v2246
    %2618 = vmatprep.subr.mxu0 %v2243
    %2619 = vmatpush2.msra.mxu0 %v2242
    %2620 = vmatprep.subr.mxu0 %v2239
    %2621 = vmatpush2.msra.mxu0 %v2238
    %2622 = vmatprep.subr.mxu0 %v2235
    %2623 = vmatpush2.msra.mxu0 %v2234
    %2624 = vmatprep.subr.mxu0 %v2231
    %2625 = vmatpush2.msra.mxu0 %v2230
    %2626 = vmatprep.subr.mxu0 %v2227
    %2627 = vmatpush2.msra.mxu0 %v2226
    %2628 = vmatprep.subr.mxu0 %v2223
    %2629 = vmatpush2.msra.mxu0 %v2222
    %2630 = vmatprep.subr.mxu0 %v2219
    %2631 = vmatpush2.msra.mxu0 %v2218
    %2632 = vmatprep.subr.mxu0 %v2215
    %2633 = vmatpush2.msra.mxu0 %v2214
    %2634 = vmatprep.mubr.f32.mxu0 %v1694
    %2635 = vmatmul.mubr.f32.gmra.mxu0 %v1693
    %v2636 = vpop.f32.mrf.mxu0
    %v2637 = vadd.f32 %v2566, %v2636
    %v2638 = vpop.f32.mrf.mxu0
    %v2639 = vadd.f32 %v2568, %v2638
    %2640 = vdwg.mxu0
    %2641 = vmatprep.subr.mxu0 %v2339
    %2642 = vmatpush1.msra.mxu0 %v2338
    %2643 = vmatprep.subr.mxu0 %v2335
    %2644 = vmatpush1.msra.mxu0 %v2334
    %2645 = vmatprep.subr.mxu0 %v2331
    %2646 = vmatpush1.msra.mxu0 %v2330
    %2647 = vmatprep.subr.mxu0 %v2327
    %2648 = vmatpush1.msra.mxu0 %v2326
    %2649 = vmatprep.subr.mxu0 %v2323
    %2650 = vmatpush1.msra.mxu0 %v2322
    %2651 = vmatprep.subr.mxu0 %v2319
    %2652 = vmatpush1.msra.mxu0 %v2318
    %2653 = vmatprep.subr.mxu0 %v2315
    %2654 = vmatpush1.msra.mxu0 %v2314
    %2655 = vmatprep.subr.mxu0 %v2311
    %2656 = vmatpush1.msra.mxu0 %v2310
    %2657 = vmatprep.subr.mxu0 %v2307
    %2658 = vmatpush1.msra.mxu0 %v2306
    %2659 = vmatprep.subr.mxu0 %v2303
    %2660 = vmatpush1.msra.mxu0 %v2302
    %2661 = vmatprep.subr.mxu0 %v2299
    %2662 = vmatpush1.msra.mxu0 %v2298
    %2663 = vmatprep.subr.mxu0 %v2295
    %2664 = vmatpush1.msra.mxu0 %v2294
    %2665 = vmatprep.subr.mxu0 %v2291
    %2666 = vmatpush1.msra.mxu0 %v2290
    %2667 = vmatprep.subr.mxu0 %v2287
    %2668 = vmatpush1.msra.mxu0 %v2286
    %2669 = vmatprep.subr.mxu0 %v2283
    %2670 = vmatpush1.msra.mxu0 %v2282
    %2671 = vmatprep.subr.mxu0 %v2279
    %2672 = vmatpush1.msra.mxu0 %v2278
    %2673 = vmatprep.subr.mxu0 %v2403
    %2674 = vmatpush2.msra.mxu0 %v2402
    %2675 = vmatprep.subr.mxu0 %v2399
    %2676 = vmatpush2.msra.mxu0 %v2398
    %2677 = vmatprep.subr.mxu0 %v2395
    %2678 = vmatpush2.msra.mxu0 %v2394
    %2679 = vmatprep.subr.mxu0 %v2391
    %2680 = vmatpush2.msra.mxu0 %v2390
    %2681 = vmatprep.subr.mxu0 %v2387
    %2682 = vmatpush2.msra.mxu0 %v2386
    %2683 = vmatprep.subr.mxu0 %v2383
    %2684 = vmatpush2.msra.mxu0 %v2382
    %2685 = vmatprep.subr.mxu0 %v2379
    %2686 = vmatpush2.msra.mxu0 %v2378
    %2687 = vmatprep.subr.mxu0 %v2375
    %2688 = vmatpush2.msra.mxu0 %v2374
    %2689 = vmatprep.subr.mxu0 %v2371
    %2690 = vmatpush2.msra.mxu0 %v2370
    %2691 = vmatprep.subr.mxu0 %v2367
    %2692 = vmatpush2.msra.mxu0 %v2366
    %2693 = vmatprep.subr.mxu0 %v2363
    %2694 = vmatpush2.msra.mxu0 %v2362
    %2695 = vmatprep.subr.mxu0 %v2359
    %2696 = vmatpush2.msra.mxu0 %v2358
    %2697 = vmatprep.subr.mxu0 %v2355
    %2698 = vmatpush2.msra.mxu0 %v2354
    %2699 = vmatprep.subr.mxu0 %v2351
    %2700 = vmatpush2.msra.mxu0 %v2350
    %2701 = vmatprep.subr.mxu0 %v2347
    %2702 = vmatpush2.msra.mxu0 %v2346
    %2703 = vmatprep.subr.mxu0 %v2343
    %2704 = vmatpush2.msra.mxu0 %v2342
    %2705 = vmatprep.mubr.f32.mxu0 %v1893
    %2706 = vmatmul.mubr.f32.gmra.mxu0 %v1892
    %v2707 = vpop.f32.mrf.mxu0
    %v2708 = vadd.f32 %v2637, %v2707
    %v2709 = vpop.f32.mrf.mxu0
    %v2710 = vadd.f32 %v2639, %v2709
    %2711 = vdwg.mxu0
    %2712 = vmatprep.subr.mxu0 %v1957
    %2713 = vmatpush1.msra.mxu0 %v1956
    %2714 = vmatprep.subr.mxu0 %v1953
    %2715 = vmatpush1.msra.mxu0 %v1952
    %2716 = vmatprep.subr.mxu0 %v1949
    %2717 = vmatpush1.msra.mxu0 %v1948
    %2718 = vmatprep.subr.mxu0 %v1945
    %2719 = vmatpush1.msra.mxu0 %v1944
    %2720 = vmatprep.subr.mxu0 %v1941
    %2721 = vmatpush1.msra.mxu0 %v1940
    %2722 = vmatprep.subr.mxu0 %v1937
    %2723 = vmatpush1.msra.mxu0 %v1936
    %2724 = vmatprep.subr.mxu0 %v1933
    %2725 = vmatpush1.msra.mxu0 %v1932
    %2726 = vmatprep.subr.mxu0 %v1929
    %2727 = vmatpush1.msra.mxu0 %v1928
    %2728 = vmatprep.subr.mxu0 %v1925
    %2729 = vmatpush1.msra.mxu0 %v1924
    %2730 = vmatprep.subr.mxu0 %v1921
    %2731 = vmatpush1.msra.mxu0 %v1920
    %2732 = vmatprep.subr.mxu0 %v1917
    %2733 = vmatpush1.msra.mxu0 %v1916
    %2734 = vmatprep.subr.mxu0 %v1913
    %2735 = vmatpush1.msra.mxu0 %v1912
    %2736 = vmatprep.subr.mxu0 %v1909
    %2737 = vmatpush1.msra.mxu0 %v1908
    %2738 = vmatprep.subr.mxu0 %v1905
    %2739 = vmatpush1.msra.mxu0 %v1904
    %2740 = vmatprep.subr.mxu0 %v1901
    %2741 = vmatpush1.msra.mxu0 %v1900
    %2742 = vmatprep.subr.mxu0 %v1897
    %2743 = vmatpush1.msra.mxu0 %v1896
    %2744 = vmatprep.subr.mxu0 %v2021
    %2745 = vmatpush2.msra.mxu0 %v2020
    %2746 = vmatprep.subr.mxu0 %v2017
    %2747 = vmatpush2.msra.mxu0 %v2016
    %2748 = vmatprep.subr.mxu0 %v2013
    %2749 = vmatpush2.msra.mxu0 %v2012
    %2750 = vmatprep.subr.mxu0 %v2009
    %2751 = vmatpush2.msra.mxu0 %v2008
    %2752 = vmatprep.subr.mxu0 %v2005
    %2753 = vmatpush2.msra.mxu0 %v2004
    %2754 = vmatprep.subr.mxu0 %v2001
    %2755 = vmatpush2.msra.mxu0 %v2000
    %2756 = vmatprep.subr.mxu0 %v1997
    %2757 = vmatpush2.msra.mxu0 %v1996
    %2758 = vmatprep.subr.mxu0 %v1993
    %2759 = vmatpush2.msra.mxu0 %v1992
    %2760 = vmatprep.subr.mxu0 %v1989
    %2761 = vmatpush2.msra.mxu0 %v1988
    %2762 = vmatprep.subr.mxu0 %v1985
    %2763 = vmatpush2.msra.mxu0 %v1984
    %2764 = vmatprep.subr.mxu0 %v1981
    %2765 = vmatpush2.msra.mxu0 %v1980
    %2766 = vmatprep.subr.mxu0 %v1977
    %2767 = vmatpush2.msra.mxu0 %v1976
    %2768 = vmatprep.subr.mxu0 %v1973
    %2769 = vmatpush2.msra.mxu0 %v1972
    %2770 = vmatprep.subr.mxu0 %v1969
    %2771 = vmatpush2.msra.mxu0 %v1968
    %2772 = vmatprep.subr.mxu0 %v1965
    %2773 = vmatpush2.msra.mxu0 %v1964
    %2774 = vmatprep.subr.mxu0 %v1961
    %2775 = vmatpush2.msra.mxu0 %v1960
    %2776 = vmatprep.mubr.f32.mxu0 %v1296
    %2777 = vmatmul.mubr.f32.gmra.mxu0 %v1295
    %v2778 = vpop.f32.mrf.mxu0
    %v2779 = vadd.f32 %v2419, %v2778
    %v2780 = vpop.f32.mrf.mxu0
    %v2781 = vadd.f32 %v2423, %v2780
    %2782 = vdwg.mxu0
    %2783 = vmatprep.subr.mxu0 %v2085
    %2784 = vmatpush1.msra.mxu0 %v2084
    %2785 = vmatprep.subr.mxu0 %v2081
    %2786 = vmatpush1.msra.mxu0 %v2080
    %2787 = vmatprep.subr.mxu0 %v2077
    %2788 = vmatpush1.msra.mxu0 %v2076
    %2789 = vmatprep.subr.mxu0 %v2073
    %2790 = vmatpush1.msra.mxu0 %v2072
    %2791 = vmatprep.subr.mxu0 %v2069
    %2792 = vmatpush1.msra.mxu0 %v2068
    %2793 = vmatprep.subr.mxu0 %v2065
    %2794 = vmatpush1.msra.mxu0 %v2064
    %2795 = vmatprep.subr.mxu0 %v2061
    %2796 = vmatpush1.msra.mxu0 %v2060
    %2797 = vmatprep.subr.mxu0 %v2057
    %2798 = vmatpush1.msra.mxu0 %v2056
    %2799 = vmatprep.subr.mxu0 %v2053
    %2800 = vmatpush1.msra.mxu0 %v2052
    %2801 = vmatprep.subr.mxu0 %v2049
    %2802 = vmatpush1.msra.mxu0 %v2048
    %2803 = vmatprep.subr.mxu0 %v2045
    %2804 = vmatpush1.msra.mxu0 %v2044
    %2805 = vmatprep.subr.mxu0 %v2041
    %2806 = vmatpush1.msra.mxu0 %v2040
    %2807 = vmatprep.subr.mxu0 %v2037
    %2808 = vmatpush1.msra.mxu0 %v2036
    %2809 = vmatprep.subr.mxu0 %v2033
    %2810 = vmatpush1.msra.mxu0 %v2032
    %2811 = vmatprep.subr.mxu0 %v2029
    %2812 = vmatpush1.msra.mxu0 %v2028
    %2813 = vmatprep.subr.mxu0 %v2025
    %2814 = vmatpush1.msra.mxu0 %v2024
    %2815 = vmatprep.subr.mxu0 %v2149
    %2816 = vmatpush2.msra.mxu0 %v2148
    %2817 = vmatprep.subr.mxu0 %v2145
    %2818 = vmatpush2.msra.mxu0 %v2144
    %2819 = vmatprep.subr.mxu0 %v2141
    %2820 = vmatpush2.msra.mxu0 %v2140
    %2821 = vmatprep.subr.mxu0 %v2137
    %2822 = vmatpush2.msra.mxu0 %v2136
    %2823 = vmatprep.subr.mxu0 %v2133
    %2824 = vmatpush2.msra.mxu0 %v2132
    %2825 = vmatprep.subr.mxu0 %v2129
    %2826 = vmatpush2.msra.mxu0 %v2128
    %2827 = vmatprep.subr.mxu0 %v2125
    %2828 = vmatpush2.msra.mxu0 %v2124
    %2829 = vmatprep.subr.mxu0 %v2121
    %2830 = vmatpush2.msra.mxu0 %v2120
    %2831 = vmatprep.subr.mxu0 %v2117
    %2832 = vmatpush2.msra.mxu0 %v2116
    %2833 = vmatprep.subr.mxu0 %v2113
    %2834 = vmatpush2.msra.mxu0 %v2112
    %2835 = vmatprep.subr.mxu0 %v2109
    %2836 = vmatpush2.msra.mxu0 %v2108
    %2837 = vmatprep.subr.mxu0 %v2105
    %2838 = vmatpush2.msra.mxu0 %v2104
    %2839 = vmatprep.subr.mxu0 %v2101
    %2840 = vmatpush2.msra.mxu0 %v2100
    %2841 = vmatprep.subr.mxu0 %v2097
    %2842 = vmatpush2.msra.mxu0 %v2096
    %2843 = vmatprep.subr.mxu0 %v2093
    %2844 = vmatpush2.msra.mxu0 %v2092
    %2845 = vmatprep.subr.mxu0 %v2089
    %2846 = vmatpush2.msra.mxu0 %v2088
    %2847 = vmatprep.mubr.f32.mxu0 %v1495
    %2848 = vmatmul.mubr.f32.gmra.mxu0 %v1494
    %v2849 = vpop.f32.mrf.mxu0
    %v2850 = vadd.f32 %v2779, %v2849
    %v2851 = vpop.f32.mrf.mxu0
    %v2852 = vadd.f32 %v2781, %v2851
    %2853 = vdwg.mxu0
    %2854 = vmatprep.subr.mxu0 %v2213
    %2855 = vmatpush1.msra.mxu0 %v2212
    %2856 = vmatprep.subr.mxu0 %v2209
    %2857 = vmatpush1.msra.mxu0 %v2208
    %2858 = vmatprep.subr.mxu0 %v2205
    %2859 = vmatpush1.msra.mxu0 %v2204
    %2860 = vmatprep.subr.mxu0 %v2201
    %2861 = vmatpush1.msra.mxu0 %v2200
    %2862 = vmatprep.subr.mxu0 %v2197
    %2863 = vmatpush1.msra.mxu0 %v2196
    %2864 = vmatprep.subr.mxu0 %v2193
    %2865 = vmatpush1.msra.mxu0 %v2192
    %2866 = vmatprep.subr.mxu0 %v2189
    %2867 = vmatpush1.msra.mxu0 %v2188
    %2868 = vmatprep.subr.mxu0 %v2185
    %2869 = vmatpush1.msra.mxu0 %v2184
    %2870 = vmatprep.subr.mxu0 %v2181
    %2871 = vmatpush1.msra.mxu0 %v2180
    %2872 = vmatprep.subr.mxu0 %v2177
    %2873 = vmatpush1.msra.mxu0 %v2176
    %2874 = vmatprep.subr.mxu0 %v2173
    %2875 = vmatpush1.msra.mxu0 %v2172
    %2876 = vmatprep.subr.mxu0 %v2169
    %2877 = vmatpush1.msra.mxu0 %v2168
    %2878 = vmatprep.subr.mxu0 %v2165
    %2879 = vmatpush1.msra.mxu0 %v2164
    %2880 = vmatprep.subr.mxu0 %v2161
    %2881 = vmatpush1.msra.mxu0 %v2160
    %2882 = vmatprep.subr.mxu0 %v2157
    %2883 = vmatpush1.msra.mxu0 %v2156
    %2884 = vmatprep.subr.mxu0 %v2153
    %2885 = vmatpush1.msra.mxu0 %v2152
    %2886 = vmatprep.subr.mxu0 %v2277
    %2887 = vmatpush2.msra.mxu0 %v2276
    %2888 = vmatprep.subr.mxu0 %v2273
    %2889 = vmatpush2.msra.mxu0 %v2272
    %2890 = vmatprep.subr.mxu0 %v2269
    %2891 = vmatpush2.msra.mxu0 %v2268
    %2892 = vmatprep.subr.mxu0 %v2265
    %2893 = vmatpush2.msra.mxu0 %v2264
    %2894 = vmatprep.subr.mxu0 %v2261
    %2895 = vmatpush2.msra.mxu0 %v2260
    %2896 = vmatprep.subr.mxu0 %v2257
    %2897 = vmatpush2.msra.mxu0 %v2256
    %2898 = vmatprep.subr.mxu0 %v2253
    %2899 = vmatpush2.msra.mxu0 %v2252
    %2900 = vmatprep.subr.mxu0 %v2249
    %2901 = vmatpush2.msra.mxu0 %v2248
    %2902 = vmatprep.subr.mxu0 %v2245
    %2903 = vmatpush2.msra.mxu0 %v2244
    %2904 = vmatprep.subr.mxu0 %v2241
    %2905 = vmatpush2.msra.mxu0 %v2240
    %2906 = vmatprep.subr.mxu0 %v2237
    %2907 = vmatpush2.msra.mxu0 %v2236
    %2908 = vmatprep.subr.mxu0 %v2233
    %2909 = vmatpush2.msra.mxu0 %v2232
    %2910 = vmatprep.subr.mxu0 %v2229
    %2911 = vmatpush2.msra.mxu0 %v2228
    %2912 = vmatprep.subr.mxu0 %v2225
    %2913 = vmatpush2.msra.mxu0 %v2224
    %2914 = vmatprep.subr.mxu0 %v2221
    %2915 = vmatpush2.msra.mxu0 %v2220
    %2916 = vmatprep.subr.mxu0 %v2217
    %2917 = vmatpush2.msra.mxu0 %v2216
    %2918 = vmatprep.mubr.f32.mxu0 %v1694
    %2919 = vmatmul.mubr.f32.gmra.mxu0 %v1693
    %v2920 = vpop.f32.mrf.mxu0
    %v2921 = vadd.f32 %v2850, %v2920
    %v2922 = vpop.f32.mrf.mxu0
    %v2923 = vadd.f32 %v2852, %v2922
    %2924 = vdwg.mxu0
    %2925 = vmatprep.subr.mxu0 %v2341
    %2926 = vmatpush1.msra.mxu0 %v2340
    %2927 = vmatprep.subr.mxu0 %v2337
    %2928 = vmatpush1.msra.mxu0 %v2336
    %2929 = vmatprep.subr.mxu0 %v2333
    %2930 = vmatpush1.msra.mxu0 %v2332
    %2931 = vmatprep.subr.mxu0 %v2329
    %2932 = vmatpush1.msra.mxu0 %v2328
    %2933 = vmatprep.subr.mxu0 %v2325
    %2934 = vmatpush1.msra.mxu0 %v2324
    %2935 = vmatprep.subr.mxu0 %v2321
    %2936 = vmatpush1.msra.mxu0 %v2320
    %2937 = vmatprep.subr.mxu0 %v2317
    %2938 = vmatpush1.msra.mxu0 %v2316
    %2939 = vmatprep.subr.mxu0 %v2313
    %2940 = vmatpush1.msra.mxu0 %v2312
    %2941 = vmatprep.subr.mxu0 %v2309
    %2942 = vmatpush1.msra.mxu0 %v2308
    %2943 = vmatprep.subr.mxu0 %v2305
    %2944 = vmatpush1.msra.mxu0 %v2304
    %2945 = vmatprep.subr.mxu0 %v2301
    %2946 = vmatpush1.msra.mxu0 %v2300
    %2947 = vmatprep.subr.mxu0 %v2297
    %2948 = vmatpush1.msra.mxu0 %v2296
    %2949 = vmatprep.subr.mxu0 %v2293
    %2950 = vmatpush1.msra.mxu0 %v2292
    %2951 = vmatprep.subr.mxu0 %v2289
    %2952 = vmatpush1.msra.mxu0 %v2288
    %2953 = vmatprep.subr.mxu0 %v2285
    %2954 = vmatpush1.msra.mxu0 %v2284
    %2955 = vmatprep.subr.mxu0 %v2281
    %2956 = vmatpush1.msra.mxu0 %v2280
    %2957 = vmatprep.subr.mxu0 %v2405
    %2958 = vmatpush2.msra.mxu0 %v2404
    %2959 = vmatprep.subr.mxu0 %v2401
    %2960 = vmatpush2.msra.mxu0 %v2400
    %2961 = vmatprep.subr.mxu0 %v2397
    %2962 = vmatpush2.msra.mxu0 %v2396
    %2963 = vmatprep.subr.mxu0 %v2393
    %2964 = vmatpush2.msra.mxu0 %v2392
    %2965 = vmatprep.subr.mxu0 %v2389
    %2966 = vmatpush2.msra.mxu0 %v2388
    %2967 = vmatprep.subr.mxu0 %v2385
    %2968 = vmatpush2.msra.mxu0 %v2384
    %2969 = vmatprep.subr.mxu0 %v2381
    %2970 = vmatpush2.msra.mxu0 %v2380
    %2971 = vmatprep.subr.mxu0 %v2377
    %2972 = vmatpush2.msra.mxu0 %v2376
    %2973 = vmatprep.subr.mxu0 %v2373
    %2974 = vmatpush2.msra.mxu0 %v2372
    %2975 = vmatprep.subr.mxu0 %v2369
    %2976 = vmatpush2.msra.mxu0 %v2368
    %2977 = vmatprep.subr.mxu0 %v2365
    %2978 = vmatpush2.msra.mxu0 %v2364
    %2979 = vmatprep.subr.mxu0 %v2361
    %2980 = vmatpush2.msra.mxu0 %v2360
    %2981 = vmatprep.subr.mxu0 %v2357
    %2982 = vmatpush2.msra.mxu0 %v2356
    %2983 = vmatprep.subr.mxu0 %v2353
    %2984 = vmatpush2.msra.mxu0 %v2352
    %2985 = vmatprep.subr.mxu0 %v2349
    %2986 = vmatpush2.msra.mxu0 %v2348
    %2987 = vmatprep.subr.mxu0 %v2345
    %2988 = vmatpush2.msra.mxu0 %v2344
    %2989 = vmatprep.mubr.f32.mxu0 %v1893
    %2990 = vmatmul.mubr.f32.gmra.mxu0 %v1892
    %v2991 = vpop.f32.mrf.mxu0
    %v2992 = vadd.f32 %v2921, %v2991
    %v2993 = vpop.f32.mrf.mxu0
    %v2994 = vadd.f32 %v2923, %v2993
    %2995 = vdwg.mxu0
    %v2996 = vtanh.pop %v2708
    %v2997 = vtanh.pop %v2710
    %v2998 = vtanh.pop %v2992
    %v2999 = vtanh.pop %v2994
    %v3000 = vld [vmem:[#allocation13] sm:$0xf]
    %v3001 = vld [vmem:[#allocation14] sm:$0xf]
    %v3002 = vrot.slane %v2996, 4
    %v3003 = vadd.f32 %v2996, %v3002
    %v3004 = vrot.slane %v3003, 2
    %v3005 = vadd.f32 %v3003, %v3004
    %v3006 = vrot.slane %v3005, 1
    %v3007 = vadd.f32 %v3005, %v3006
    %v3008 = vrot.slane %v2997, 4
    %v3009 = vadd.f32 %v2997, %v3008
    %v3010 = vrot.slane %v3009, 2
    %v3011 = vadd.f32 %v3009, %v3010
    %v3012 = vrot.slane %v3011, 1
    %v3013 = vadd.f32 %v3011, %v3012
    %v3014 = vrot.slane %v2998, 4
    %v3015 = vadd.f32 %v2998, %v3014
    %v3016 = vrot.slane %v3015, 2
    %v3017 = vadd.f32 %v3015, %v3016
    %v3018 = vrot.slane %v3017, 1
    %v3019 = vadd.f32 %v3017, %v3018
    %v3020 = vrot.slane %v2999, 4
    %v3021 = vadd.f32 %v2999, %v3020
    %v3022 = vrot.slane %v3021, 2
    %v3023 = vadd.f32 %v3021, %v3022
    %v3024 = vrot.slane %v3023, 1
    %v3025 = vadd.f32 %v3023, %v3024
    %v3026 = vrcp.pop 8.0
    %v3027 = vmul.f32 %v3007, %v3026
    %v3028 = vmul.f32 %v3013, %v3026
    %v3029 = vmul.f32 %v3019, %v3026
    %v3030 = vmul.f32 %v3025, %v3026
    %v3031 = vsub.f32 %v2996, %v3027
    %v3032 = vsub.f32 %v2997, %v3028
    %v3033 = vsub.f32 %v2998, %v3029
    %v3034 = vsub.f32 %v2999, %v3030
    %v3035 = vmul.f32 %v3031, %v3031
    %v3036 = vmul.f32 %v3032, %v3032
    %v3037 = vmul.f32 %v3033, %v3033
    %v3038 = vmul.f32 %v3034, %v3034
    %v3039 = vrot.slane %v3035, 4
    %v3040 = vadd.f32 %v3035, %v3039
    %v3041 = vrot.slane %v3040, 2
    %v3042 = vadd.f32 %v3040, %v3041
    %v3043 = vrot.slane %v3042, 1
    %v3044 = vadd.f32 %v3042, %v3043
    %v3045 = vrot.slane %v3036, 4
    %v3046 = vadd.f32 %v3036, %v3045
    %v3047 = vrot.slane %v3046, 2
    %v3048 = vadd.f32 %v3046, %v3047
    %v3049 = vrot.slane %v3048, 1
    %v3050 = vadd.f32 %v3048, %v3049
    %v3051 = vrot.slane %v3037, 4
    %v3052 = vadd.f32 %v3037, %v3051
    %v3053 = vrot.slane %v3052, 2
    %v3054 = vadd.f32 %v3052, %v3053
    %v3055 = vrot.slane %v3054, 1
    %v3056 = vadd.f32 %v3054, %v3055
    %v3057 = vrot.slane %v3038, 4
    %v3058 = vadd.f32 %v3038, %v3057
    %v3059 = vrot.slane %v3058, 2
    %v3060 = vadd.f32 %v3058, %v3059
    %v3061 = vrot.slane %v3060, 1
    %v3062 = vadd.f32 %v3060, %v3061
    %v3063 = vmul.f32 %v3044, %v3026
    %v3064 = vmul.f32 %v3050, %v3026
    %v3065 = vmul.f32 %v3056, %v3026
    %v3066 = vmul.f32 %v3062, %v3026
    %v3067 = vadd.f32 %v3063, 1e-05
    %v3068 = vadd.f32 %v3064, 1e-05
    %v3069 = vadd.f32 %v3065, 1e-05
    %v3070 = vadd.f32 %v3066, 1e-05
    %v3071 = vrsqrt.pop %v3067
    %v3072 = vrsqrt.pop %v3068
    %v3073 = vrsqrt.pop %v3069
    %v3074 = vrsqrt.pop %v3070
    %v3075 = vmul.f32 %v3031, %v3071
    %v3076 = vmul.f32 %v3032, %v3072
    %v3077 = vmul.f32 %v3033, %v3073
    %v3078 = vmul.f32 %v3034, %v3074
    %v3080 = vlaneseq
    %v3081 = vshrl.u32 %v3080, 7
    %v3082 = vsub.s32 0, %v3081
    %v3083 = vrot.slane %v3000, %v3082
    %v3084 = vlaneseq
    %v3085 = vshrl.u32 %v3084, 7
    %v3086 = vsub.s32 1, %v3085
    %v3087 = vrot.slane %v3000, %v3086
    %v3088 = vlaneseq
    %v3089 = vshrl.u32 %v3088, 7
    %v3090 = vsub.s32 2, %v3089
    %v3091 = vrot.slane %v3000, %v3090
    %v3092 = vlaneseq
    %v3093 = vshrl.u32 %v3092, 7
    %v3094 = vsub.s32 3, %v3093
    %v3095 = vrot.slane %v3000, %v3094
    %v3100 = vmul.f32 %v3075, %v3083
    %v3101 = vmul.f32 %v3076, %v3087
    %v3102 = vmul.f32 %v3077, %v3091
    %v3103 = vmul.f32 %v3078, %v3095
    %v3105 = vlaneseq
    %v3106 = vshrl.u32 %v3105, 7
    %v3107 = vsub.s32 0, %v3106
    %v3108 = vrot.slane %v3001, %v3107
    %v3109 = vlaneseq
    %v3110 = vshrl.u32 %v3109, 7
    %v3111 = vsub.s32 1, %v3110
    %v3112 = vrot.slane %v3001, %v3111
    %v3113 = vlaneseq
    %v3114 = vshrl.u32 %v3113, 7
    %v3115 = vsub.s32 2, %v3114
    %v3116 = vrot.slane %v3001, %v3115
    %v3117 = vlaneseq
    %v3118 = vshrl.u32 %v3117, 7
    %v3119 = vsub.s32 3, %v3118
    %v3120 = vrot.slane %v3001, %v3119
    %v3125 = vadd.f32 %v3100, %v3108
    %v3126 = vadd.f32 %v3101, %v3112
    %v3127 = vadd.f32 %v3102, %v3116
    %v3128 = vadd.f32 %v3103, %v3120
    %v3129 = vld [vmem:[#allocation16] sm:$0xff]
    %v3130 = vld [vmem:[#allocation16 + $0x8] sm:$0xff]
    %v3131 = vld [vmem:[#allocation16 + $0x10] sm:$0xff]
    %v3132 = vld [vmem:[#allocation16 + $0x18] sm:$0xff]
    %v3133 = vld [vmem:[#allocation16 + $0x20] sm:$0xff]
    %v3134 = vld [vmem:[#allocation16 + $0x28] sm:$0xff]
    %v3135 = vld [vmem:[#allocation16 + $0x30] sm:$0xff]
    %v3136 = vld [vmem:[#allocation16 + $0x38] sm:$0xff]
    %v3137 = vld [vmem:[#allocation16 + $0x40] sm:$0xff]
    %v3138 = vld [vmem:[#allocation16 + $0x48] sm:$0xff]
    %v3139 = vld [vmem:[#allocation16 + $0x50] sm:$0xff]
    %v3140 = vld [vmem:[#allocation16 + $0x58] sm:$0xff]
    %v3141 = vld [vmem:[#allocation16 + $0x60] sm:$0xff]
    %v3142 = vld [vmem:[#allocation16 + $0x68] sm:$0xff]
    %v3143 = vld [vmem:[#allocation16 + $0x70] sm:$0xff]
    %v3144 = vld [vmem:[#allocation16 + $0x78] sm:$0xff]
    %v3145 = vld [vmem:[#allocation16 + $0x80] sm:$0xff]
    %v3146 = vld [vmem:[#allocation16 + $0x88] sm:$0xff]
    %v3147 = vld [vmem:[#allocation16 + $0x90] sm:$0xff]
    %v3148 = vld [vmem:[#allocation16 + $0x98] sm:$0xff]
    %v3149 = vld [vmem:[#allocation16 + $0xa0] sm:$0xff]
    %v3150 = vld [vmem:[#allocation16 + $0xa8] sm:$0xff]
    %v3151 = vld [vmem:[#allocation16 + $0xb0] sm:$0xff]
    %v3152 = vld [vmem:[#allocation16 + $0xb8] sm:$0xff]
    %v3153 = vld [vmem:[#allocation16 + $0xc0] sm:$0xff]
    %v3154 = vld [vmem:[#allocation16 + $0xc8] sm:$0xff]
    %v3155 = vld [vmem:[#allocation16 + $0xd0] sm:$0xff]
    %v3156 = vld [vmem:[#allocation16 + $0xd8] sm:$0xff]
    %v3157 = vld [vmem:[#allocation16 + $0xe0] sm:$0xff]
    %v3158 = vld [vmem:[#allocation16 + $0xe8] sm:$0xff]
    %v3159 = vld [vmem:[#allocation16 + $0xf0] sm:$0xff]
    %v3160 = vld [vmem:[#allocation16 + $0xf8] sm:$0xff]
    %v3161 = vld [vmem:[#allocation16 + $0x100] sm:$0xff]
    %v3162 = vld [vmem:[#allocation16 + $0x108] sm:$0xff]
    %v3163 = vld [vmem:[#allocation16 + $0x110] sm:$0xff]
    %v3164 = vld [vmem:[#allocation16 + $0x118] sm:$0xff]
    %v3165 = vld [vmem:[#allocation16 + $0x120] sm:$0xff]
    %v3166 = vld [vmem:[#allocation16 + $0x128] sm:$0xff]
    %v3167 = vld [vmem:[#allocation16 + $0x130] sm:$0xff]
    %v3168 = vld [vmem:[#allocation16 + $0x138] sm:$0xff]
    %v3169 = vld [vmem:[#allocation16 + $0x140] sm:$0xff]
    %v3170 = vld [vmem:[#allocation16 + $0x148] sm:$0xff]
    %v3171 = vld [vmem:[#allocation16 + $0x150] sm:$0xff]
    %v3172 = vld [vmem:[#allocation16 + $0x158] sm:$0xff]
    %v3173 = vld [vmem:[#allocation16 + $0x160] sm:$0xff]
    %v3174 = vld [vmem:[#allocation16 + $0x168] sm:$0xff]
    %v3175 = vld [vmem:[#allocation16 + $0x170] sm:$0xff]
    %v3176 = vld [vmem:[#allocation16 + $0x178] sm:$0xff]
    %v3177 = vld [vmem:[#allocation16 + $0x180] sm:$0xff]
    %v3178 = vld [vmem:[#allocation16 + $0x188] sm:$0xff]
    %v3179 = vld [vmem:[#allocation16 + $0x190] sm:$0xff]
    %v3180 = vld [vmem:[#allocation16 + $0x198] sm:$0xff]
    %v3181 = vld [vmem:[#allocation16 + $0x1a0] sm:$0xff]
    %v3182 = vld [vmem:[#allocation16 + $0x1a8] sm:$0xff]
    %v3183 = vld [vmem:[#allocation16 + $0x1b0] sm:$0xff]
    %v3184 = vld [vmem:[#allocation16 + $0x1b8] sm:$0xff]
    %v3185 = vld [vmem:[#allocation16 + $0x1c0] sm:$0xff]
    %v3186 = vld [vmem:[#allocation16 + $0x1c8] sm:$0xff]
    %v3187 = vld [vmem:[#allocation16 + $0x1d0] sm:$0xff]
    %v3188 = vld [vmem:[#allocation16 + $0x1d8] sm:$0xff]
    %v3189 = vld [vmem:[#allocation16 + $0x1e0] sm:$0xff]
    %v3190 = vld [vmem:[#allocation16 + $0x1e8] sm:$0xff]
    %v3191 = vld [vmem:[#allocation16 + $0x1f0] sm:$0xff]
    %v3192 = vld [vmem:[#allocation16 + $0x1f8] sm:$0xff]
    %v3193 = vld [vmem:[#allocation16 + $0x200] sm:$0xff]
    %v3194 = vld [vmem:[#allocation16 + $0x208] sm:$0xff]
    %v3195 = vld [vmem:[#allocation16 + $0x210] sm:$0xff]
    %v3196 = vld [vmem:[#allocation16 + $0x218] sm:$0xff]
    %v3197 = vld [vmem:[#allocation16 + $0x220] sm:$0xff]
    %v3198 = vld [vmem:[#allocation16 + $0x228] sm:$0xff]
    %v3199 = vld [vmem:[#allocation16 + $0x230] sm:$0xff]
    %v3200 = vld [vmem:[#allocation16 + $0x238] sm:$0xff]
    %v3201 = vld [vmem:[#allocation16 + $0x240] sm:$0xff]
    %v3202 = vld [vmem:[#allocation16 + $0x248] sm:$0xff]
    %v3203 = vld [vmem:[#allocation16 + $0x250] sm:$0xff]
    %v3204 = vld [vmem:[#allocation16 + $0x258] sm:$0xff]
    %v3205 = vld [vmem:[#allocation16 + $0x260] sm:$0xff]
    %v3206 = vld [vmem:[#allocation16 + $0x268] sm:$0xff]
    %v3207 = vld [vmem:[#allocation16 + $0x270] sm:$0xff]
    %v3208 = vld [vmem:[#allocation16 + $0x278] sm:$0xff]
    %v3209 = vld [vmem:[#allocation16 + $0x280] sm:$0xff]
    %v3210 = vld [vmem:[#allocation16 + $0x288] sm:$0xff]
    %v3211 = vld [vmem:[#allocation16 + $0x290] sm:$0xff]
    %v3212 = vld [vmem:[#allocation16 + $0x298] sm:$0xff]
    %v3213 = vld [vmem:[#allocation16 + $0x2a0] sm:$0xff]
    %v3214 = vld [vmem:[#allocation16 + $0x2a8] sm:$0xff]
    %v3215 = vld [vmem:[#allocation16 + $0x2b0] sm:$0xff]
    %v3216 = vld [vmem:[#allocation16 + $0x2b8] sm:$0xff]
    %v3217 = vld [vmem:[#allocation16 + $0x2c0] sm:$0xff]
    %v3218 = vld [vmem:[#allocation16 + $0x2c8] sm:$0xff]
    %v3219 = vld [vmem:[#allocation16 + $0x2d0] sm:$0xff]
    %v3220 = vld [vmem:[#allocation16 + $0x2d8] sm:$0xff]
    %v3221 = vld [vmem:[#allocation16 + $0x2e0] sm:$0xff]
    %v3222 = vld [vmem:[#allocation16 + $0x2e8] sm:$0xff]
    %v3223 = vld [vmem:[#allocation16 + $0x2f0] sm:$0xff]
    %v3224 = vld [vmem:[#allocation16 + $0x2f8] sm:$0xff]
    %v3225 = vld [vmem:[#allocation16 + $0x300] sm:$0xff]
    %v3226 = vld [vmem:[#allocation16 + $0x308] sm:$0xff]
    %v3227 = vld [vmem:[#allocation16 + $0x310] sm:$0xff]
    %v3228 = vld [vmem:[#allocation16 + $0x318] sm:$0xff]
    %v3229 = vld [vmem:[#allocation16 + $0x320] sm:$0xff]
    %v3230 = vld [vmem:[#allocation16 + $0x328] sm:$0xff]
    %v3231 = vld [vmem:[#allocation16 + $0x330] sm:$0xff]
    %v3232 = vld [vmem:[#allocation16 + $0x338] sm:$0xff]
    %v3233 = vld [vmem:[#allocation16 + $0x340] sm:$0xff]
    %v3234 = vld [vmem:[#allocation16 + $0x348] sm:$0xff]
    %v3235 = vld [vmem:[#allocation16 + $0x350] sm:$0xff]
    %v3236 = vld [vmem:[#allocation16 + $0x358] sm:$0xff]
    %v3237 = vld [vmem:[#allocation16 + $0x360] sm:$0xff]
    %v3238 = vld [vmem:[#allocation16 + $0x368] sm:$0xff]
    %v3239 = vld [vmem:[#allocation16 + $0x370] sm:$0xff]
    %v3240 = vld [vmem:[#allocation16 + $0x378] sm:$0xff]
    %v3241 = vld [vmem:[#allocation16 + $0x380] sm:$0xff]
    %v3242 = vld [vmem:[#allocation16 + $0x388] sm:$0xff]
    %v3243 = vld [vmem:[#allocation16 + $0x390] sm:$0xff]
    %v3244 = vld [vmem:[#allocation16 + $0x398] sm:$0xff]
    %v3245 = vld [vmem:[#allocation16 + $0x3a0] sm:$0xff]
    %v3246 = vld [vmem:[#allocation16 + $0x3a8] sm:$0xff]
    %v3247 = vld [vmem:[#allocation16 + $0x3b0] sm:$0xff]
    %v3248 = vld [vmem:[#allocation16 + $0x3b8] sm:$0xff]
    %v3249 = vld [vmem:[#allocation16 + $0x3c0] sm:$0xff]
    %v3250 = vld [vmem:[#allocation16 + $0x3c8] sm:$0xff]
    %v3251 = vld [vmem:[#allocation16 + $0x3d0] sm:$0xff]
    %v3252 = vld [vmem:[#allocation16 + $0x3d8] sm:$0xff]
    %v3253 = vld [vmem:[#allocation16 + $0x3e0] sm:$0xff]
    %v3254 = vld [vmem:[#allocation16 + $0x3e8] sm:$0xff]
    %v3255 = vld [vmem:[#allocation16 + $0x3f0] sm:$0xff]
    %v3256 = vld [vmem:[#allocation16 + $0x3f8] sm:$0xff]
    %v3257 = vld [vmem:[#allocation17] sm:$0x3]
    %v3259 = vlaneseq
    %v3260 = vshrl.u32 %v3259, 7
    %v3261 = vsub.s32 0, %v3260
    %v3262 = vrot.slane %v3257, %v3261
    %v3263 = vlaneseq
    %v3264 = vshrl.u32 %v3263, 7
    %v3265 = vsub.s32 1, %v3264
    %v3266 = vrot.slane %v3257, %v3265
    %3269 = vmatprep.subr.mxu0 %v3160
    %3270 = vmatpush1.msra.mxu0 %v3159
    %3271 = vmatprep.subr.mxu0 %v3158
    %3272 = vmatpush1.msra.mxu0 %v3157
    %3273 = vmatprep.subr.mxu0 %v3156
    %3274 = vmatpush1.msra.mxu0 %v3155
    %3275 = vmatprep.subr.mxu0 %v3154
    %3276 = vmatpush1.msra.mxu0 %v3153
    %3277 = vmatprep.subr.mxu0 %v3152
    %3278 = vmatpush1.msra.mxu0 %v3151
    %3279 = vmatprep.subr.mxu0 %v3150
    %3280 = vmatpush1.msra.mxu0 %v3149
    %3281 = vmatprep.subr.mxu0 %v3148
    %3282 = vmatpush1.msra.mxu0 %v3147
    %3283 = vmatprep.subr.mxu0 %v3146
    %3284 = vmatpush1.msra.mxu0 %v3145
    %3285 = vmatprep.subr.mxu0 %v3144
    %3286 = vmatpush1.msra.mxu0 %v3143
    %3287 = vmatprep.subr.mxu0 %v3142
    %3288 = vmatpush1.msra.mxu0 %v3141
    %3289 = vmatprep.subr.mxu0 %v3140
    %3290 = vmatpush1.msra.mxu0 %v3139
    %3291 = vmatprep.subr.mxu0 %v3138
    %3292 = vmatpush1.msra.mxu0 %v3137
    %3293 = vmatprep.subr.mxu0 %v3136
    %3294 = vmatpush1.msra.mxu0 %v3135
    %3295 = vmatprep.subr.mxu0 %v3134
    %3296 = vmatpush1.msra.mxu0 %v3133
    %3297 = vmatprep.subr.mxu0 %v3132
    %3298 = vmatpush1.msra.mxu0 %v3131
    %3299 = vmatprep.subr.mxu0 %v3130
    %3300 = vmatpush1.msra.mxu0 %v3129
    %3301 = vmatprep.subr.mxu0 %v3192
    %3302 = vmatpush2.msra.mxu0 %v3191
    %3303 = vmatprep.subr.mxu0 %v3190
    %3304 = vmatpush2.msra.mxu0 %v3189
    %3305 = vmatprep.subr.mxu0 %v3188
    %3306 = vmatpush2.msra.mxu0 %v3187
    %3307 = vmatprep.subr.mxu0 %v3186
    %3308 = vmatpush2.msra.mxu0 %v3185
    %3309 = vmatprep.subr.mxu0 %v3184
    %3310 = vmatpush2.msra.mxu0 %v3183
    %3311 = vmatprep.subr.mxu0 %v3182
    %3312 = vmatpush2.msra.mxu0 %v3181
    %3313 = vmatprep.subr.mxu0 %v3180
    %3314 = vmatpush2.msra.mxu0 %v3179
    %3315 = vmatprep.subr.mxu0 %v3178
    %3316 = vmatpush2.msra.mxu0 %v3177
    %3317 = vmatprep.subr.mxu0 %v3176
    %3318 = vmatpush2.msra.mxu0 %v3175
    %3319 = vmatprep.subr.mxu0 %v3174
    %3320 = vmatpush2.msra.mxu0 %v3173
    %3321 = vmatprep.subr.mxu0 %v3172
    %3322 = vmatpush2.msra.mxu0 %v3171
    %3323 = vmatprep.subr.mxu0 %v3170
    %3324 = vmatpush2.msra.mxu0 %v3169
    %3325 = vmatprep.subr.mxu0 %v3168
    %3326 = vmatpush2.msra.mxu0 %v3167
    %3327 = vmatprep.subr.mxu0 %v3166
    %3328 = vmatpush2.msra.mxu0 %v3165
    %3329 = vmatprep.subr.mxu0 %v3164
    %3330 = vmatpush2.msra.mxu0 %v3163
    %3331 = vmatprep.subr.mxu0 %v3162
    %3332 = vmatpush2.msra.mxu0 %v3161
    %3333 = vmatprep.mubr.f32.mxu0 %v3126
    %3334 = vmatmul.mubr.f32.gmra.mxu0 %v3125
    %v3335 = vpop.f32.mrf.mxu0
    %v3336 = vadd.f32 %v3262, %v3335
    %v3337 = vpop.f32.mrf.mxu0
    %v3338 = vadd.f32 %v3266, %v3337
    %3339 = vdwg.mxu0
    %3340 = vmatprep.subr.mxu0 %v3224
    %3341 = vmatpush1.msra.mxu0 %v3223
    %3342 = vmatprep.subr.mxu0 %v3222
    %3343 = vmatpush1.msra.mxu0 %v3221
    %3344 = vmatprep.subr.mxu0 %v3220
    %3345 = vmatpush1.msra.mxu0 %v3219
    %3346 = vmatprep.subr.mxu0 %v3218
    %3347 = vmatpush1.msra.mxu0 %v3217
    %3348 = vmatprep.subr.mxu0 %v3216
    %3349 = vmatpush1.msra.mxu0 %v3215
    %3350 = vmatprep.subr.mxu0 %v3214
    %3351 = vmatpush1.msra.mxu0 %v3213
    %3352 = vmatprep.subr.mxu0 %v3212
    %3353 = vmatpush1.msra.mxu0 %v3211
    %3354 = vmatprep.subr.mxu0 %v3210
    %3355 = vmatpush1.msra.mxu0 %v3209
    %3356 = vmatprep.subr.mxu0 %v3208
    %3357 = vmatpush1.msra.mxu0 %v3207
    %3358 = vmatprep.subr.mxu0 %v3206
    %3359 = vmatpush1.msra.mxu0 %v3205
    %3360 = vmatprep.subr.mxu0 %v3204
    %3361 = vmatpush1.msra.mxu0 %v3203
    %3362 = vmatprep.subr.mxu0 %v3202
    %3363 = vmatpush1.msra.mxu0 %v3201
    %3364 = vmatprep.subr.mxu0 %v3200
    %3365 = vmatpush1.msra.mxu0 %v3199
    %3366 = vmatprep.subr.mxu0 %v3198
    %3367 = vmatpush1.msra.mxu0 %v3197
    %3368 = vmatprep.subr.mxu0 %v3196
    %3369 = vmatpush1.msra.mxu0 %v3195
    %3370 = vmatprep.subr.mxu0 %v3194
    %3371 = vmatpush1.msra.mxu0 %v3193
    %3372 = vmatprep.subr.mxu0 %v3256
    %3373 = vmatpush2.msra.mxu0 %v3255
    %3374 = vmatprep.subr.mxu0 %v3254
    %3375 = vmatpush2.msra.mxu0 %v3253
    %3376 = vmatprep.subr.mxu0 %v3252
    %3377 = vmatpush2.msra.mxu0 %v3251
    %3378 = vmatprep.subr.mxu0 %v3250
    %3379 = vmatpush2.msra.mxu0 %v3249
    %3380 = vmatprep.subr.mxu0 %v3248
    %3381 = vmatpush2.msra.mxu0 %v3247
    %3382 = vmatprep.subr.mxu0 %v3246
    %3383 = vmatpush2.msra.mxu0 %v3245
    %3384 = vmatprep.subr.mxu0 %v3244
    %3385 = vmatpush2.msra.mxu0 %v3243
    %3386 = vmatprep.subr.mxu0 %v3242
    %3387 = vmatpush2.msra.mxu0 %v3241
    %3388 = vmatprep.subr.mxu0 %v3240
    %3389 = vmatpush2.msra.mxu0 %v3239
    %3390 = vmatprep.subr.mxu0 %v3238
    %3391 = vmatpush2.msra.mxu0 %v3237
    %3392 = vmatprep.subr.mxu0 %v3236
    %3393 = vmatpush2.msra.mxu0 %v3235
    %3394 = vmatprep.subr.mxu0 %v3234
    %3395 = vmatpush2.msra.mxu0 %v3233
    %3396 = vmatprep.subr.mxu0 %v3232
    %3397 = vmatpush2.msra.mxu0 %v3231
    %3398 = vmatprep.subr.mxu0 %v3230
    %3399 = vmatpush2.msra.mxu0 %v3229
    %3400 = vmatprep.subr.mxu0 %v3228
    %3401 = vmatpush2.msra.mxu0 %v3227
    %3402 = vmatprep.subr.mxu0 %v3226
    %3403 = vmatpush2.msra.mxu0 %v3225
    %3404 = vmatprep.mubr.f32.mxu0 %v3128
    %3405 = vmatmul.mubr.f32.gmra.mxu0 %v3127
    %v3406 = vpop.f32.mrf.mxu0
    %v3407 = vadd.f32 %v3336, %v3406
    %v3408 = vpop.f32.mrf.mxu0
    %v3409 = vadd.f32 %v3338, %v3408
    %3410 = vdwg.mxu0
    %v3411 = vtanh.pop %v3407
    %v3412 = vtanh.pop %v3409
    %v3413 = vld [vmem:[#allocation19] sm:$0x3]
    %v3414 = vld [vmem:[#allocation20] sm:$0x3]
    %v3415 = vrot.slane %v3411, 4
    %v3416 = vadd.f32 %v3411, %v3415
    %v3417 = vrot.slane %v3416, 2
    %v3418 = vadd.f32 %v3416, %v3417
    %v3419 = vrot.slane %v3418, 1
    %v3420 = vadd.f32 %v3418, %v3419
    %v3421 = vrot.slane %v3412, 4
    %v3422 = vadd.f32 %v3412, %v3421
    %v3423 = vrot.slane %v3422, 2
    %v3424 = vadd.f32 %v3422, %v3423
    %v3425 = vrot.slane %v3424, 1
    %v3426 = vadd.f32 %v3424, %v3425
    %v3427 = vmul.f32 %v3420, %v3026
    %v3428 = vmul.f32 %v3426, %v3026
    %v3429 = vsub.f32 %v3411, %v3427
    %v3430 = vsub.f32 %v3412, %v3428
    %v3431 = vmul.f32 %v3429, %v3429
    %v3432 = vmul.f32 %v3430, %v3430
    %v3433 = vrot.slane %v3431, 4
    %v3434 = vadd.f32 %v3431, %v3433
    %v3435 = vrot.slane %v3434, 2
    %v3436 = vadd.f32 %v3434, %v3435
    %v3437 = vrot.slane %v3436, 1
    %v3438 = vadd.f32 %v3436, %v3437
    %v3439 = vrot.slane %v3432, 4
    %v3440 = vadd.f32 %v3432, %v3439
    %v3441 = vrot.slane %v3440, 2
    %v3442 = vadd.f32 %v3440, %v3441
    %v3443 = vrot.slane %v3442, 1
    %v3444 = vadd.f32 %v3442, %v3443
    %v3445 = vmul.f32 %v3438, %v3026
    %v3446 = vmul.f32 %v3444, %v3026
    %v3447 = vadd.f32 %v3445, 1e-05
    %v3448 = vadd.f32 %v3446, 1e-05
    %v3449 = vrsqrt.pop %v3447
    %v3450 = vrsqrt.pop %v3448
    %v3451 = vmul.f32 %v3429, %v3449
    %v3452 = vmul.f32 %v3430, %v3450
    %v3454 = vlaneseq
    %v3455 = vshrl.u32 %v3454, 7
    %v3456 = vsub.s32 0, %v3455
    %v3457 = vrot.slane %v3413, %v3456
    %v3458 = vlaneseq
    %v3459 = vshrl.u32 %v3458, 7
    %v3460 = vsub.s32 1, %v3459
    %v3461 = vrot.slane %v3413, %v3460
    %v3464 = vmul.f32 %v3451, %v3457
    %v3465 = vmul.f32 %v3452, %v3461
    %v3467 = vlaneseq
    %v3468 = vshrl.u32 %v3467, 7
    %v3469 = vsub.s32 0, %v3468
    %v3470 = vrot.slane %v3414, %v3469
    %v3471 = vlaneseq
    %v3472 = vshrl.u32 %v3471, 7
    %v3473 = vsub.s32 1, %v3472
    %v3474 = vrot.slane %v3414, %v3473
    %v3477 = vadd.f32 %v3464, %v3470
    %v3478 = vadd.f32 %v3465, %v3474
    %v3479 = vld [vmem:[%s15] sm:$0xff]
    %v3480 = vld [vmem:[%s15 + $0x8] sm:$0xff]
    %v3481 = vld [vmem:[%s15 + $0x10] sm:$0xff]
    %v3482 = vld [vmem:[%s15 + $0x18] sm:$0xff]
    %v3483 = vld [vmem:[%s15 + $0x20] sm:$0xff]
    %v3484 = vld [vmem:[%s15 + $0x28] sm:$0xff]
    %v3485 = vld [vmem:[%s15 + $0x30] sm:$0xff]
    %v3486 = vld [vmem:[%s15 + $0x38] sm:$0xff]
    %v3487 = vld [vmem:[%s15 + $0x40] sm:$0xff]
    %v3488 = vld [vmem:[%s15 + $0x48] sm:$0xff]
    %v3489 = vld [vmem:[%s15 + $0x50] sm:$0xff]
    %v3490 = vld [vmem:[%s15 + $0x58] sm:$0xff]
    %v3491 = vld [vmem:[%s15 + $0x60] sm:$0xff]
    %v3492 = vld [vmem:[%s15 + $0x68] sm:$0xff]
    %v3493 = vld [vmem:[%s15 + $0x70] sm:$0xff]
    %v3494 = vld [vmem:[%s15 + $0x78] sm:$0xff]
    %v3495 = vld [vmem:[%s15 + $0x80] sm:$0xff]
    %v3496 = vld [vmem:[%s15 + $0x88] sm:$0xff]
    %v3497 = vld [vmem:[%s15 + $0x90] sm:$0xff]
    %v3498 = vld [vmem:[%s15 + $0x98] sm:$0xff]
    %v3499 = vld [vmem:[%s15 + $0xa0] sm:$0xff]
    %v3500 = vld [vmem:[%s15 + $0xa8] sm:$0xff]
    %v3501 = vld [vmem:[%s15 + $0xb0] sm:$0xff]
    %v3502 = vld [vmem:[%s15 + $0xb8] sm:$0xff]
    %v3503 = vld [vmem:[%s15 + $0xc0] sm:$0xff]
    %v3504 = vld [vmem:[%s15 + $0xc8] sm:$0xff]
    %v3505 = vld [vmem:[%s15 + $0xd0] sm:$0xff]
    %v3506 = vld [vmem:[%s15 + $0xd8] sm:$0xff]
    %v3507 = vld [vmem:[%s15 + $0xe0] sm:$0xff]
    %v3508 = vld [vmem:[%s15 + $0xe8] sm:$0xff]
    %v3509 = vld [vmem:[%s15 + $0xf0] sm:$0xff]
    %v3510 = vld [vmem:[%s15 + $0xf8] sm:$0xff]
    %v3511 = vld [vmem:[#allocation2] sm:$0x1]
    %v3513 = vlaneseq
    %v3514 = vshrl.u32 %v3513, 7
    %v3515 = vsub.s32 0, %v3514
    %v3516 = vrot.slane %v3511, %v3515
    %3518 = vmatprep.subr.mxu0 0.0
    %3519 = vmatpush1.msra.mxu0 %v3494
    %3520 = vmatprep.subr.mxu0 0.0
    %3521 = vmatpush1.msra.mxu0 %v3493
    %3522 = vmatprep.subr.mxu0 0.0
    %3523 = vmatpush1.msra.mxu0 %v3492
    %3524 = vmatprep.subr.mxu0 0.0
    %3525 = vmatpush1.msra.mxu0 %v3491
    %3526 = vmatprep.subr.mxu0 0.0
    %3527 = vmatpush1.msra.mxu0 %v3490
    %3528 = vmatprep.subr.mxu0 0.0
    %3529 = vmatpush1.msra.mxu0 %v3489
    %3530 = vmatprep.subr.mxu0 0.0
    %3531 = vmatpush1.msra.mxu0 %v3488
    %3532 = vmatprep.subr.mxu0 0.0
    %3533 = vmatpush1.msra.mxu0 %v3487
    %3534 = vmatprep.subr.mxu0 0.0
    %3535 = vmatpush1.msra.mxu0 %v3486
    %3536 = vmatprep.subr.mxu0 0.0
    %3537 = vmatpush1.msra.mxu0 %v3485
    %3538 = vmatprep.subr.mxu0 0.0
    %3539 = vmatpush1.msra.mxu0 %v3484
    %3540 = vmatprep.subr.mxu0 0.0
    %3541 = vmatpush1.msra.mxu0 %v3483
    %3542 = vmatprep.subr.mxu0 0.0
    %3543 = vmatpush1.msra.mxu0 %v3482
    %3544 = vmatprep.subr.mxu0 0.0
    %3545 = vmatpush1.msra.mxu0 %v3481
    %3546 = vmatprep.subr.mxu0 0.0
    %3547 = vmatpush1.msra.mxu0 %v3480
    %3548 = vmatprep.subr.mxu0 0.0
    %3549 = vmatpush1.msra.mxu0 %v3479
    %3550 = vmatprep.subr.mxu0 0.0
    %3551 = vmatpush2.msra.mxu0 %v3510
    %3552 = vmatprep.subr.mxu0 0.0
    %3553 = vmatpush2.msra.mxu0 %v3509
    %3554 = vmatprep.subr.mxu0 0.0
    %3555 = vmatpush2.msra.mxu0 %v3508
    %3556 = vmatprep.subr.mxu0 0.0
    %3557 = vmatpush2.msra.mxu0 %v3507
    %3558 = vmatprep.subr.mxu0 0.0
    %3559 = vmatpush2.msra.mxu0 %v3506
    %3560 = vmatprep.subr.mxu0 0.0
    %3561 = vmatpush2.msra.mxu0 %v3505
    %3562 = vmatprep.subr.mxu0 0.0
    %3563 = vmatpush2.msra.mxu0 %v3504
    %3564 = vmatprep.subr.mxu0 0.0
    %3565 = vmatpush2.msra.mxu0 %v3503
    %3566 = vmatprep.subr.mxu0 0.0
    %3567 = vmatpush2.msra.mxu0 %v3502
    %3568 = vmatprep.subr.mxu0 0.0
    %3569 = vmatpush2.msra.mxu0 %v3501
    %3570 = vmatprep.subr.mxu0 0.0
    %3571 = vmatpush2.msra.mxu0 %v3500
    %3572 = vmatprep.subr.mxu0 0.0
    %3573 = vmatpush2.msra.mxu0 %v3499
    %3574 = vmatprep.subr.mxu0 0.0
    %3575 = vmatpush2.msra.mxu0 %v3498
    %3576 = vmatprep.subr.mxu0 0.0
    %3577 = vmatpush2.msra.mxu0 %v3497
    %3578 = vmatprep.subr.mxu0 0.0
    %3579 = vmatpush2.msra.mxu0 %v3496
    %3580 = vmatprep.subr.mxu0 0.0
    %3581 = vmatpush2.msra.mxu0 %v3495
    %3582 = vmatprep.mubr.f32.mxu0 %v3478
    %3583 = vmatmul.mubr.f32.gmra.mxu0 %v3477
    %v3584 = vpop.f32.mrf.mxu0
    %v3585 = vadd.f32 %v3516, %v3584
    %v3586 = vpop.f32.mrf.mxu0
    %3587 = vdwg.mxu0
    %v3588 = vxor.u32 %v3585, 2147483648
    %v3589 = vmul.f32 %v3588, 1.442695
    %v3590 = vpow.pop %v3589
    %v3591 = vadd.f32 %v3590, 1.0
    %v3592 = vrcp.pop %v3591
    %v3593 = vmul.f32 1.0, %v3592
    %vm3594 = vcmask 7168
    %3595 = vst.msk [vmem:[%s17] sm:$0xff] %vm3594, %v3593
    // Predicated region
    $region118: #{decoder_forward.1} parent=1 // pred_check
      _
    $region119: #{decoder_forward.1} parent=1 // pred_check_branch
      %3597 = sbr.rel (0) target = $region121
    $region120: #{decoder_forward.1} parent=1 // pred_region
      _
    $region121: #{decoder_forward.1} parent=1 // pred_fallthru
      _
    // Predicated region
    $region122: #{decoder_forward.1} parent=1 // pred_check
      _
    $region123: #{decoder_forward.1} parent=1 // pred_check_branch
      %3599 = sbr.rel (0) target = $region125
    $region124: #{decoder_forward.1} parent=1 // pred_region
      _
    $region125: #{decoder_forward.1} parent=1 // pred_fallthru
      _
    %3600 = vsyncpa [#allocation4], 1
    %3601 = vsyncpa [#allocation6], 1
    %3602 = vsyncpa [#allocation9], 1
    %3603 = vsyncpa [#allocation12], 1
    %3604 = vsyncpa [#allocation15], 1
    %3605 = vsyncpa [#allocation18], 1
    %3606 = vsyncpa [#allocation21], 1

</llo_original>
